<compile_context>
chip_gen: v5e
topology: v5e:2x2
jax: 0.10.0
libtpu: 0.0.40
codegen_flags: <defaults>
</compile_context>

<pallas_src>
import functools

import jax
import jax.numpy as jnp
from jax.experimental import pallas as pl
from jax.experimental.pallas import tpu as pltpu

IN_DIM = 9
H1_DIM = 14
H2_DIM = 28
OUT_DIM = 5


def _dense(inp, w_ref, b_ref, *, relu):
    """One Linear layer on a feature-major slab.

    inp  : (in_dim, S) value, batch on lanes.
    w_ref: (in_dim, out_dim, S) VMEM ref, weight columns pre-broadcast on lanes.
    b_ref: (out_dim, S) VMEM ref, bias pre-broadcast on lanes.
    Returns (out_dim, S).
    """
    in_dim = w_ref.shape[0]
    # Bias folded into the first FMA: saves a zero-fill + a full-tile add.
    acc = w_ref[0] * inp[0:1, :] + b_ref[...]
    for i in range(1, in_dim):  # fully unrolled: 9 / 14 / 28 FMAs
        acc = acc + w_ref[i] * inp[i:i + 1, :]
    if relu:
        acc = jnp.maximum(acc, 0.0)
    return acc


def resmlp_kernel(x_ref, w1_ref, b1_ref, w2_ref, b2_ref, w3_ref, b3_ref,
                  o_ref, *, slab):
    """Feature-major kernel: x_ref (9, tile), o_ref (5, tile), batch on lanes."""
    tile = x_ref.shape[1]
    n_slabs = tile // slab

    # Static (fully unrolled) loop over 128-lane-aligned column slabs: the
    # per-slab working set (x/h1/h2/logits + operands) stays well under the
    # 64-vreg budget while the big outer tile amortizes grid-step overhead.
    for s in range(n_slabs):
        c0 = s * slab
        x = x_ref[:, pl.ds(c0, slab)]                        # (9,  S)
        h1 = _dense(x, w1_ref, b1_ref, relu=True)            # (14, S)
        h2 = _dense(h1, w2_ref, b2_ref, relu=True)           # (28, S)
        logits = _dense(h2, w3_ref, b3_ref, relu=False)      # (5,  S)
        logits = logits.astype(jnp.float32)

        # Softmax over the feature (sublane) axis: max/sum go to the XLU,
        # exp / reciprocal to the EUP -- both have slack in this kernel.
        m = jnp.max(logits, axis=0, keepdims=True)
        e = jnp.exp(logits - m)
        ssum = jnp.sum(e, axis=0, keepdims=True)
        inv = pl.reciprocal(ssum, approx=True)
        o_ref[:, pl.ds(c0, slab)] = (e * inv).astype(o_ref.dtype)


def resmlp_forward(x, params, *, batch_tile=8192, slab=256,
                   compute_dtype=jnp.float32):
    """x: (B, 9) float32. Returns (B, 5) float32 softmax probabilities."""
    assert slab % 128 == 0, "slab must be a multiple of the 128 lanes"
    assert batch_tile % slab == 0, "batch_tile must be a multiple of slab"
    w1, b1, w2, b2, w3, b3 = params
    B = x.shape[0]

    # ---- tile sizing -------------------------------------------------------
    # Round B up to a slab multiple, split into tiles no larger than
    # batch_tile while minimizing padding, and prefer >= 2 grid steps so the
    # "parallel" batch axis can shard across both TensorCores on v7x.
    b_slab = pl.cdiv(B, slab) * slab
    n_slabs_total = b_slab // slab
    n_tiles = pl.cdiv(b_slab, batch_tile)
    if n_tiles == 1 and n_slabs_total % 2 == 0:
        n_tiles = 2
    tile = pl.cdiv(n_slabs_total, n_tiles) * slab
    b_pad = n_tiles * tile

    # ---- operand prep ------------------------------------------------------
    # Feature-major, lane-dense input: batch on lanes, features on sublanes.
    # Tail rows are zero padded (finite through the MLP) and sliced off after.
    x_t = jnp.pad(x, ((0, b_pad - B), (0, 0))).T.astype(compute_dtype)

    # Pre-broadcast weight columns / biases along the lane axis once, so the
    # kernel FMAs load lane-replicated vregs instead of broadcasting per step.
    def prep_w(w):   # (in_dim, out_dim) -> (in_dim, out_dim, slab)
        return jnp.broadcast_to(w.astype(compute_dtype)[:, :, None],
                                (*w.shape, slab))

    def prep_b(b):   # (1, out_dim) -> (out_dim, slab)
        return jnp.broadcast_to(b.astype(compute_dtype).reshape(-1, 1),
                                (b.shape[-1], slab))

    w1b, w2b, w3b = prep_w(w1), prep_w(w2), prep_w(w3)
    b1b, b2b, b3b = prep_b(b1), prep_b(b2), prep_b(b3)

    # Constant index_maps: weights/biases are fetched once and stay resident.
    const3 = lambda shape: pl.BlockSpec(shape, lambda i: (0, 0, 0))
    const2 = lambda shape: pl.BlockSpec(shape, lambda i: (0, 0))

    out_t = pl.pallas_call(
        functools.partial(resmlp_kernel, slab=slab),
        out_shape=jax.ShapeDtypeStruct((OUT_DIM, b_pad), jnp.float32),
        grid_spec=pltpu.PrefetchScalarGridSpec(
            num_scalar_prefetch=0,
            grid=(n_tiles,),
            in_specs=[
                pl.BlockSpec((IN_DIM, tile), lambda i: (0, i)),   # x tile
                const3((IN_DIM, H1_DIM, slab)),
                const2((H1_DIM, slab)),
                const3((H1_DIM, H2_DIM, slab)),
                const2((H2_DIM, slab)),
                const3((H2_DIM, OUT_DIM, slab)),
                const2((OUT_DIM, slab)),
            ],
            out_specs=pl.BlockSpec((OUT_DIM, tile), lambda i: (0, i)),
        ),
        compiler_params=pltpu.CompilerParams(
            dimension_semantics=("parallel",),   # batch grid shards across TCs
        ),
    )(x_t, w1b, b1b, w2b, b2b, w3b, b3b)

    return out_t.T[:B].astype(jnp.float32)


def init_params(key):
    """Deterministic nn.Linear-style init: U(-1/sqrt(fan_in), 1/sqrt(fan_in))."""
    ks = jax.random.split(key, 6)

    def linear(kw, kb, fan_in, fan_out):
        bound = 1.0 / jnp.sqrt(fan_in)
        w = jax.random.uniform(kw, (fan_in, fan_out), jnp.float32, -bound, bound)
        b = jax.random.uniform(kb, (1, fan_out), jnp.float32, -bound, bound)
        return w, b

    w1, b1 = linear(ks[0], ks[1], IN_DIM, H1_DIM)
    w2, b2 = linear(ks[2], ks[3], H1_DIM, H2_DIM)
    w3, b3 = linear(ks[4], ks[5], H2_DIM, OUT_DIM)
    return (w1, b1, w2, b2, w3, b3)


def resmlp_reference(x, params):
    w1, b1, w2, b2, w3, b3 = params
    h1 = jnp.maximum(x @ w1 + b1, 0.0)
    h2 = jnp.maximum(h1 @ w2 + b2, 0.0)
    logits = h2 @ w3 + b3
    return jax.nn.softmax(logits, axis=1)


if __name__ == "__main__":
    key = jax.random.PRNGKey(0)
    kx, kp = jax.random.split(key)

    # B=1000 is small but not a slab multiple: exercises tail padding and,
    # via the >=2-tile preference, a 2-step "parallel" grid (2 slabs per tile).
    B = 1000
    x = jax.random.normal(kx, (B, IN_DIM), jnp.float32)
    params = init_params(kp)

    out = jax.block_until_ready(resmlp_forward(x, params))
    ref = resmlp_reference(x, params)

    assert out.shape == (B, OUT_DIM)
    # Tolerance covers the EUP approximate reciprocal in the softmax norm and
    # the FMA accumulation-order difference vs the reference matmul.
    assert jnp.allclose(out, ref, atol=5e-3, rtol=5e-3), "mismatch vs reference"
    assert jnp.allclose(jnp.sum(out, axis=1), 1.0, atol=5e-3), \
        "softmax rows must sum to 1"

    print("KERNEL_OK")
</pallas_src>

<mosaic_0001>
module attributes {stable_mosaic.version = 11 : i64} {
  func.func @resmlp_kernel(%arg0: i32, %arg1: memref<9x512xf32, #tpu.memory_space<vmem>>, %arg2: memref<9x14x256xf32, #tpu.memory_space<vmem>>, %arg3: memref<14x256xf32, #tpu.memory_space<vmem>>, %arg4: memref<14x28x256xf32, #tpu.memory_space<vmem>>, %arg5: memref<28x256xf32, #tpu.memory_space<vmem>>, %arg6: memref<28x5x256xf32, #tpu.memory_space<vmem>>, %arg7: memref<5x256xf32, #tpu.memory_space<vmem>>, %arg8: memref<5x512xf32, #tpu.memory_space<vmem>>) attributes {dimension_semantics = [#tpu.dimension_semantics<parallel>], iteration_bounds = array<i64: 2>, scalar_prefetch = 0 : i64, scratch_operands = 0 : i64, tpu.core_type = #tpu.core_type<tc>, window_params = [{transform_indices = @transform_0, window_bounds = array<i64: 9, 512>}, {pipeline_mode = #tpu.pipeline_mode<synchronous>, transform_indices = @transform_1, window_bounds = array<i64: 9, 14, 256>}, {pipeline_mode = #tpu.pipeline_mode<synchronous>, transform_indices = @transform_2, window_bounds = array<i64: 14, 256>}, {pipeline_mode = #tpu.pipeline_mode<synchronous>, transform_indices = @transform_3, window_bounds = array<i64: 14, 28, 256>}, {pipeline_mode = #tpu.pipeline_mode<synchronous>, transform_indices = @transform_4, window_bounds = array<i64: 28, 256>}, {pipeline_mode = #tpu.pipeline_mode<synchronous>, transform_indices = @transform_5, window_bounds = array<i64: 28, 5, 256>}, {pipeline_mode = #tpu.pipeline_mode<synchronous>, transform_indices = @transform_6, window_bounds = array<i64: 5, 256>}, {transform_indices = @transform_7, window_bounds = array<i64: 5, 512>}]} {
    %c0 = arith.constant 0 : index
    %c0_0 = arith.constant 0 : index
    %0 = vector.load %arg1[%c0, %c0_0] : memref<9x512xf32, #tpu.memory_space<vmem>>, vector<9x256xf32>
    %c0_1 = arith.constant 0 : index
    %c0_2 = arith.constant 0 : index
    %c0_3 = arith.constant 0 : index
    %1 = vector.load %arg2[%c0_1, %c0_2, %c0_3] : memref<9x14x256xf32, #tpu.memory_space<vmem>>, vector<1x14x256xf32>
    %2 = vector.shape_cast %1 : vector<1x14x256xf32> to vector<14x256xf32>
    %3 = vector.extract_strided_slice %0 {offsets = [0, 0], sizes = [1, 256], strides = [1, 1]} : vector<9x256xf32> to vector<1x256xf32>
    %4 = vector.broadcast %3 : vector<1x256xf32> to vector<14x256xf32>
    %5 = arith.mulf %2, %4 : vector<14x256xf32>
    %c0_4 = arith.constant 0 : index
    %c0_5 = arith.constant 0 : index
    %6 = vector.load %arg3[%c0_4, %c0_5] : memref<14x256xf32, #tpu.memory_space<vmem>>, vector<14x256xf32>
    %7 = arith.addf %5, %6 : vector<14x256xf32>
    %c1 = arith.constant 1 : index
    %c0_6 = arith.constant 0 : index
    %c0_7 = arith.constant 0 : index
    %8 = vector.load %arg2[%c1, %c0_6, %c0_7] : memref<9x14x256xf32, #tpu.memory_space<vmem>>, vector<1x14x256xf32>
    %9 = vector.shape_cast %8 : vector<1x14x256xf32> to vector<14x256xf32>
    %10 = vector.extract_strided_slice %0 {offsets = [1, 0], sizes = [1, 256], strides = [1, 1]} : vector<9x256xf32> to vector<1x256xf32>
    %11 = vector.broadcast %10 : vector<1x256xf32> to vector<14x256xf32>
    %12 = arith.mulf %9, %11 : vector<14x256xf32>
    %13 = arith.addf %7, %12 : vector<14x256xf32>
    %c2 = arith.constant 2 : index
    %c0_8 = arith.constant 0 : index
    %c0_9 = arith.constant 0 : index
    %14 = vector.load %arg2[%c2, %c0_8, %c0_9] : memref<9x14x256xf32, #tpu.memory_space<vmem>>, vector<1x14x256xf32>
    %15 = vector.shape_cast %14 : vector<1x14x256xf32> to vector<14x256xf32>
    %16 = vector.extract_strided_slice %0 {offsets = [2, 0], sizes = [1, 256], strides = [1, 1]} : vector<9x256xf32> to vector<1x256xf32>
    %17 = vector.broadcast %16 : vector<1x256xf32> to vector<14x256xf32>
    %18 = arith.mulf %15, %17 : vector<14x256xf32>
    %19 = arith.addf %13, %18 : vector<14x256xf32>
    %c3 = arith.constant 3 : index
    %c0_10 = arith.constant 0 : index
    %c0_11 = arith.constant 0 : index
    %20 = vector.load %arg2[%c3, %c0_10, %c0_11] : memref<9x14x256xf32, #tpu.memory_space<vmem>>, vector<1x14x256xf32>
    %21 = vector.shape_cast %20 : vector<1x14x256xf32> to vector<14x256xf32>
    %22 = vector.extract_strided_slice %0 {offsets = [3, 0], sizes = [1, 256], strides = [1, 1]} : vector<9x256xf32> to vector<1x256xf32>
    %23 = vector.broadcast %22 : vector<1x256xf32> to vector<14x256xf32>
    %24 = arith.mulf %21, %23 : vector<14x256xf32>
    %25 = arith.addf %19, %24 : vector<14x256xf32>
    %c4 = arith.constant 4 : index
    %c0_12 = arith.constant 0 : index
    %c0_13 = arith.constant 0 : index
    %26 = vector.load %arg2[%c4, %c0_12, %c0_13] : memref<9x14x256xf32, #tpu.memory_space<vmem>>, vector<1x14x256xf32>
    %27 = vector.shape_cast %26 : vector<1x14x256xf32> to vector<14x256xf32>
    %28 = vector.extract_strided_slice %0 {offsets = [4, 0], sizes = [1, 256], strides = [1, 1]} : vector<9x256xf32> to vector<1x256xf32>
    %29 = vector.broadcast %28 : vector<1x256xf32> to vector<14x256xf32>
    %30 = arith.mulf %27, %29 : vector<14x256xf32>
    %31 = arith.addf %25, %30 : vector<14x256xf32>
    %c5 = arith.constant 5 : index
    %c0_14 = arith.constant 0 : index
    %c0_15 = arith.constant 0 : index
    %32 = vector.load %arg2[%c5, %c0_14, %c0_15] : memref<9x14x256xf32, #tpu.memory_space<vmem>>, vector<1x14x256xf32>
    %33 = vector.shape_cast %32 : vector<1x14x256xf32> to vector<14x256xf32>
    %34 = vector.extract_strided_slice %0 {offsets = [5, 0], sizes = [1, 256], strides = [1, 1]} : vector<9x256xf32> to vector<1x256xf32>
    %35 = vector.broadcast %34 : vector<1x256xf32> to vector<14x256xf32>
    %36 = arith.mulf %33, %35 : vector<14x256xf32>
    %37 = arith.addf %31, %36 : vector<14x256xf32>
    %c6 = arith.constant 6 : index
    %c0_16 = arith.constant 0 : index
    %c0_17 = arith.constant 0 : index
    %38 = vector.load %arg2[%c6, %c0_16, %c0_17] : memref<9x14x256xf32, #tpu.memory_space<vmem>>, vector<1x14x256xf32>
    %39 = vector.shape_cast %38 : vector<1x14x256xf32> to vector<14x256xf32>
    %40 = vector.extract_strided_slice %0 {offsets = [6, 0], sizes = [1, 256], strides = [1, 1]} : vector<9x256xf32> to vector<1x256xf32>
    %41 = vector.broadcast %40 : vector<1x256xf32> to vector<14x256xf32>
    %42 = arith.mulf %39, %41 : vector<14x256xf32>
    %43 = arith.addf %37, %42 : vector<14x256xf32>
    %c7 = arith.constant 7 : index
    %c0_18 = arith.constant 0 : index
    %c0_19 = arith.constant 0 : index
    %44 = vector.load %arg2[%c7, %c0_18, %c0_19] : memref<9x14x256xf32, #tpu.memory_space<vmem>>, vector<1x14x256xf32>
    %45 = vector.shape_cast %44 : vector<1x14x256xf32> to vector<14x256xf32>
    %46 = vector.extract_strided_slice %0 {offsets = [7, 0], sizes = [1, 256], strides = [1, 1]} : vector<9x256xf32> to vector<1x256xf32>
    %47 = vector.broadcast %46 : vector<1x256xf32> to vector<14x256xf32>
    %48 = arith.mulf %45, %47 : vector<14x256xf32>
    %49 = arith.addf %43, %48 : vector<14x256xf32>
    %c8 = arith.constant 8 : index
    %c0_20 = arith.constant 0 : index
    %c0_21 = arith.constant 0 : index
    %50 = vector.load %arg2[%c8, %c0_20, %c0_21] : memref<9x14x256xf32, #tpu.memory_space<vmem>>, vector<1x14x256xf32>
    %51 = vector.shape_cast %50 : vector<1x14x256xf32> to vector<14x256xf32>
    %52 = vector.extract_strided_slice %0 {offsets = [8, 0], sizes = [1, 256], strides = [1, 1]} : vector<9x256xf32> to vector<1x256xf32>
    %53 = vector.broadcast %52 : vector<1x256xf32> to vector<14x256xf32>
    %54 = arith.mulf %51, %53 : vector<14x256xf32>
    %55 = arith.addf %49, %54 : vector<14x256xf32>
    %cst = arith.constant 0.000000e+00 : f32
    %56 = vector.broadcast %cst : f32 to vector<14x256xf32>
    %57 = arith.maximumf %55, %56 : vector<14x256xf32>
    %c0_22 = arith.constant 0 : index
    %c0_23 = arith.constant 0 : index
    %c0_24 = arith.constant 0 : index
    %58 = vector.load %arg4[%c0_22, %c0_23, %c0_24] : memref<14x28x256xf32, #tpu.memory_space<vmem>>, vector<1x28x256xf32>
    %59 = vector.shape_cast %58 : vector<1x28x256xf32> to vector<28x256xf32>
    %60 = vector.extract_strided_slice %57 {offsets = [0, 0], sizes = [1, 256], strides = [1, 1]} : vector<14x256xf32> to vector<1x256xf32>
    %61 = vector.broadcast %60 : vector<1x256xf32> to vector<28x256xf32>
    %62 = arith.mulf %59, %61 : vector<28x256xf32>
    %c0_25 = arith.constant 0 : index
    %c0_26 = arith.constant 0 : index
    %63 = vector.load %arg5[%c0_25, %c0_26] : memref<28x256xf32, #tpu.memory_space<vmem>>, vector<28x256xf32>
    %64 = arith.addf %62, %63 : vector<28x256xf32>
    %c1_27 = arith.constant 1 : index
    %c0_28 = arith.constant 0 : index
    %c0_29 = arith.constant 0 : index
    %65 = vector.load %arg4[%c1_27, %c0_28, %c0_29] : memref<14x28x256xf32, #tpu.memory_space<vmem>>, vector<1x28x256xf32>
    %66 = vector.shape_cast %65 : vector<1x28x256xf32> to vector<28x256xf32>
    %67 = vector.extract_strided_slice %57 {offsets = [1, 0], sizes = [1, 256], strides = [1, 1]} : vector<14x256xf32> to vector<1x256xf32>
    %68 = vector.broadcast %67 : vector<1x256xf32> to vector<28x256xf32>
    %69 = arith.mulf %66, %68 : vector<28x256xf32>
    %70 = arith.addf %64, %69 : vector<28x256xf32>
    %c2_30 = arith.constant 2 : index
    %c0_31 = arith.constant 0 : index
    %c0_32 = arith.constant 0 : index
    %71 = vector.load %arg4[%c2_30, %c0_31, %c0_32] : memref<14x28x256xf32, #tpu.memory_space<vmem>>, vector<1x28x256xf32>
    %72 = vector.shape_cast %71 : vector<1x28x256xf32> to vector<28x256xf32>
    %73 = vector.extract_strided_slice %57 {offsets = [2, 0], sizes = [1, 256], strides = [1, 1]} : vector<14x256xf32> to vector<1x256xf32>
    %74 = vector.broadcast %73 : vector<1x256xf32> to vector<28x256xf32>
    %75 = arith.mulf %72, %74 : vector<28x256xf32>
    %76 = arith.addf %70, %75 : vector<28x256xf32>
    %c3_33 = arith.constant 3 : index
    %c0_34 = arith.constant 0 : index
    %c0_35 = arith.constant 0 : index
    %77 = vector.load %arg4[%c3_33, %c0_34, %c0_35] : memref<14x28x256xf32, #tpu.memory_space<vmem>>, vector<1x28x256xf32>
    %78 = vector.shape_cast %77 : vector<1x28x256xf32> to vector<28x256xf32>
    %79 = vector.extract_strided_slice %57 {offsets = [3, 0], sizes = [1, 256], strides = [1, 1]} : vector<14x256xf32> to vector<1x256xf32>
    %80 = vector.broadcast %79 : vector<1x256xf32> to vector<28x256xf32>
    %81 = arith.mulf %78, %80 : vector<28x256xf32>
    %82 = arith.addf %76, %81 : vector<28x256xf32>
    %c4_36 = arith.constant 4 : index
    %c0_37 = arith.constant 0 : index
    %c0_38 = arith.constant 0 : index
    %83 = vector.load %arg4[%c4_36, %c0_37, %c0_38] : memref<14x28x256xf32, #tpu.memory_space<vmem>>, vector<1x28x256xf32>
    %84 = vector.shape_cast %83 : vector<1x28x256xf32> to vector<28x256xf32>
    %85 = vector.extract_strided_slice %57 {offsets = [4, 0], sizes = [1, 256], strides = [1, 1]} : vector<14x256xf32> to vector<1x256xf32>
    %86 = vector.broadcast %85 : vector<1x256xf32> to vector<28x256xf32>
    %87 = arith.mulf %84, %86 : vector<28x256xf32>
    %88 = arith.addf %82, %87 : vector<28x256xf32>
    %c5_39 = arith.constant 5 : index
    %c0_40 = arith.constant 0 : index
    %c0_41 = arith.constant 0 : index
    %89 = vector.load %arg4[%c5_39, %c0_40, %c0_41] : memref<14x28x256xf32, #tpu.memory_space<vmem>>, vector<1x28x256xf32>
    %90 = vector.shape_cast %89 : vector<1x28x256xf32> to vector<28x256xf32>
    %91 = vector.extract_strided_slice %57 {offsets = [5, 0], sizes = [1, 256], strides = [1, 1]} : vector<14x256xf32> to vector<1x256xf32>
    %92 = vector.broadcast %91 : vector<1x256xf32> to vector<28x256xf32>
    %93 = arith.mulf %90, %92 : vector<28x256xf32>
    %94 = arith.addf %88, %93 : vector<28x256xf32>
    %c6_42 = arith.constant 6 : index
    %c0_43 = arith.constant 0 : index
    %c0_44 = arith.constant 0 : index
    %95 = vector.load %arg4[%c6_42, %c0_43, %c0_44] : memref<14x28x256xf32, #tpu.memory_space<vmem>>, vector<1x28x256xf32>
    %96 = vector.shape_cast %95 : vector<1x28x256xf32> to vector<28x256xf32>
    %97 = vector.extract_strided_slice %57 {offsets = [6, 0], sizes = [1, 256], strides = [1, 1]} : vector<14x256xf32> to vector<1x256xf32>
    %98 = vector.broadcast %97 : vector<1x256xf32> to vector<28x256xf32>
    %99 = arith.mulf %96, %98 : vector<28x256xf32>
    %100 = arith.addf %94, %99 : vector<28x256xf32>
    %c7_45 = arith.constant 7 : index
    %c0_46 = arith.constant 0 : index
    %c0_47 = arith.constant 0 : index
    %101 = vector.load %arg4[%c7_45, %c0_46, %c0_47] : memref<14x28x256xf32, #tpu.memory_space<vmem>>, vector<1x28x256xf32>
    %102 = vector.shape_cast %101 : vector<1x28x256xf32> to vector<28x256xf32>
    %103 = vector.extract_strided_slice %57 {offsets = [7, 0], sizes = [1, 256], strides = [1, 1]} : vector<14x256xf32> to vector<1x256xf32>
    %104 = vector.broadcast %103 : vector<1x256xf32> to vector<28x256xf32>
    %105 = arith.mulf %102, %104 : vector<28x256xf32>
    %106 = arith.addf %100, %105 : vector<28x256xf32>
    %c8_48 = arith.constant 8 : index
    %c0_49 = arith.constant 0 : index
    %c0_50 = arith.constant 0 : index
    %107 = vector.load %arg4[%c8_48, %c0_49, %c0_50] : memref<14x28x256xf32, #tpu.memory_space<vmem>>, vector<1x28x256xf32>
    %108 = vector.shape_cast %107 : vector<1x28x256xf32> to vector<28x256xf32>
    %109 = vector.extract_strided_slice %57 {offsets = [8, 0], sizes = [1, 256], strides = [1, 1]} : vector<14x256xf32> to vector<1x256xf32>
    %110 = vector.broadcast %109 : vector<1x256xf32> to vector<28x256xf32>
    %111 = arith.mulf %108, %110 : vector<28x256xf32>
    %112 = arith.addf %106, %111 : vector<28x256xf32>
    %c9 = arith.constant 9 : index
    %c0_51 = arith.constant 0 : index
    %c0_52 = arith.constant 0 : index
    %113 = vector.load %arg4[%c9, %c0_51, %c0_52] : memref<14x28x256xf32, #tpu.memory_space<vmem>>, vector<1x28x256xf32>
    %114 = vector.shape_cast %113 : vector<1x28x256xf32> to vector<28x256xf32>
    %115 = vector.extract_strided_slice %57 {offsets = [9, 0], sizes = [1, 256], strides = [1, 1]} : vector<14x256xf32> to vector<1x256xf32>
    %116 = vector.broadcast %115 : vector<1x256xf32> to vector<28x256xf32>
    %117 = arith.mulf %114, %116 : vector<28x256xf32>
    %118 = arith.addf %112, %117 : vector<28x256xf32>
    %c10 = arith.constant 10 : index
    %c0_53 = arith.constant 0 : index
    %c0_54 = arith.constant 0 : index
    %119 = vector.load %arg4[%c10, %c0_53, %c0_54] : memref<14x28x256xf32, #tpu.memory_space<vmem>>, vector<1x28x256xf32>
    %120 = vector.shape_cast %119 : vector<1x28x256xf32> to vector<28x256xf32>
    %121 = vector.extract_strided_slice %57 {offsets = [10, 0], sizes = [1, 256], strides = [1, 1]} : vector<14x256xf32> to vector<1x256xf32>
    %122 = vector.broadcast %121 : vector<1x256xf32> to vector<28x256xf32>
    %123 = arith.mulf %120, %122 : vector<28x256xf32>
    %124 = arith.addf %118, %123 : vector<28x256xf32>
    %c11 = arith.constant 11 : index
    %c0_55 = arith.constant 0 : index
    %c0_56 = arith.constant 0 : index
    %125 = vector.load %arg4[%c11, %c0_55, %c0_56] : memref<14x28x256xf32, #tpu.memory_space<vmem>>, vector<1x28x256xf32>
    %126 = vector.shape_cast %125 : vector<1x28x256xf32> to vector<28x256xf32>
    %127 = vector.extract_strided_slice %57 {offsets = [11, 0], sizes = [1, 256], strides = [1, 1]} : vector<14x256xf32> to vector<1x256xf32>
    %128 = vector.broadcast %127 : vector<1x256xf32> to vector<28x256xf32>
    %129 = arith.mulf %126, %128 : vector<28x256xf32>
    %130 = arith.addf %124, %129 : vector<28x256xf32>
    %c12 = arith.constant 12 : index
    %c0_57 = arith.constant 0 : index
    %c0_58 = arith.constant 0 : index
    %131 = vector.load %arg4[%c12, %c0_57, %c0_58] : memref<14x28x256xf32, #tpu.memory_space<vmem>>, vector<1x28x256xf32>
    %132 = vector.shape_cast %131 : vector<1x28x256xf32> to vector<28x256xf32>
    %133 = vector.extract_strided_slice %57 {offsets = [12, 0], sizes = [1, 256], strides = [1, 1]} : vector<14x256xf32> to vector<1x256xf32>
    %134 = vector.broadcast %133 : vector<1x256xf32> to vector<28x256xf32>
    %135 = arith.mulf %132, %134 : vector<28x256xf32>
    %136 = arith.addf %130, %135 : vector<28x256xf32>
    %c13 = arith.constant 13 : index
    %c0_59 = arith.constant 0 : index
    %c0_60 = arith.constant 0 : index
    %137 = vector.load %arg4[%c13, %c0_59, %c0_60] : memref<14x28x256xf32, #tpu.memory_space<vmem>>, vector<1x28x256xf32>
    %138 = vector.shape_cast %137 : vector<1x28x256xf32> to vector<28x256xf32>
    %139 = vector.extract_strided_slice %57 {offsets = [13, 0], sizes = [1, 256], strides = [1, 1]} : vector<14x256xf32> to vector<1x256xf32>
    %140 = vector.broadcast %139 : vector<1x256xf32> to vector<28x256xf32>
    %141 = arith.mulf %138, %140 : vector<28x256xf32>
    %142 = arith.addf %136, %141 : vector<28x256xf32>
    %cst_61 = arith.constant 0.000000e+00 : f32
    %143 = vector.broadcast %cst_61 : f32 to vector<28x256xf32>
    %144 = arith.maximumf %142, %143 : vector<28x256xf32>
    %c0_62 = arith.constant 0 : index
    %c0_63 = arith.constant 0 : index
    %c0_64 = arith.constant 0 : index
    %145 = vector.load %arg6[%c0_62, %c0_63, %c0_64] : memref<28x5x256xf32, #tpu.memory_space<vmem>>, vector<1x5x256xf32>
    %146 = vector.shape_cast %145 : vector<1x5x256xf32> to vector<5x256xf32>
    %147 = vector.extract_strided_slice %144 {offsets = [0, 0], sizes = [1, 256], strides = [1, 1]} : vector<28x256xf32> to vector<1x256xf32>
    %148 = vector.broadcast %147 : vector<1x256xf32> to vector<5x256xf32>
    %149 = arith.mulf %146, %148 : vector<5x256xf32>
    %c0_65 = arith.constant 0 : index
    %c0_66 = arith.constant 0 : index
    %150 = vector.load %arg7[%c0_65, %c0_66] : memref<5x256xf32, #tpu.memory_space<vmem>>, vector<5x256xf32>
    %151 = arith.addf %149, %150 : vector<5x256xf32>
    %c1_67 = arith.constant 1 : index
    %c0_68 = arith.constant 0 : index
    %c0_69 = arith.constant 0 : index
    %152 = vector.load %arg6[%c1_67, %c0_68, %c0_69] : memref<28x5x256xf32, #tpu.memory_space<vmem>>, vector<1x5x256xf32>
    %153 = vector.shape_cast %152 : vector<1x5x256xf32> to vector<5x256xf32>
    %154 = vector.extract_strided_slice %144 {offsets = [1, 0], sizes = [1, 256], strides = [1, 1]} : vector<28x256xf32> to vector<1x256xf32>
    %155 = vector.broadcast %154 : vector<1x256xf32> to vector<5x256xf32>
    %156 = arith.mulf %153, %155 : vector<5x256xf32>
    %157 = arith.addf %151, %156 : vector<5x256xf32>
    %c2_70 = arith.constant 2 : index
    %c0_71 = arith.constant 0 : index
    %c0_72 = arith.constant 0 : index
    %158 = vector.load %arg6[%c2_70, %c0_71, %c0_72] : memref<28x5x256xf32, #tpu.memory_space<vmem>>, vector<1x5x256xf32>
    %159 = vector.shape_cast %158 : vector<1x5x256xf32> to vector<5x256xf32>
    %160 = vector.extract_strided_slice %144 {offsets = [2, 0], sizes = [1, 256], strides = [1, 1]} : vector<28x256xf32> to vector<1x256xf32>
    %161 = vector.broadcast %160 : vector<1x256xf32> to vector<5x256xf32>
    %162 = arith.mulf %159, %161 : vector<5x256xf32>
    %163 = arith.addf %157, %162 : vector<5x256xf32>
    %c3_73 = arith.constant 3 : index
    %c0_74 = arith.constant 0 : index
    %c0_75 = arith.constant 0 : index
    %164 = vector.load %arg6[%c3_73, %c0_74, %c0_75] : memref<28x5x256xf32, #tpu.memory_space<vmem>>, vector<1x5x256xf32>
    %165 = vector.shape_cast %164 : vector<1x5x256xf32> to vector<5x256xf32>
    %166 = vector.extract_strided_slice %144 {offsets = [3, 0], sizes = [1, 256], strides = [1, 1]} : vector<28x256xf32> to vector<1x256xf32>
    %167 = vector.broadcast %166 : vector<1x256xf32> to vector<5x256xf32>
    %168 = arith.mulf %165, %167 : vector<5x256xf32>
    %169 = arith.addf %163, %168 : vector<5x256xf32>
    %c4_76 = arith.constant 4 : index
    %c0_77 = arith.constant 0 : index
    %c0_78 = arith.constant 0 : index
    %170 = vector.load %arg6[%c4_76, %c0_77, %c0_78] : memref<28x5x256xf32, #tpu.memory_space<vmem>>, vector<1x5x256xf32>
    %171 = vector.shape_cast %170 : vector<1x5x256xf32> to vector<5x256xf32>
    %172 = vector.extract_strided_slice %144 {offsets = [4, 0], sizes = [1, 256], strides = [1, 1]} : vector<28x256xf32> to vector<1x256xf32>
    %173 = vector.broadcast %172 : vector<1x256xf32> to vector<5x256xf32>
    %174 = arith.mulf %171, %173 : vector<5x256xf32>
    %175 = arith.addf %169, %174 : vector<5x256xf32>
    %c5_79 = arith.constant 5 : index
    %c0_80 = arith.constant 0 : index
    %c0_81 = arith.constant 0 : index
    %176 = vector.load %arg6[%c5_79, %c0_80, %c0_81] : memref<28x5x256xf32, #tpu.memory_space<vmem>>, vector<1x5x256xf32>
    %177 = vector.shape_cast %176 : vector<1x5x256xf32> to vector<5x256xf32>
    %178 = vector.extract_strided_slice %144 {offsets = [5, 0], sizes = [1, 256], strides = [1, 1]} : vector<28x256xf32> to vector<1x256xf32>
    %179 = vector.broadcast %178 : vector<1x256xf32> to vector<5x256xf32>
    %180 = arith.mulf %177, %179 : vector<5x256xf32>
    %181 = arith.addf %175, %180 : vector<5x256xf32>
    %c6_82 = arith.constant 6 : index
    %c0_83 = arith.constant 0 : index
    %c0_84 = arith.constant 0 : index
    %182 = vector.load %arg6[%c6_82, %c0_83, %c0_84] : memref<28x5x256xf32, #tpu.memory_space<vmem>>, vector<1x5x256xf32>
    %183 = vector.shape_cast %182 : vector<1x5x256xf32> to vector<5x256xf32>
    %184 = vector.extract_strided_slice %144 {offsets = [6, 0], sizes = [1, 256], strides = [1, 1]} : vector<28x256xf32> to vector<1x256xf32>
    %185 = vector.broadcast %184 : vector<1x256xf32> to vector<5x256xf32>
    %186 = arith.mulf %183, %185 : vector<5x256xf32>
    %187 = arith.addf %181, %186 : vector<5x256xf32>
    %c7_85 = arith.constant 7 : index
    %c0_86 = arith.constant 0 : index
    %c0_87 = arith.constant 0 : index
    %188 = vector.load %arg6[%c7_85, %c0_86, %c0_87] : memref<28x5x256xf32, #tpu.memory_space<vmem>>, vector<1x5x256xf32>
    %189 = vector.shape_cast %188 : vector<1x5x256xf32> to vector<5x256xf32>
    %190 = vector.extract_strided_slice %144 {offsets = [7, 0], sizes = [1, 256], strides = [1, 1]} : vector<28x256xf32> to vector<1x256xf32>
    %191 = vector.broadcast %190 : vector<1x256xf32> to vector<5x256xf32>
    %192 = arith.mulf %189, %191 : vector<5x256xf32>
    %193 = arith.addf %187, %192 : vector<5x256xf32>
    %c8_88 = arith.constant 8 : index
    %c0_89 = arith.constant 0 : index
    %c0_90 = arith.constant 0 : index
    %194 = vector.load %arg6[%c8_88, %c0_89, %c0_90] : memref<28x5x256xf32, #tpu.memory_space<vmem>>, vector<1x5x256xf32>
    %195 = vector.shape_cast %194 : vector<1x5x256xf32> to vector<5x256xf32>
    %196 = vector.extract_strided_slice %144 {offsets = [8, 0], sizes = [1, 256], strides = [1, 1]} : vector<28x256xf32> to vector<1x256xf32>
    %197 = vector.broadcast %196 : vector<1x256xf32> to vector<5x256xf32>
    %198 = arith.mulf %195, %197 : vector<5x256xf32>
    %199 = arith.addf %193, %198 : vector<5x256xf32>
    %c9_91 = arith.constant 9 : index
    %c0_92 = arith.constant 0 : index
    %c0_93 = arith.constant 0 : index
    %200 = vector.load %arg6[%c9_91, %c0_92, %c0_93] : memref<28x5x256xf32, #tpu.memory_space<vmem>>, vector<1x5x256xf32>
    %201 = vector.shape_cast %200 : vector<1x5x256xf32> to vector<5x256xf32>
    %202 = vector.extract_strided_slice %144 {offsets = [9, 0], sizes = [1, 256], strides = [1, 1]} : vector<28x256xf32> to vector<1x256xf32>
    %203 = vector.broadcast %202 : vector<1x256xf32> to vector<5x256xf32>
    %204 = arith.mulf %201, %203 : vector<5x256xf32>
    %205 = arith.addf %199, %204 : vector<5x256xf32>
    %c10_94 = arith.constant 10 : index
    %c0_95 = arith.constant 0 : index
    %c0_96 = arith.constant 0 : index
    %206 = vector.load %arg6[%c10_94, %c0_95, %c0_96] : memref<28x5x256xf32, #tpu.memory_space<vmem>>, vector<1x5x256xf32>
    %207 = vector.shape_cast %206 : vector<1x5x256xf32> to vector<5x256xf32>
    %208 = vector.extract_strided_slice %144 {offsets = [10, 0], sizes = [1, 256], strides = [1, 1]} : vector<28x256xf32> to vector<1x256xf32>
    %209 = vector.broadcast %208 : vector<1x256xf32> to vector<5x256xf32>
    %210 = arith.mulf %207, %209 : vector<5x256xf32>
    %211 = arith.addf %205, %210 : vector<5x256xf32>
    %c11_97 = arith.constant 11 : index
    %c0_98 = arith.constant 0 : index
    %c0_99 = arith.constant 0 : index
    %212 = vector.load %arg6[%c11_97, %c0_98, %c0_99] : memref<28x5x256xf32, #tpu.memory_space<vmem>>, vector<1x5x256xf32>
    %213 = vector.shape_cast %212 : vector<1x5x256xf32> to vector<5x256xf32>
    %214 = vector.extract_strided_slice %144 {offsets = [11, 0], sizes = [1, 256], strides = [1, 1]} : vector<28x256xf32> to vector<1x256xf32>
    %215 = vector.broadcast %214 : vector<1x256xf32> to vector<5x256xf32>
    %216 = arith.mulf %213, %215 : vector<5x256xf32>
    %217 = arith.addf %211, %216 : vector<5x256xf32>
    %c12_100 = arith.constant 12 : index
    %c0_101 = arith.constant 0 : index
    %c0_102 = arith.constant 0 : index
    %218 = vector.load %arg6[%c12_100, %c0_101, %c0_102] : memref<28x5x256xf32, #tpu.memory_space<vmem>>, vector<1x5x256xf32>
    %219 = vector.shape_cast %218 : vector<1x5x256xf32> to vector<5x256xf32>
    %220 = vector.extract_strided_slice %144 {offsets = [12, 0], sizes = [1, 256], strides = [1, 1]} : vector<28x256xf32> to vector<1x256xf32>
    %221 = vector.broadcast %220 : vector<1x256xf32> to vector<5x256xf32>
    %222 = arith.mulf %219, %221 : vector<5x256xf32>
    %223 = arith.addf %217, %222 : vector<5x256xf32>
    %c13_103 = arith.constant 13 : index
    %c0_104 = arith.constant 0 : index
    %c0_105 = arith.constant 0 : index
    %224 = vector.load %arg6[%c13_103, %c0_104, %c0_105] : memref<28x5x256xf32, #tpu.memory_space<vmem>>, vector<1x5x256xf32>
    %225 = vector.shape_cast %224 : vector<1x5x256xf32> to vector<5x256xf32>
    %226 = vector.extract_strided_slice %144 {offsets = [13, 0], sizes = [1, 256], strides = [1, 1]} : vector<28x256xf32> to vector<1x256xf32>
    %227 = vector.broadcast %226 : vector<1x256xf32> to vector<5x256xf32>
    %228 = arith.mulf %225, %227 : vector<5x256xf32>
    %229 = arith.addf %223, %228 : vector<5x256xf32>
    %c14 = arith.constant 14 : index
    %c0_106 = arith.constant 0 : index
    %c0_107 = arith.constant 0 : index
    %230 = vector.load %arg6[%c14, %c0_106, %c0_107] : memref<28x5x256xf32, #tpu.memory_space<vmem>>, vector<1x5x256xf32>
    %231 = vector.shape_cast %230 : vector<1x5x256xf32> to vector<5x256xf32>
    %232 = vector.extract_strided_slice %144 {offsets = [14, 0], sizes = [1, 256], strides = [1, 1]} : vector<28x256xf32> to vector<1x256xf32>
    %233 = vector.broadcast %232 : vector<1x256xf32> to vector<5x256xf32>
    %234 = arith.mulf %231, %233 : vector<5x256xf32>
    %235 = arith.addf %229, %234 : vector<5x256xf32>
    %c15 = arith.constant 15 : index
    %c0_108 = arith.constant 0 : index
    %c0_109 = arith.constant 0 : index
    %236 = vector.load %arg6[%c15, %c0_108, %c0_109] : memref<28x5x256xf32, #tpu.memory_space<vmem>>, vector<1x5x256xf32>
    %237 = vector.shape_cast %236 : vector<1x5x256xf32> to vector<5x256xf32>
    %238 = vector.extract_strided_slice %144 {offsets = [15, 0], sizes = [1, 256], strides = [1, 1]} : vector<28x256xf32> to vector<1x256xf32>
    %239 = vector.broadcast %238 : vector<1x256xf32> to vector<5x256xf32>
    %240 = arith.mulf %237, %239 : vector<5x256xf32>
    %241 = arith.addf %235, %240 : vector<5x256xf32>
    %c16 = arith.constant 16 : index
    %c0_110 = arith.constant 0 : index
    %c0_111 = arith.constant 0 : index
    %242 = vector.load %arg6[%c16, %c0_110, %c0_111] : memref<28x5x256xf32, #tpu.memory_space<vmem>>, vector<1x5x256xf32>
    %243 = vector.shape_cast %242 : vector<1x5x256xf32> to vector<5x256xf32>
    %244 = vector.extract_strided_slice %144 {offsets = [16, 0], sizes = [1, 256], strides = [1, 1]} : vector<28x256xf32> to vector<1x256xf32>
    %245 = vector.broadcast %244 : vector<1x256xf32> to vector<5x256xf32>
    %246 = arith.mulf %243, %245 : vector<5x256xf32>
    %247 = arith.addf %241, %246 : vector<5x256xf32>
    %c17 = arith.constant 17 : index
    %c0_112 = arith.constant 0 : index
    %c0_113 = arith.constant 0 : index
    %248 = vector.load %arg6[%c17, %c0_112, %c0_113] : memref<28x5x256xf32, #tpu.memory_space<vmem>>, vector<1x5x256xf32>
    %249 = vector.shape_cast %248 : vector<1x5x256xf32> to vector<5x256xf32>
    %250 = vector.extract_strided_slice %144 {offsets = [17, 0], sizes = [1, 256], strides = [1, 1]} : vector<28x256xf32> to vector<1x256xf32>
    %251 = vector.broadcast %250 : vector<1x256xf32> to vector<5x256xf32>
    %252 = arith.mulf %249, %251 : vector<5x256xf32>
    %253 = arith.addf %247, %252 : vector<5x256xf32>
    %c18 = arith.constant 18 : index
    %c0_114 = arith.constant 0 : index
    %c0_115 = arith.constant 0 : index
    %254 = vector.load %arg6[%c18, %c0_114, %c0_115] : memref<28x5x256xf32, #tpu.memory_space<vmem>>, vector<1x5x256xf32>
    %255 = vector.shape_cast %254 : vector<1x5x256xf32> to vector<5x256xf32>
    %256 = vector.extract_strided_slice %144 {offsets = [18, 0], sizes = [1, 256], strides = [1, 1]} : vector<28x256xf32> to vector<1x256xf32>
    %257 = vector.broadcast %256 : vector<1x256xf32> to vector<5x256xf32>
    %258 = arith.mulf %255, %257 : vector<5x256xf32>
    %259 = arith.addf %253, %258 : vector<5x256xf32>
    %c19 = arith.constant 19 : index
    %c0_116 = arith.constant 0 : index
    %c0_117 = arith.constant 0 : index
    %260 = vector.load %arg6[%c19, %c0_116, %c0_117] : memref<28x5x256xf32, #tpu.memory_space<vmem>>, vector<1x5x256xf32>
    %261 = vector.shape_cast %260 : vector<1x5x256xf32> to vector<5x256xf32>
    %262 = vector.extract_strided_slice %144 {offsets = [19, 0], sizes = [1, 256], strides = [1, 1]} : vector<28x256xf32> to vector<1x256xf32>
    %263 = vector.broadcast %262 : vector<1x256xf32> to vector<5x256xf32>
    %264 = arith.mulf %261, %263 : vector<5x256xf32>
    %265 = arith.addf %259, %264 : vector<5x256xf32>
    %c20 = arith.constant 20 : index
    %c0_118 = arith.constant 0 : index
    %c0_119 = arith.constant 0 : index
    %266 = vector.load %arg6[%c20, %c0_118, %c0_119] : memref<28x5x256xf32, #tpu.memory_space<vmem>>, vector<1x5x256xf32>
    %267 = vector.shape_cast %266 : vector<1x5x256xf32> to vector<5x256xf32>
    %268 = vector.extract_strided_slice %144 {offsets = [20, 0], sizes = [1, 256], strides = [1, 1]} : vector<28x256xf32> to vector<1x256xf32>
    %269 = vector.broadcast %268 : vector<1x256xf32> to vector<5x256xf32>
    %270 = arith.mulf %267, %269 : vector<5x256xf32>
    %271 = arith.addf %265, %270 : vector<5x256xf32>
    %c21 = arith.constant 21 : index
    %c0_120 = arith.constant 0 : index
    %c0_121 = arith.constant 0 : index
    %272 = vector.load %arg6[%c21, %c0_120, %c0_121] : memref<28x5x256xf32, #tpu.memory_space<vmem>>, vector<1x5x256xf32>
    %273 = vector.shape_cast %272 : vector<1x5x256xf32> to vector<5x256xf32>
    %274 = vector.extract_strided_slice %144 {offsets = [21, 0], sizes = [1, 256], strides = [1, 1]} : vector<28x256xf32> to vector<1x256xf32>
    %275 = vector.broadcast %274 : vector<1x256xf32> to vector<5x256xf32>
    %276 = arith.mulf %273, %275 : vector<5x256xf32>
    %277 = arith.addf %271, %276 : vector<5x256xf32>
    %c22 = arith.constant 22 : index
    %c0_122 = arith.constant 0 : index
    %c0_123 = arith.constant 0 : index
    %278 = vector.load %arg6[%c22, %c0_122, %c0_123] : memref<28x5x256xf32, #tpu.memory_space<vmem>>, vector<1x5x256xf32>
    %279 = vector.shape_cast %278 : vector<1x5x256xf32> to vector<5x256xf32>
    %280 = vector.extract_strided_slice %144 {offsets = [22, 0], sizes = [1, 256], strides = [1, 1]} : vector<28x256xf32> to vector<1x256xf32>
    %281 = vector.broadcast %280 : vector<1x256xf32> to vector<5x256xf32>
    %282 = arith.mulf %279, %281 : vector<5x256xf32>
    %283 = arith.addf %277, %282 : vector<5x256xf32>
    %c23 = arith.constant 23 : index
    %c0_124 = arith.constant 0 : index
    %c0_125 = arith.constant 0 : index
    %284 = vector.load %arg6[%c23, %c0_124, %c0_125] : memref<28x5x256xf32, #tpu.memory_space<vmem>>, vector<1x5x256xf32>
    %285 = vector.shape_cast %284 : vector<1x5x256xf32> to vector<5x256xf32>
    %286 = vector.extract_strided_slice %144 {offsets = [23, 0], sizes = [1, 256], strides = [1, 1]} : vector<28x256xf32> to vector<1x256xf32>
    %287 = vector.broadcast %286 : vector<1x256xf32> to vector<5x256xf32>
    %288 = arith.mulf %285, %287 : vector<5x256xf32>
    %289 = arith.addf %283, %288 : vector<5x256xf32>
    %c24 = arith.constant 24 : index
    %c0_126 = arith.constant 0 : index
    %c0_127 = arith.constant 0 : index
    %290 = vector.load %arg6[%c24, %c0_126, %c0_127] : memref<28x5x256xf32, #tpu.memory_space<vmem>>, vector<1x5x256xf32>
    %291 = vector.shape_cast %290 : vector<1x5x256xf32> to vector<5x256xf32>
    %292 = vector.extract_strided_slice %144 {offsets = [24, 0], sizes = [1, 256], strides = [1, 1]} : vector<28x256xf32> to vector<1x256xf32>
    %293 = vector.broadcast %292 : vector<1x256xf32> to vector<5x256xf32>
    %294 = arith.mulf %291, %293 : vector<5x256xf32>
    %295 = arith.addf %289, %294 : vector<5x256xf32>
    %c25 = arith.constant 25 : index
    %c0_128 = arith.constant 0 : index
    %c0_129 = arith.constant 0 : index
    %296 = vector.load %arg6[%c25, %c0_128, %c0_129] : memref<28x5x256xf32, #tpu.memory_space<vmem>>, vector<1x5x256xf32>
    %297 = vector.shape_cast %296 : vector<1x5x256xf32> to vector<5x256xf32>
    %298 = vector.extract_strided_slice %144 {offsets = [25, 0], sizes = [1, 256], strides = [1, 1]} : vector<28x256xf32> to vector<1x256xf32>
    %299 = vector.broadcast %298 : vector<1x256xf32> to vector<5x256xf32>
    %300 = arith.mulf %297, %299 : vector<5x256xf32>
    %301 = arith.addf %295, %300 : vector<5x256xf32>
    %c26 = arith.constant 26 : index
    %c0_130 = arith.constant 0 : index
    %c0_131 = arith.constant 0 : index
    %302 = vector.load %arg6[%c26, %c0_130, %c0_131] : memref<28x5x256xf32, #tpu.memory_space<vmem>>, vector<1x5x256xf32>
    %303 = vector.shape_cast %302 : vector<1x5x256xf32> to vector<5x256xf32>
    %304 = vector.extract_strided_slice %144 {offsets = [26, 0], sizes = [1, 256], strides = [1, 1]} : vector<28x256xf32> to vector<1x256xf32>
    %305 = vector.broadcast %304 : vector<1x256xf32> to vector<5x256xf32>
    %306 = arith.mulf %303, %305 : vector<5x256xf32>
    %307 = arith.addf %301, %306 : vector<5x256xf32>
    %c27 = arith.constant 27 : index
    %c0_132 = arith.constant 0 : index
    %c0_133 = arith.constant 0 : index
    %308 = vector.load %arg6[%c27, %c0_132, %c0_133] : memref<28x5x256xf32, #tpu.memory_space<vmem>>, vector<1x5x256xf32>
    %309 = vector.shape_cast %308 : vector<1x5x256xf32> to vector<5x256xf32>
    %310 = vector.extract_strided_slice %144 {offsets = [27, 0], sizes = [1, 256], strides = [1, 1]} : vector<28x256xf32> to vector<1x256xf32>
    %311 = vector.broadcast %310 : vector<1x256xf32> to vector<5x256xf32>
    %312 = arith.mulf %309, %311 : vector<5x256xf32>
    %313 = arith.addf %307, %312 : vector<5x256xf32>
    %cst_134 = arith.constant dense<0xFF800000> : vector<256xf32>
    %314 = vector.multi_reduction <maximumf>, %313, %cst_134 [0] : vector<5x256xf32> to vector<256xf32>
    %315 = vector.shape_cast %314 : vector<256xf32> to vector<1x256xf32>
    %316 = vector.broadcast %315 : vector<1x256xf32> to vector<5x256xf32>
    %317 = arith.subf %313, %316 : vector<5x256xf32>
    %318 = math.exp %317 : vector<5x256xf32>
    %cst_135 = arith.constant dense<0.000000e+00> : vector<256xf32>
    %319 = vector.multi_reduction <add>, %318, %cst_135 [0] : vector<5x256xf32> to vector<256xf32>
    %320 = vector.shape_cast %319 : vector<256xf32> to vector<1x256xf32>
    %321 = tpu.reciprocal %320 {approx = true} : vector<1x256xf32> -> vector<1x256xf32>
    %322 = vector.broadcast %321 : vector<1x256xf32> to vector<5x256xf32>
    %323 = arith.mulf %318, %322 : vector<5x256xf32>
    %c0_136 = arith.constant 0 : index
    %c0_137 = arith.constant 0 : index
    %324 = vector.load %arg8[%c0_136, %c0_137] : memref<5x512xf32, #tpu.memory_space<vmem>>, vector<5x256xf32>
    tpu.vector_store %arg8[%c0_136, %c0_137], %323 {strides = array<i32>} : memref<5x512xf32, #tpu.memory_space<vmem>>, vector<5x256xf32>,
    %c0_138 = arith.constant 0 : index
    %c256 = arith.constant 256 : index
    %325 = vector.load %arg1[%c0_138, %c256] : memref<9x512xf32, #tpu.memory_space<vmem>>, vector<9x256xf32>
    %c0_139 = arith.constant 0 : index
    %c0_140 = arith.constant 0 : index
    %c0_141 = arith.constant 0 : index
    %326 = vector.load %arg2[%c0_139, %c0_140, %c0_141] : memref<9x14x256xf32, #tpu.memory_space<vmem>>, vector<1x14x256xf32>
    %327 = vector.shape_cast %326 : vector<1x14x256xf32> to vector<14x256xf32>
    %328 = vector.extract_strided_slice %325 {offsets = [0, 0], sizes = [1, 256], strides = [1, 1]} : vector<9x256xf32> to vector<1x256xf32>
    %329 = vector.broadcast %328 : vector<1x256xf32> to vector<14x256xf32>
    %330 = arith.mulf %327, %329 : vector<14x256xf32>
    %c0_142 = arith.constant 0 : index
    %c0_143 = arith.constant 0 : index
    %331 = vector.load %arg3[%c0_142, %c0_143] : memref<14x256xf32, #tpu.memory_space<vmem>>, vector<14x256xf32>
    %332 = arith.addf %330, %331 : vector<14x256xf32>
    %c1_144 = arith.constant 1 : index
    %c0_145 = arith.constant 0 : index
    %c0_146 = arith.constant 0 : index
    %333 = vector.load %arg2[%c1_144, %c0_145, %c0_146] : memref<9x14x256xf32, #tpu.memory_space<vmem>>, vector<1x14x256xf32>
    %334 = vector.shape_cast %333 : vector<1x14x256xf32> to vector<14x256xf32>
    %335 = vector.extract_strided_slice %325 {offsets = [1, 0], sizes = [1, 256], strides = [1, 1]} : vector<9x256xf32> to vector<1x256xf32>
    %336 = vector.broadcast %335 : vector<1x256xf32> to vector<14x256xf32>
    %337 = arith.mulf %334, %336 : vector<14x256xf32>
    %338 = arith.addf %332, %337 : vector<14x256xf32>
    %c2_147 = arith.constant 2 : index
    %c0_148 = arith.constant 0 : index
    %c0_149 = arith.constant 0 : index
    %339 = vector.load %arg2[%c2_147, %c0_148, %c0_149] : memref<9x14x256xf32, #tpu.memory_space<vmem>>, vector<1x14x256xf32>
    %340 = vector.shape_cast %339 : vector<1x14x256xf32> to vector<14x256xf32>
    %341 = vector.extract_strided_slice %325 {offsets = [2, 0], sizes = [1, 256], strides = [1, 1]} : vector<9x256xf32> to vector<1x256xf32>
    %342 = vector.broadcast %341 : vector<1x256xf32> to vector<14x256xf32>
    %343 = arith.mulf %340, %342 : vector<14x256xf32>
    %344 = arith.addf %338, %343 : vector<14x256xf32>
    %c3_150 = arith.constant 3 : index
    %c0_151 = arith.constant 0 : index
    %c0_152 = arith.constant 0 : index
    %345 = vector.load %arg2[%c3_150, %c0_151, %c0_152] : memref<9x14x256xf32, #tpu.memory_space<vmem>>, vector<1x14x256xf32>
    %346 = vector.shape_cast %345 : vector<1x14x256xf32> to vector<14x256xf32>
    %347 = vector.extract_strided_slice %325 {offsets = [3, 0], sizes = [1, 256], strides = [1, 1]} : vector<9x256xf32> to vector<1x256xf32>
    %348 = vector.broadcast %347 : vector<1x256xf32> to vector<14x256xf32>
    %349 = arith.mulf %346, %348 : vector<14x256xf32>
    %350 = arith.addf %344, %349 : vector<14x256xf32>
    %c4_153 = arith.constant 4 : index
    %c0_154 = arith.constant 0 : index
    %c0_155 = arith.constant 0 : index
    %351 = vector.load %arg2[%c4_153, %c0_154, %c0_155] : memref<9x14x256xf32, #tpu.memory_space<vmem>>, vector<1x14x256xf32>
    %352 = vector.shape_cast %351 : vector<1x14x256xf32> to vector<14x256xf32>
    %353 = vector.extract_strided_slice %325 {offsets = [4, 0], sizes = [1, 256], strides = [1, 1]} : vector<9x256xf32> to vector<1x256xf32>
    %354 = vector.broadcast %353 : vector<1x256xf32> to vector<14x256xf32>
    %355 = arith.mulf %352, %354 : vector<14x256xf32>
    %356 = arith.addf %350, %355 : vector<14x256xf32>
    %c5_156 = arith.constant 5 : index
    %c0_157 = arith.constant 0 : index
    %c0_158 = arith.constant 0 : index
    %357 = vector.load %arg2[%c5_156, %c0_157, %c0_158] : memref<9x14x256xf32, #tpu.memory_space<vmem>>, vector<1x14x256xf32>
    %358 = vector.shape_cast %357 : vector<1x14x256xf32> to vector<14x256xf32>
    %359 = vector.extract_strided_slice %325 {offsets = [5, 0], sizes = [1, 256], strides = [1, 1]} : vector<9x256xf32> to vector<1x256xf32>
    %360 = vector.broadcast %359 : vector<1x256xf32> to vector<14x256xf32>
    %361 = arith.mulf %358, %360 : vector<14x256xf32>
    %362 = arith.addf %356, %361 : vector<14x256xf32>
    %c6_159 = arith.constant 6 : index
    %c0_160 = arith.constant 0 : index
    %c0_161 = arith.constant 0 : index
    %363 = vector.load %arg2[%c6_159, %c0_160, %c0_161] : memref<9x14x256xf32, #tpu.memory_space<vmem>>, vector<1x14x256xf32>
    %364 = vector.shape_cast %363 : vector<1x14x256xf32> to vector<14x256xf32>
    %365 = vector.extract_strided_slice %325 {offsets = [6, 0], sizes = [1, 256], strides = [1, 1]} : vector<9x256xf32> to vector<1x256xf32>
    %366 = vector.broadcast %365 : vector<1x256xf32> to vector<14x256xf32>
    %367 = arith.mulf %364, %366 : vector<14x256xf32>
    %368 = arith.addf %362, %367 : vector<14x256xf32>
    %c7_162 = arith.constant 7 : index
    %c0_163 = arith.constant 0 : index
    %c0_164 = arith.constant 0 : index
    %369 = vector.load %arg2[%c7_162, %c0_163, %c0_164] : memref<9x14x256xf32, #tpu.memory_space<vmem>>, vector<1x14x256xf32>
    %370 = vector.shape_cast %369 : vector<1x14x256xf32> to vector<14x256xf32>
    %371 = vector.extract_strided_slice %325 {offsets = [7, 0], sizes = [1, 256], strides = [1, 1]} : vector<9x256xf32> to vector<1x256xf32>
    %372 = vector.broadcast %371 : vector<1x256xf32> to vector<14x256xf32>
    %373 = arith.mulf %370, %372 : vector<14x256xf32>
    %374 = arith.addf %368, %373 : vector<14x256xf32>
    %c8_165 = arith.constant 8 : index
    %c0_166 = arith.constant 0 : index
    %c0_167 = arith.constant 0 : index
    %375 = vector.load %arg2[%c8_165, %c0_166, %c0_167] : memref<9x14x256xf32, #tpu.memory_space<vmem>>, vector<1x14x256xf32>
    %376 = vector.shape_cast %375 : vector<1x14x256xf32> to vector<14x256xf32>
    %377 = vector.extract_strided_slice %325 {offsets = [8, 0], sizes = [1, 256], strides = [1, 1]} : vector<9x256xf32> to vector<1x256xf32>
    %378 = vector.broadcast %377 : vector<1x256xf32> to vector<14x256xf32>
    %379 = arith.mulf %376, %378 : vector<14x256xf32>
    %380 = arith.addf %374, %379 : vector<14x256xf32>
    %cst_168 = arith.constant 0.000000e+00 : f32
    %381 = vector.broadcast %cst_168 : f32 to vector<14x256xf32>
    %382 = arith.maximumf %380, %381 : vector<14x256xf32>
    %c0_169 = arith.constant 0 : index
    %c0_170 = arith.constant 0 : index
    %c0_171 = arith.constant 0 : index
    %383 = vector.load %arg4[%c0_169, %c0_170, %c0_171] : memref<14x28x256xf32, #tpu.memory_space<vmem>>, vector<1x28x256xf32>
    %384 = vector.shape_cast %383 : vector<1x28x256xf32> to vector<28x256xf32>
    %385 = vector.extract_strided_slice %382 {offsets = [0, 0], sizes = [1, 256], strides = [1, 1]} : vector<14x256xf32> to vector<1x256xf32>
    %386 = vector.broadcast %385 : vector<1x256xf32> to vector<28x256xf32>
    %387 = arith.mulf %384, %386 : vector<28x256xf32>
    %c0_172 = arith.constant 0 : index
    %c0_173 = arith.constant 0 : index
    %388 = vector.load %arg5[%c0_172, %c0_173] : memref<28x256xf32, #tpu.memory_space<vmem>>, vector<28x256xf32>
    %389 = arith.addf %387, %388 : vector<28x256xf32>
    %c1_174 = arith.constant 1 : index
    %c0_175 = arith.constant 0 : index
    %c0_176 = arith.constant 0 : index
    %390 = vector.load %arg4[%c1_174, %c0_175, %c0_176] : memref<14x28x256xf32, #tpu.memory_space<vmem>>, vector<1x28x256xf32>
    %391 = vector.shape_cast %390 : vector<1x28x256xf32> to vector<28x256xf32>
    %392 = vector.extract_strided_slice %382 {offsets = [1, 0], sizes = [1, 256], strides = [1, 1]} : vector<14x256xf32> to vector<1x256xf32>
    %393 = vector.broadcast %392 : vector<1x256xf32> to vector<28x256xf32>
    %394 = arith.mulf %391, %393 : vector<28x256xf32>
    %395 = arith.addf %389, %394 : vector<28x256xf32>
    %c2_177 = arith.constant 2 : index
    %c0_178 = arith.constant 0 : index
    %c0_179 = arith.constant 0 : index
    %396 = vector.load %arg4[%c2_177, %c0_178, %c0_179] : memref<14x28x256xf32, #tpu.memory_space<vmem>>, vector<1x28x256xf32>
    %397 = vector.shape_cast %396 : vector<1x28x256xf32> to vector<28x256xf32>
    %398 = vector.extract_strided_slice %382 {offsets = [2, 0], sizes = [1, 256], strides = [1, 1]} : vector<14x256xf32> to vector<1x256xf32>
    %399 = vector.broadcast %398 : vector<1x256xf32> to vector<28x256xf32>
    %400 = arith.mulf %397, %399 : vector<28x256xf32>
    %401 = arith.addf %395, %400 : vector<28x256xf32>
    %c3_180 = arith.constant 3 : index
    %c0_181 = arith.constant 0 : index
    %c0_182 = arith.constant 0 : index
    %402 = vector.load %arg4[%c3_180, %c0_181, %c0_182] : memref<14x28x256xf32, #tpu.memory_space<vmem>>, vector<1x28x256xf32>
    %403 = vector.shape_cast %402 : vector<1x28x256xf32> to vector<28x256xf32>
    %404 = vector.extract_strided_slice %382 {offsets = [3, 0], sizes = [1, 256], strides = [1, 1]} : vector<14x256xf32> to vector<1x256xf32>
    %405 = vector.broadcast %404 : vector<1x256xf32> to vector<28x256xf32>
    %406 = arith.mulf %403, %405 : vector<28x256xf32>
    %407 = arith.addf %401, %406 : vector<28x256xf32>
    %c4_183 = arith.constant 4 : index
    %c0_184 = arith.constant 0 : index
    %c0_185 = arith.constant 0 : index
    %408 = vector.load %arg4[%c4_183, %c0_184, %c0_185] : memref<14x28x256xf32, #tpu.memory_space<vmem>>, vector<1x28x256xf32>
    %409 = vector.shape_cast %408 : vector<1x28x256xf32> to vector<28x256xf32>
    %410 = vector.extract_strided_slice %382 {offsets = [4, 0], sizes = [1, 256], strides = [1, 1]} : vector<14x256xf32> to vector<1x256xf32>
    %411 = vector.broadcast %410 : vector<1x256xf32> to vector<28x256xf32>
    %412 = arith.mulf %409, %411 : vector<28x256xf32>
    %413 = arith.addf %407, %412 : vector<28x256xf32>
    %c5_186 = arith.constant 5 : index
    %c0_187 = arith.constant 0 : index
    %c0_188 = arith.constant 0 : index
    %414 = vector.load %arg4[%c5_186, %c0_187, %c0_188] : memref<14x28x256xf32, #tpu.memory_space<vmem>>, vector<1x28x256xf32>
    %415 = vector.shape_cast %414 : vector<1x28x256xf32> to vector<28x256xf32>
    %416 = vector.extract_strided_slice %382 {offsets = [5, 0], sizes = [1, 256], strides = [1, 1]} : vector<14x256xf32> to vector<1x256xf32>
    %417 = vector.broadcast %416 : vector<1x256xf32> to vector<28x256xf32>
    %418 = arith.mulf %415, %417 : vector<28x256xf32>
    %419 = arith.addf %413, %418 : vector<28x256xf32>
    %c6_189 = arith.constant 6 : index
    %c0_190 = arith.constant 0 : index
    %c0_191 = arith.constant 0 : index
    %420 = vector.load %arg4[%c6_189, %c0_190, %c0_191] : memref<14x28x256xf32, #tpu.memory_space<vmem>>, vector<1x28x256xf32>
    %421 = vector.shape_cast %420 : vector<1x28x256xf32> to vector<28x256xf32>
    %422 = vector.extract_strided_slice %382 {offsets = [6, 0], sizes = [1, 256], strides = [1, 1]} : vector<14x256xf32> to vector<1x256xf32>
    %423 = vector.broadcast %422 : vector<1x256xf32> to vector<28x256xf32>
    %424 = arith.mulf %421, %423 : vector<28x256xf32>
    %425 = arith.addf %419, %424 : vector<28x256xf32>
    %c7_192 = arith.constant 7 : index
    %c0_193 = arith.constant 0 : index
    %c0_194 = arith.constant 0 : index
    %426 = vector.load %arg4[%c7_192, %c0_193, %c0_194] : memref<14x28x256xf32, #tpu.memory_space<vmem>>, vector<1x28x256xf32>
    %427 = vector.shape_cast %426 : vector<1x28x256xf32> to vector<28x256xf32>
    %428 = vector.extract_strided_slice %382 {offsets = [7, 0], sizes = [1, 256], strides = [1, 1]} : vector<14x256xf32> to vector<1x256xf32>
    %429 = vector.broadcast %428 : vector<1x256xf32> to vector<28x256xf32>
    %430 = arith.mulf %427, %429 : vector<28x256xf32>
    %431 = arith.addf %425, %430 : vector<28x256xf32>
    %c8_195 = arith.constant 8 : index
    %c0_196 = arith.constant 0 : index
    %c0_197 = arith.constant 0 : index
    %432 = vector.load %arg4[%c8_195, %c0_196, %c0_197] : memref<14x28x256xf32, #tpu.memory_space<vmem>>, vector<1x28x256xf32>
    %433 = vector.shape_cast %432 : vector<1x28x256xf32> to vector<28x256xf32>
    %434 = vector.extract_strided_slice %382 {offsets = [8, 0], sizes = [1, 256], strides = [1, 1]} : vector<14x256xf32> to vector<1x256xf32>
    %435 = vector.broadcast %434 : vector<1x256xf32> to vector<28x256xf32>
    %436 = arith.mulf %433, %435 : vector<28x256xf32>
    %437 = arith.addf %431, %436 : vector<28x256xf32>
    %c9_198 = arith.constant 9 : index
    %c0_199 = arith.constant 0 : index
    %c0_200 = arith.constant 0 : index
    %438 = vector.load %arg4[%c9_198, %c0_199, %c0_200] : memref<14x28x256xf32, #tpu.memory_space<vmem>>, vector<1x28x256xf32>
    %439 = vector.shape_cast %438 : vector<1x28x256xf32> to vector<28x256xf32>
    %440 = vector.extract_strided_slice %382 {offsets = [9, 0], sizes = [1, 256], strides = [1, 1]} : vector<14x256xf32> to vector<1x256xf32>
    %441 = vector.broadcast %440 : vector<1x256xf32> to vector<28x256xf32>
    %442 = arith.mulf %439, %441 : vector<28x256xf32>
    %443 = arith.addf %437, %442 : vector<28x256xf32>
    %c10_201 = arith.constant 10 : index
    %c0_202 = arith.constant 0 : index
    %c0_203 = arith.constant 0 : index
    %444 = vector.load %arg4[%c10_201, %c0_202, %c0_203] : memref<14x28x256xf32, #tpu.memory_space<vmem>>, vector<1x28x256xf32>
    %445 = vector.shape_cast %444 : vector<1x28x256xf32> to vector<28x256xf32>
    %446 = vector.extract_strided_slice %382 {offsets = [10, 0], sizes = [1, 256], strides = [1, 1]} : vector<14x256xf32> to vector<1x256xf32>
    %447 = vector.broadcast %446 : vector<1x256xf32> to vector<28x256xf32>
    %448 = arith.mulf %445, %447 : vector<28x256xf32>
    %449 = arith.addf %443, %448 : vector<28x256xf32>
    %c11_204 = arith.constant 11 : index
    %c0_205 = arith.constant 0 : index
    %c0_206 = arith.constant 0 : index
    %450 = vector.load %arg4[%c11_204, %c0_205, %c0_206] : memref<14x28x256xf32, #tpu.memory_space<vmem>>, vector<1x28x256xf32>
    %451 = vector.shape_cast %450 : vector<1x28x256xf32> to vector<28x256xf32>
    %452 = vector.extract_strided_slice %382 {offsets = [11, 0], sizes = [1, 256], strides = [1, 1]} : vector<14x256xf32> to vector<1x256xf32>
    %453 = vector.broadcast %452 : vector<1x256xf32> to vector<28x256xf32>
    %454 = arith.mulf %451, %453 : vector<28x256xf32>
    %455 = arith.addf %449, %454 : vector<28x256xf32>
    %c12_207 = arith.constant 12 : index
    %c0_208 = arith.constant 0 : index
    %c0_209 = arith.constant 0 : index
    %456 = vector.load %arg4[%c12_207, %c0_208, %c0_209] : memref<14x28x256xf32, #tpu.memory_space<vmem>>, vector<1x28x256xf32>
    %457 = vector.shape_cast %456 : vector<1x28x256xf32> to vector<28x256xf32>
    %458 = vector.extract_strided_slice %382 {offsets = [12, 0], sizes = [1, 256], strides = [1, 1]} : vector<14x256xf32> to vector<1x256xf32>
    %459 = vector.broadcast %458 : vector<1x256xf32> to vector<28x256xf32>
    %460 = arith.mulf %457, %459 : vector<28x256xf32>
    %461 = arith.addf %455, %460 : vector<28x256xf32>
    %c13_210 = arith.constant 13 : index
    %c0_211 = arith.constant 0 : index
    %c0_212 = arith.constant 0 : index
    %462 = vector.load %arg4[%c13_210, %c0_211, %c0_212] : memref<14x28x256xf32, #tpu.memory_space<vmem>>, vector<1x28x256xf32>
    %463 = vector.shape_cast %462 : vector<1x28x256xf32> to vector<28x256xf32>
    %464 = vector.extract_strided_slice %382 {offsets = [13, 0], sizes = [1, 256], strides = [1, 1]} : vector<14x256xf32> to vector<1x256xf32>
    %465 = vector.broadcast %464 : vector<1x256xf32> to vector<28x256xf32>
    %466 = arith.mulf %463, %465 : vector<28x256xf32>
    %467 = arith.addf %461, %466 : vector<28x256xf32>
    %cst_213 = arith.constant 0.000000e+00 : f32
    %468 = vector.broadcast %cst_213 : f32 to vector<28x256xf32>
    %469 = arith.maximumf %467, %468 : vector<28x256xf32>
    %c0_214 = arith.constant 0 : index
    %c0_215 = arith.constant 0 : index
    %c0_216 = arith.constant 0 : index
    %470 = vector.load %arg6[%c0_214, %c0_215, %c0_216] : memref<28x5x256xf32, #tpu.memory_space<vmem>>, vector<1x5x256xf32>
    %471 = vector.shape_cast %470 : vector<1x5x256xf32> to vector<5x256xf32>
    %472 = vector.extract_strided_slice %469 {offsets = [0, 0], sizes = [1, 256], strides = [1, 1]} : vector<28x256xf32> to vector<1x256xf32>
    %473 = vector.broadcast %472 : vector<1x256xf32> to vector<5x256xf32>
    %474 = arith.mulf %471, %473 : vector<5x256xf32>
    %c0_217 = arith.constant 0 : index
    %c0_218 = arith.constant 0 : index
    %475 = vector.load %arg7[%c0_217, %c0_218] : memref<5x256xf32, #tpu.memory_space<vmem>>, vector<5x256xf32>
    %476 = arith.addf %474, %475 : vector<5x256xf32>
    %c1_219 = arith.constant 1 : index
    %c0_220 = arith.constant 0 : index
    %c0_221 = arith.constant 0 : index
    %477 = vector.load %arg6[%c1_219, %c0_220, %c0_221] : memref<28x5x256xf32, #tpu.memory_space<vmem>>, vector<1x5x256xf32>
    %478 = vector.shape_cast %477 : vector<1x5x256xf32> to vector<5x256xf32>
    %479 = vector.extract_strided_slice %469 {offsets = [1, 0], sizes = [1, 256], strides = [1, 1]} : vector<28x256xf32> to vector<1x256xf32>
    %480 = vector.broadcast %479 : vector<1x256xf32> to vector<5x256xf32>
    %481 = arith.mulf %478, %480 : vector<5x256xf32>
    %482 = arith.addf %476, %481 : vector<5x256xf32>
    %c2_222 = arith.constant 2 : index
    %c0_223 = arith.constant 0 : index
    %c0_224 = arith.constant 0 : index
    %483 = vector.load %arg6[%c2_222, %c0_223, %c0_224] : memref<28x5x256xf32, #tpu.memory_space<vmem>>, vector<1x5x256xf32>
    %484 = vector.shape_cast %483 : vector<1x5x256xf32> to vector<5x256xf32>
    %485 = vector.extract_strided_slice %469 {offsets = [2, 0], sizes = [1, 256], strides = [1, 1]} : vector<28x256xf32> to vector<1x256xf32>
    %486 = vector.broadcast %485 : vector<1x256xf32> to vector<5x256xf32>
    %487 = arith.mulf %484, %486 : vector<5x256xf32>
    %488 = arith.addf %482, %487 : vector<5x256xf32>
    %c3_225 = arith.constant 3 : index
    %c0_226 = arith.constant 0 : index
    %c0_227 = arith.constant 0 : index
    %489 = vector.load %arg6[%c3_225, %c0_226, %c0_227] : memref<28x5x256xf32, #tpu.memory_space<vmem>>, vector<1x5x256xf32>
    %490 = vector.shape_cast %489 : vector<1x5x256xf32> to vector<5x256xf32>
    %491 = vector.extract_strided_slice %469 {offsets = [3, 0], sizes = [1, 256], strides = [1, 1]} : vector<28x256xf32> to vector<1x256xf32>
    %492 = vector.broadcast %491 : vector<1x256xf32> to vector<5x256xf32>
    %493 = arith.mulf %490, %492 : vector<5x256xf32>
    %494 = arith.addf %488, %493 : vector<5x256xf32>
    %c4_228 = arith.constant 4 : index
    %c0_229 = arith.constant 0 : index
    %c0_230 = arith.constant 0 : index
    %495 = vector.load %arg6[%c4_228, %c0_229, %c0_230] : memref<28x5x256xf32, #tpu.memory_space<vmem>>, vector<1x5x256xf32>
    %496 = vector.shape_cast %495 : vector<1x5x256xf32> to vector<5x256xf32>
    %497 = vector.extract_strided_slice %469 {offsets = [4, 0], sizes = [1, 256], strides = [1, 1]} : vector<28x256xf32> to vector<1x256xf32>
    %498 = vector.broadcast %497 : vector<1x256xf32> to vector<5x256xf32>
    %499 = arith.mulf %496, %498 : vector<5x256xf32>
    %500 = arith.addf %494, %499 : vector<5x256xf32>
    %c5_231 = arith.constant 5 : index
    %c0_232 = arith.constant 0 : index
    %c0_233 = arith.constant 0 : index
    %501 = vector.load %arg6[%c5_231, %c0_232, %c0_233] : memref<28x5x256xf32, #tpu.memory_space<vmem>>, vector<1x5x256xf32>
    %502 = vector.shape_cast %501 : vector<1x5x256xf32> to vector<5x256xf32>
    %503 = vector.extract_strided_slice %469 {offsets = [5, 0], sizes = [1, 256], strides = [1, 1]} : vector<28x256xf32> to vector<1x256xf32>
    %504 = vector.broadcast %503 : vector<1x256xf32> to vector<5x256xf32>
    %505 = arith.mulf %502, %504 : vector<5x256xf32>
    %506 = arith.addf %500, %505 : vector<5x256xf32>
    %c6_234 = arith.constant 6 : index
    %c0_235 = arith.constant 0 : index
    %c0_236 = arith.constant 0 : index
    %507 = vector.load %arg6[%c6_234, %c0_235, %c0_236] : memref<28x5x256xf32, #tpu.memory_space<vmem>>, vector<1x5x256xf32>
    %508 = vector.shape_cast %507 : vector<1x5x256xf32> to vector<5x256xf32>
    %509 = vector.extract_strided_slice %469 {offsets = [6, 0], sizes = [1, 256], strides = [1, 1]} : vector<28x256xf32> to vector<1x256xf32>
    %510 = vector.broadcast %509 : vector<1x256xf32> to vector<5x256xf32>
    %511 = arith.mulf %508, %510 : vector<5x256xf32>
    %512 = arith.addf %506, %511 : vector<5x256xf32>
    %c7_237 = arith.constant 7 : index
    %c0_238 = arith.constant 0 : index
    %c0_239 = arith.constant 0 : index
    %513 = vector.load %arg6[%c7_237, %c0_238, %c0_239] : memref<28x5x256xf32, #tpu.memory_space<vmem>>, vector<1x5x256xf32>
    %514 = vector.shape_cast %513 : vector<1x5x256xf32> to vector<5x256xf32>
    %515 = vector.extract_strided_slice %469 {offsets = [7, 0], sizes = [1, 256], strides = [1, 1]} : vector<28x256xf32> to vector<1x256xf32>
    %516 = vector.broadcast %515 : vector<1x256xf32> to vector<5x256xf32>
    %517 = arith.mulf %514, %516 : vector<5x256xf32>
    %518 = arith.addf %512, %517 : vector<5x256xf32>
    %c8_240 = arith.constant 8 : index
    %c0_241 = arith.constant 0 : index
    %c0_242 = arith.constant 0 : index
    %519 = vector.load %arg6[%c8_240, %c0_241, %c0_242] : memref<28x5x256xf32, #tpu.memory_space<vmem>>, vector<1x5x256xf32>
    %520 = vector.shape_cast %519 : vector<1x5x256xf32> to vector<5x256xf32>
    %521 = vector.extract_strided_slice %469 {offsets = [8, 0], sizes = [1, 256], strides = [1, 1]} : vector<28x256xf32> to vector<1x256xf32>
    %522 = vector.broadcast %521 : vector<1x256xf32> to vector<5x256xf32>
    %523 = arith.mulf %520, %522 : vector<5x256xf32>
    %524 = arith.addf %518, %523 : vector<5x256xf32>
    %c9_243 = arith.constant 9 : index
    %c0_244 = arith.constant 0 : index
    %c0_245 = arith.constant 0 : index
    %525 = vector.load %arg6[%c9_243, %c0_244, %c0_245] : memref<28x5x256xf32, #tpu.memory_space<vmem>>, vector<1x5x256xf32>
    %526 = vector.shape_cast %525 : vector<1x5x256xf32> to vector<5x256xf32>
    %527 = vector.extract_strided_slice %469 {offsets = [9, 0], sizes = [1, 256], strides = [1, 1]} : vector<28x256xf32> to vector<1x256xf32>
    %528 = vector.broadcast %527 : vector<1x256xf32> to vector<5x256xf32>
    %529 = arith.mulf %526, %528 : vector<5x256xf32>
    %530 = arith.addf %524, %529 : vector<5x256xf32>
    %c10_246 = arith.constant 10 : index
    %c0_247 = arith.constant 0 : index
    %c0_248 = arith.constant 0 : index
    %531 = vector.load %arg6[%c10_246, %c0_247, %c0_248] : memref<28x5x256xf32, #tpu.memory_space<vmem>>, vector<1x5x256xf32>
    %532 = vector.shape_cast %531 : vector<1x5x256xf32> to vector<5x256xf32>
    %533 = vector.extract_strided_slice %469 {offsets = [10, 0], sizes = [1, 256], strides = [1, 1]} : vector<28x256xf32> to vector<1x256xf32>
    %534 = vector.broadcast %533 : vector<1x256xf32> to vector<5x256xf32>
    %535 = arith.mulf %532, %534 : vector<5x256xf32>
    %536 = arith.addf %530, %535 : vector<5x256xf32>
    %c11_249 = arith.constant 11 : index
    %c0_250 = arith.constant 0 : index
    %c0_251 = arith.constant 0 : index
    %537 = vector.load %arg6[%c11_249, %c0_250, %c0_251] : memref<28x5x256xf32, #tpu.memory_space<vmem>>, vector<1x5x256xf32>
    %538 = vector.shape_cast %537 : vector<1x5x256xf32> to vector<5x256xf32>
    %539 = vector.extract_strided_slice %469 {offsets = [11, 0], sizes = [1, 256], strides = [1, 1]} : vector<28x256xf32> to vector<1x256xf32>
    %540 = vector.broadcast %539 : vector<1x256xf32> to vector<5x256xf32>
    %541 = arith.mulf %538, %540 : vector<5x256xf32>
    %542 = arith.addf %536, %541 : vector<5x256xf32>
    %c12_252 = arith.constant 12 : index
    %c0_253 = arith.constant 0 : index
    %c0_254 = arith.constant 0 : index
    %543 = vector.load %arg6[%c12_252, %c0_253, %c0_254] : memref<28x5x256xf32, #tpu.memory_space<vmem>>, vector<1x5x256xf32>
    %544 = vector.shape_cast %543 : vector<1x5x256xf32> to vector<5x256xf32>
    %545 = vector.extract_strided_slice %469 {offsets = [12, 0], sizes = [1, 256], strides = [1, 1]} : vector<28x256xf32> to vector<1x256xf32>
    %546 = vector.broadcast %545 : vector<1x256xf32> to vector<5x256xf32>
    %547 = arith.mulf %544, %546 : vector<5x256xf32>
    %548 = arith.addf %542, %547 : vector<5x256xf32>
    %c13_255 = arith.constant 13 : index
    %c0_256 = arith.constant 0 : index
    %c0_257 = arith.constant 0 : index
    %549 = vector.load %arg6[%c13_255, %c0_256, %c0_257] : memref<28x5x256xf32, #tpu.memory_space<vmem>>, vector<1x5x256xf32>
    %550 = vector.shape_cast %549 : vector<1x5x256xf32> to vector<5x256xf32>
    %551 = vector.extract_strided_slice %469 {offsets = [13, 0], sizes = [1, 256], strides = [1, 1]} : vector<28x256xf32> to vector<1x256xf32>
    %552 = vector.broadcast %551 : vector<1x256xf32> to vector<5x256xf32>
    %553 = arith.mulf %550, %552 : vector<5x256xf32>
    %554 = arith.addf %548, %553 : vector<5x256xf32>
    %c14_258 = arith.constant 14 : index
    %c0_259 = arith.constant 0 : index
    %c0_260 = arith.constant 0 : index
    %555 = vector.load %arg6[%c14_258, %c0_259, %c0_260] : memref<28x5x256xf32, #tpu.memory_space<vmem>>, vector<1x5x256xf32>
    %556 = vector.shape_cast %555 : vector<1x5x256xf32> to vector<5x256xf32>
    %557 = vector.extract_strided_slice %469 {offsets = [14, 0], sizes = [1, 256], strides = [1, 1]} : vector<28x256xf32> to vector<1x256xf32>
    %558 = vector.broadcast %557 : vector<1x256xf32> to vector<5x256xf32>
    %559 = arith.mulf %556, %558 : vector<5x256xf32>
    %560 = arith.addf %554, %559 : vector<5x256xf32>
    %c15_261 = arith.constant 15 : index
    %c0_262 = arith.constant 0 : index
    %c0_263 = arith.constant 0 : index
    %561 = vector.load %arg6[%c15_261, %c0_262, %c0_263] : memref<28x5x256xf32, #tpu.memory_space<vmem>>, vector<1x5x256xf32>
    %562 = vector.shape_cast %561 : vector<1x5x256xf32> to vector<5x256xf32>
    %563 = vector.extract_strided_slice %469 {offsets = [15, 0], sizes = [1, 256], strides = [1, 1]} : vector<28x256xf32> to vector<1x256xf32>
    %564 = vector.broadcast %563 : vector<1x256xf32> to vector<5x256xf32>
    %565 = arith.mulf %562, %564 : vector<5x256xf32>
    %566 = arith.addf %560, %565 : vector<5x256xf32>
    %c16_264 = arith.constant 16 : index
    %c0_265 = arith.constant 0 : index
    %c0_266 = arith.constant 0 : index
    %567 = vector.load %arg6[%c16_264, %c0_265, %c0_266] : memref<28x5x256xf32, #tpu.memory_space<vmem>>, vector<1x5x256xf32>
    %568 = vector.shape_cast %567 : vector<1x5x256xf32> to vector<5x256xf32>
    %569 = vector.extract_strided_slice %469 {offsets = [16, 0], sizes = [1, 256], strides = [1, 1]} : vector<28x256xf32> to vector<1x256xf32>
    %570 = vector.broadcast %569 : vector<1x256xf32> to vector<5x256xf32>
    %571 = arith.mulf %568, %570 : vector<5x256xf32>
    %572 = arith.addf %566, %571 : vector<5x256xf32>
    %c17_267 = arith.constant 17 : index
    %c0_268 = arith.constant 0 : index
    %c0_269 = arith.constant 0 : index
    %573 = vector.load %arg6[%c17_267, %c0_268, %c0_269] : memref<28x5x256xf32, #tpu.memory_space<vmem>>, vector<1x5x256xf32>
    %574 = vector.shape_cast %573 : vector<1x5x256xf32> to vector<5x256xf32>
    %575 = vector.extract_strided_slice %469 {offsets = [17, 0], sizes = [1, 256], strides = [1, 1]} : vector<28x256xf32> to vector<1x256xf32>
    %576 = vector.broadcast %575 : vector<1x256xf32> to vector<5x256xf32>
    %577 = arith.mulf %574, %576 : vector<5x256xf32>
    %578 = arith.addf %572, %577 : vector<5x256xf32>
    %c18_270 = arith.constant 18 : index
    %c0_271 = arith.constant 0 : index
    %c0_272 = arith.constant 0 : index
    %579 = vector.load %arg6[%c18_270, %c0_271, %c0_272] : memref<28x5x256xf32, #tpu.memory_space<vmem>>, vector<1x5x256xf32>
    %580 = vector.shape_cast %579 : vector<1x5x256xf32> to vector<5x256xf32>
    %581 = vector.extract_strided_slice %469 {offsets = [18, 0], sizes = [1, 256], strides = [1, 1]} : vector<28x256xf32> to vector<1x256xf32>
    %582 = vector.broadcast %581 : vector<1x256xf32> to vector<5x256xf32>
    %583 = arith.mulf %580, %582 : vector<5x256xf32>
    %584 = arith.addf %578, %583 : vector<5x256xf32>
    %c19_273 = arith.constant 19 : index
    %c0_274 = arith.constant 0 : index
    %c0_275 = arith.constant 0 : index
    %585 = vector.load %arg6[%c19_273, %c0_274, %c0_275] : memref<28x5x256xf32, #tpu.memory_space<vmem>>, vector<1x5x256xf32>
    %586 = vector.shape_cast %585 : vector<1x5x256xf32> to vector<5x256xf32>
    %587 = vector.extract_strided_slice %469 {offsets = [19, 0], sizes = [1, 256], strides = [1, 1]} : vector<28x256xf32> to vector<1x256xf32>
    %588 = vector.broadcast %587 : vector<1x256xf32> to vector<5x256xf32>
    %589 = arith.mulf %586, %588 : vector<5x256xf32>
    %590 = arith.addf %584, %589 : vector<5x256xf32>
    %c20_276 = arith.constant 20 : index
    %c0_277 = arith.constant 0 : index
    %c0_278 = arith.constant 0 : index
    %591 = vector.load %arg6[%c20_276, %c0_277, %c0_278] : memref<28x5x256xf32, #tpu.memory_space<vmem>>, vector<1x5x256xf32>
    %592 = vector.shape_cast %591 : vector<1x5x256xf32> to vector<5x256xf32>
    %593 = vector.extract_strided_slice %469 {offsets = [20, 0], sizes = [1, 256], strides = [1, 1]} : vector<28x256xf32> to vector<1x256xf32>
    %594 = vector.broadcast %593 : vector<1x256xf32> to vector<5x256xf32>
    %595 = arith.mulf %592, %594 : vector<5x256xf32>
    %596 = arith.addf %590, %595 : vector<5x256xf32>
    %c21_279 = arith.constant 21 : index
    %c0_280 = arith.constant 0 : index
    %c0_281 = arith.constant 0 : index
    %597 = vector.load %arg6[%c21_279, %c0_280, %c0_281] : memref<28x5x256xf32, #tpu.memory_space<vmem>>, vector<1x5x256xf32>
    %598 = vector.shape_cast %597 : vector<1x5x256xf32> to vector<5x256xf32>
    %599 = vector.extract_strided_slice %469 {offsets = [21, 0], sizes = [1, 256], strides = [1, 1]} : vector<28x256xf32> to vector<1x256xf32>
    %600 = vector.broadcast %599 : vector<1x256xf32> to vector<5x256xf32>
    %601 = arith.mulf %598, %600 : vector<5x256xf32>
    %602 = arith.addf %596, %601 : vector<5x256xf32>
    %c22_282 = arith.constant 22 : index
    %c0_283 = arith.constant 0 : index
    %c0_284 = arith.constant 0 : index
    %603 = vector.load %arg6[%c22_282, %c0_283, %c0_284] : memref<28x5x256xf32, #tpu.memory_space<vmem>>, vector<1x5x256xf32>
    %604 = vector.shape_cast %603 : vector<1x5x256xf32> to vector<5x256xf32>
    %605 = vector.extract_strided_slice %469 {offsets = [22, 0], sizes = [1, 256], strides = [1, 1]} : vector<28x256xf32> to vector<1x256xf32>
    %606 = vector.broadcast %605 : vector<1x256xf32> to vector<5x256xf32>
    %607 = arith.mulf %604, %606 : vector<5x256xf32>
    %608 = arith.addf %602, %607 : vector<5x256xf32>
    %c23_285 = arith.constant 23 : index
    %c0_286 = arith.constant 0 : index
    %c0_287 = arith.constant 0 : index
    %609 = vector.load %arg6[%c23_285, %c0_286, %c0_287] : memref<28x5x256xf32, #tpu.memory_space<vmem>>, vector<1x5x256xf32>
    %610 = vector.shape_cast %609 : vector<1x5x256xf32> to vector<5x256xf32>
    %611 = vector.extract_strided_slice %469 {offsets = [23, 0], sizes = [1, 256], strides = [1, 1]} : vector<28x256xf32> to vector<1x256xf32>
    %612 = vector.broadcast %611 : vector<1x256xf32> to vector<5x256xf32>
    %613 = arith.mulf %610, %612 : vector<5x256xf32>
    %614 = arith.addf %608, %613 : vector<5x256xf32>
    %c24_288 = arith.constant 24 : index
    %c0_289 = arith.constant 0 : index
    %c0_290 = arith.constant 0 : index
    %615 = vector.load %arg6[%c24_288, %c0_289, %c0_290] : memref<28x5x256xf32, #tpu.memory_space<vmem>>, vector<1x5x256xf32>
    %616 = vector.shape_cast %615 : vector<1x5x256xf32> to vector<5x256xf32>
    %617 = vector.extract_strided_slice %469 {offsets = [24, 0], sizes = [1, 256], strides = [1, 1]} : vector<28x256xf32> to vector<1x256xf32>
    %618 = vector.broadcast %617 : vector<1x256xf32> to vector<5x256xf32>
    %619 = arith.mulf %616, %618 : vector<5x256xf32>
    %620 = arith.addf %614, %619 : vector<5x256xf32>
    %c25_291 = arith.constant 25 : index
    %c0_292 = arith.constant 0 : index
    %c0_293 = arith.constant 0 : index
    %621 = vector.load %arg6[%c25_291, %c0_292, %c0_293] : memref<28x5x256xf32, #tpu.memory_space<vmem>>, vector<1x5x256xf32>
    %622 = vector.shape_cast %621 : vector<1x5x256xf32> to vector<5x256xf32>
    %623 = vector.extract_strided_slice %469 {offsets = [25, 0], sizes = [1, 256], strides = [1, 1]} : vector<28x256xf32> to vector<1x256xf32>
    %624 = vector.broadcast %623 : vector<1x256xf32> to vector<5x256xf32>
    %625 = arith.mulf %622, %624 : vector<5x256xf32>
    %626 = arith.addf %620, %625 : vector<5x256xf32>
    %c26_294 = arith.constant 26 : index
    %c0_295 = arith.constant 0 : index
    %c0_296 = arith.constant 0 : index
    %627 = vector.load %arg6[%c26_294, %c0_295, %c0_296] : memref<28x5x256xf32, #tpu.memory_space<vmem>>, vector<1x5x256xf32>
    %628 = vector.shape_cast %627 : vector<1x5x256xf32> to vector<5x256xf32>
    %629 = vector.extract_strided_slice %469 {offsets = [26, 0], sizes = [1, 256], strides = [1, 1]} : vector<28x256xf32> to vector<1x256xf32>
    %630 = vector.broadcast %629 : vector<1x256xf32> to vector<5x256xf32>
    %631 = arith.mulf %628, %630 : vector<5x256xf32>
    %632 = arith.addf %626, %631 : vector<5x256xf32>
    %c27_297 = arith.constant 27 : index
    %c0_298 = arith.constant 0 : index
    %c0_299 = arith.constant 0 : index
    %633 = vector.load %arg6[%c27_297, %c0_298, %c0_299] : memref<28x5x256xf32, #tpu.memory_space<vmem>>, vector<1x5x256xf32>
    %634 = vector.shape_cast %633 : vector<1x5x256xf32> to vector<5x256xf32>
    %635 = vector.extract_strided_slice %469 {offsets = [27, 0], sizes = [1, 256], strides = [1, 1]} : vector<28x256xf32> to vector<1x256xf32>
    %636 = vector.broadcast %635 : vector<1x256xf32> to vector<5x256xf32>
    %637 = arith.mulf %634, %636 : vector<5x256xf32>
    %638 = arith.addf %632, %637 : vector<5x256xf32>
    %cst_300 = arith.constant dense<0xFF800000> : vector<256xf32>
    %639 = vector.multi_reduction <maximumf>, %638, %cst_300 [0] : vector<5x256xf32> to vector<256xf32>
    %640 = vector.shape_cast %639 : vector<256xf32> to vector<1x256xf32>
    %641 = vector.broadcast %640 : vector<1x256xf32> to vector<5x256xf32>
    %642 = arith.subf %638, %641 : vector<5x256xf32>
    %643 = math.exp %642 : vector<5x256xf32>
    %cst_301 = arith.constant dense<0.000000e+00> : vector<256xf32>
    %644 = vector.multi_reduction <add>, %643, %cst_301 [0] : vector<5x256xf32> to vector<256xf32>
    %645 = vector.shape_cast %644 : vector<256xf32> to vector<1x256xf32>
    %646 = tpu.reciprocal %645 {approx = true} : vector<1x256xf32> -> vector<1x256xf32>
    %647 = vector.broadcast %646 : vector<1x256xf32> to vector<5x256xf32>
    %648 = arith.mulf %643, %647 : vector<5x256xf32>
    %c0_302 = arith.constant 0 : index
    %c256_303 = arith.constant 256 : index
    %649 = vector.load %arg8[%c0_302, %c256_303] : memref<5x512xf32, #tpu.memory_space<vmem>>, vector<5x256xf32>
    tpu.vector_store %arg8[%c0_302, %c256_303], %648 {strides = array<i32>} : memref<5x512xf32, #tpu.memory_space<vmem>>, vector<5x256xf32>,
    return
  }
  func.func @transform_0(%arg0: i32) -> (i32, i32) {
    %c0_i32 = arith.constant 0 : i32
    %c0_i32_0 = arith.constant 0 : i32
    return %c0_i32, %arg0 : i32, i32
  }
  func.func @transform_1(%arg0: i32) -> (i32, i32, i32) {
    %c0_i32 = arith.constant 0 : i32
    %c0_i32_0 = arith.constant 0 : i32
    %c0_i32_1 = arith.constant 0 : i32
    %c0_i32_2 = arith.constant 0 : i32
    return %c0_i32, %c0_i32_0, %c0_i32_1 : i32, i32, i32
  }
  func.func @transform_2(%arg0: i32) -> (i32, i32) {
    %c0_i32 = arith.constant 0 : i32
    %c0_i32_0 = arith.constant 0 : i32
    %c0_i32_1 = arith.constant 0 : i32
    return %c0_i32, %c0_i32_0 : i32, i32
  }
  func.func @transform_3(%arg0: i32) -> (i32, i32, i32) {
    %c0_i32 = arith.constant 0 : i32
    %c0_i32_0 = arith.constant 0 : i32
    %c0_i32_1 = arith.constant 0 : i32
    %c0_i32_2 = arith.constant 0 : i32
    return %c0_i32, %c0_i32_0, %c0_i32_1 : i32, i32, i32
  }
  func.func @transform_4(%arg0: i32) -> (i32, i32) {
    %c0_i32 = arith.constant 0 : i32
    %c0_i32_0 = arith.constant 0 : i32
    %c0_i32_1 = arith.constant 0 : i32
    return %c0_i32, %c0_i32_0 : i32, i32
  }
  func.func @transform_5(%arg0: i32) -> (i32, i32, i32) {
    %c0_i32 = arith.constant 0 : i32
    %c0_i32_0 = arith.constant 0 : i32
    %c0_i32_1 = arith.constant 0 : i32
    %c0_i32_2 = arith.constant 0 : i32
    return %c0_i32, %c0_i32_0, %c0_i32_1 : i32, i32, i32
  }
  func.func @transform_6(%arg0: i32) -> (i32, i32) {
    %c0_i32 = arith.constant 0 : i32
    %c0_i32_0 = arith.constant 0 : i32
    %c0_i32_1 = arith.constant 0 : i32
    return %c0_i32, %c0_i32_0 : i32, i32
  }
  func.func @transform_7(%arg0: i32) -> (i32, i32) {
    %c0_i32 = arith.constant 0 : i32
    %c0_i32_0 = arith.constant 0 : i32
    return %c0_i32, %arg0 : i32, i32
  }
}

</mosaic_0001>

<llo_original>
// kernel: tpu_custom_call.1
$region0: #{tpu_custom_call.1}
  #allocation0 [shape = 'u32[]', space=smem, size = 0x4, offset = 0x4, fixed_abs, tag = 'smem constant byte address 0x4 - core index']
  #allocation1 [shape = 'u32[72,128]{1,0:T(1,128)}', space=vmem, size = 0x9000, scoped, tag = 'internal scratch']
  %s0 = inlined_call_operand.vmem [shape: f32[9,1024], index: 0, kind: input, shape index: {}]
  %s1 = inlined_call_operand.vmem [shape: f32[9,14,256], index: 1, kind: input, shape index: {}]
  %s2 = inlined_call_operand.vmem [shape: f32[14,256], index: 2, kind: input, shape index: {}]
  %s3 = inlined_call_operand.hbm [shape: f32[14,28,256], index: 3, kind: input, shape index: {}]
  %s4 = inlined_call_operand.vmem [shape: f32[28,256], index: 4, kind: input, shape index: {}]
  %s5 = inlined_call_operand.vmem [shape: f32[28,5,256], index: 5, kind: input, shape index: {}]
  %s6 = inlined_call_operand.vmem [shape: f32[5,256], index: 6, kind: input, shape index: {}]
  %s7 = inlined_call_operand.hbm [shape: f32[5,1024], index: 7, kind: output, shape index: {}]
  %s8 = sld [smem:[#allocation0]]
  $region88: #{tpu_custom_call.1} parent=0
    _
  %s10 = ssub.s32 1, %s8
  %s11 = scalar_select 0, %s10, %s8
  $region1: #{tpu_custom_call.1} parent=0
    #allocation2 [shape = 'u8[65536]{0}', space=vmem, size = 0x10000, scoped, tag = 'input window, operand 0']
    #allocation3 [shape = 'u8[458752]{0}', space=vmem, size = 0x70000, scoped, tag = 'input window, operand 3, single buffered']
    #allocation4 [shape = 's32[2]{0}', space=sflag, size = 0x8, scoped, tag = 'scoped memory for tpu_custom_call.1']
    #allocation5 [shape = 's32[2]{0}', space=sflag, size = 0x8, scoped, tag = 'scoped memory for tpu_custom_call.1']
    #allocation6 [shape = 'u8[32768]{0}', space=vmem, size = 0x8000, scoped, tag = 'output window, operand 0']
    %12 = vsyncpa [#allocation4], 0
    %13 = vsyncpa [#allocation5], 0
    %s14 = scalar_lea.sflag [#allocation5], 1
    %15 = vsyncpa %s14, 0
    loop: start=0, step=1, limit=4
    $region2: #{tpu_custom_call.1} parent=1 // loop_pre_header
      _
    $region3: #{tpu_custom_call.1} parent=1 // loop_header
      %s17 = sphi 0, %s21
      %p18 = scmp.ge.s32.totalorder %s17, 4
      %s27 = sphi 0, %s29
      %s30 = sphi 0, %s27
      %s31 = sphi 0, %s30
      %s47 = sphi 0, %s31
      %s51 = sphi 0, %s51
      %s53 = sphi 0, %s51
      %s54 = sphi 0, %s53
      %s68 = sphi 0, %s54
      %s72 = sphi 0, %s72
      %s74 = sphi 0, %s72
      %s75 = sphi 0, %s74
      %s89 = sphi 0, %s75
      %s93 = sphi 0, %s93
      %s95 = sphi 0, %s93
      %s96 = sphi 0, %s95
      %s110 = sphi 0, %s96
      %s114 = sphi 0, %s114
      %s116 = sphi 0, %s114
      %s117 = sphi 0, %s116
      %s131 = sphi 0, %s117
      %s135 = sphi 0, %s135
      %s137 = sphi 0, %s135
      %s138 = sphi 0, %s137
      %s152 = sphi 0, %s138
      %s156 = sphi 0, %s156
      %s158 = sphi 0, %s156
      %s159 = sphi 0, %s158
      %s173 = sphi 0, %s159
      %s179 = sphi 0, %s181
      %s182 = sphi 0, %s179
      %s183 = sphi 0, %s182
      %s199 = sphi 0, %s183
    $region4: #{tpu_custom_call.1} parent=1 // loop_header_branch
      %20 = sbr.rel (%p18) target = $region8
    $region5: #{tpu_custom_call.1} parent=1 // loop_body
      %s22 = ssub.s32 %s17, 1
      %s23 = ssub.s32 %s17, 2
      %s24 = sadd.s32 %s17, 1
      %s25 = ssub.s32 %s17, %s24
      %p26 = scmp.eq.s32.totalorder %s25, 0
      %s28 = sadd.s32 %s27, 1
      %s29 = scalar_select %p26, %s27, %s28
      %p32 = pneg %p26
      %p33 = scmp.eq.s32.totalorder %s17, 1
      %p34 = por %p32, %p33
      %p35 = scmp.ne.s32.totalorder %s27, %s30
      %p36 = scmp.eq.s32.totalorder %s17, 0
      %p37 = por %p35, %p36
      %p38 = scmp.ne.s32.totalorder %s27, %s30
      %p39 = scmp.eq.s32.totalorder %s22, 1
      %p40 = por %p38, %p39
      %p41 = scmp.ne.s32.totalorder %s30, %s31
      %p42 = scmp.eq.s32.totalorder %s22, 0
      %p43 = por %p41, %p42
      %p44 = scmp.ne.s32.totalorder %s30, %s31
      %p45 = scmp.eq.s32.totalorder %s23, 1
      %p46 = por %p44, %p45
      %p48 = scmp.ne.s32.totalorder %s31, %s47
      %p49 = scmp.eq.s32.totalorder %s23, 0
      %p50 = por %p48, %p49
      %s52 = sadd.s32 %s51, 1
      %p55 = scmp.eq.s32.totalorder %s17, 1
      %p56 = scmp.ne.s32.totalorder %s51, %s53
      %p57 = scmp.eq.s32.totalorder %s17, 0
      %p58 = por %p56, %p57
      %p59 = scmp.ne.s32.totalorder %s51, %s53
      %p60 = scmp.eq.s32.totalorder %s22, 1
      %p61 = por %p59, %p60
      %p62 = scmp.ne.s32.totalorder %s53, %s54
      %p63 = scmp.eq.s32.totalorder %s22, 0
      %p64 = por %p62, %p63
      %p65 = scmp.ne.s32.totalorder %s53, %s54
      %p66 = scmp.eq.s32.totalorder %s23, 1
      %p67 = por %p65, %p66
      %p69 = scmp.ne.s32.totalorder %s54, %s68
      %p70 = scmp.eq.s32.totalorder %s23, 0
      %p71 = por %p69, %p70
      %s73 = sadd.s32 %s72, 1
      %p76 = scmp.eq.s32.totalorder %s17, 1
      %p77 = scmp.ne.s32.totalorder %s72, %s74
      %p78 = scmp.eq.s32.totalorder %s17, 0
      %p79 = por %p77, %p78
      %p80 = scmp.ne.s32.totalorder %s72, %s74
      %p81 = scmp.eq.s32.totalorder %s22, 1
      %p82 = por %p80, %p81
      %p83 = scmp.ne.s32.totalorder %s74, %s75
      %p84 = scmp.eq.s32.totalorder %s22, 0
      %p85 = por %p83, %p84
      %p86 = scmp.ne.s32.totalorder %s74, %s75
      %p87 = scmp.eq.s32.totalorder %s23, 1
      %p88 = por %p86, %p87
      %p90 = scmp.ne.s32.totalorder %s75, %s89
      %p91 = scmp.eq.s32.totalorder %s23, 0
      %p92 = por %p90, %p91
      %s94 = sadd.s32 %s93, 1
      %p97 = scmp.eq.s32.totalorder %s17, 1
      %p98 = scmp.ne.s32.totalorder %s93, %s95
      %p99 = scmp.eq.s32.totalorder %s17, 0
      %p100 = por %p98, %p99
      %p101 = scmp.ne.s32.totalorder %s93, %s95
      %p102 = scmp.eq.s32.totalorder %s22, 1
      %p103 = por %p101, %p102
      %p104 = scmp.ne.s32.totalorder %s95, %s96
      %p105 = scmp.eq.s32.totalorder %s22, 0
      %p106 = por %p104, %p105
      %p107 = scmp.ne.s32.totalorder %s95, %s96
      %p108 = scmp.eq.s32.totalorder %s23, 1
      %p109 = por %p107, %p108
      %p111 = scmp.ne.s32.totalorder %s96, %s110
      %p112 = scmp.eq.s32.totalorder %s23, 0
      %p113 = por %p111, %p112
      %s115 = sadd.s32 %s114, 1
      %p118 = scmp.eq.s32.totalorder %s17, 1
      %p119 = scmp.ne.s32.totalorder %s114, %s116
      %p120 = scmp.eq.s32.totalorder %s17, 0
      %p121 = por %p119, %p120
      %p122 = scmp.ne.s32.totalorder %s114, %s116
      %p123 = scmp.eq.s32.totalorder %s22, 1
      %p124 = por %p122, %p123
      %p125 = scmp.ne.s32.totalorder %s116, %s117
      %p126 = scmp.eq.s32.totalorder %s22, 0
      %p127 = por %p125, %p126
      %p128 = scmp.ne.s32.totalorder %s116, %s117
      %p129 = scmp.eq.s32.totalorder %s23, 1
      %p130 = por %p128, %p129
      %p132 = scmp.ne.s32.totalorder %s117, %s131
      %p133 = scmp.eq.s32.totalorder %s23, 0
      %p134 = por %p132, %p133
      %s136 = sadd.s32 %s135, 1
      %p139 = scmp.eq.s32.totalorder %s17, 1
      %p140 = scmp.ne.s32.totalorder %s135, %s137
      %p141 = scmp.eq.s32.totalorder %s17, 0
      %p142 = por %p140, %p141
      %p143 = scmp.ne.s32.totalorder %s135, %s137
      %p144 = scmp.eq.s32.totalorder %s22, 1
      %p145 = por %p143, %p144
      %p146 = scmp.ne.s32.totalorder %s137, %s138
      %p147 = scmp.eq.s32.totalorder %s22, 0
      %p148 = por %p146, %p147
      %p149 = scmp.ne.s32.totalorder %s137, %s138
      %p150 = scmp.eq.s32.totalorder %s23, 1
      %p151 = por %p149, %p150
      %p153 = scmp.ne.s32.totalorder %s138, %s152
      %p154 = scmp.eq.s32.totalorder %s23, 0
      %p155 = por %p153, %p154
      %s157 = sadd.s32 %s156, 1
      %p160 = scmp.eq.s32.totalorder %s17, 1
      %p161 = scmp.ne.s32.totalorder %s156, %s158
      %p162 = scmp.eq.s32.totalorder %s17, 0
      %p163 = por %p161, %p162
      %p164 = scmp.ne.s32.totalorder %s156, %s158
      %p165 = scmp.eq.s32.totalorder %s22, 1
      %p166 = por %p164, %p165
      %p167 = scmp.ne.s32.totalorder %s158, %s159
      %p168 = scmp.eq.s32.totalorder %s22, 0
      %p169 = por %p167, %p168
      %p170 = scmp.ne.s32.totalorder %s158, %s159
      %p171 = scmp.eq.s32.totalorder %s23, 1
      %p172 = por %p170, %p171
      %p174 = scmp.ne.s32.totalorder %s159, %s173
      %p175 = scmp.eq.s32.totalorder %s23, 0
      %p176 = por %p174, %p175
      %s177 = ssub.s32 %s17, %s24
      %p178 = scmp.eq.s32.totalorder %s177, 0
      %s180 = sadd.s32 %s179, 1
      %s181 = scalar_select %p178, %s179, %s180
      %p184 = pneg %p178
      %p185 = scmp.eq.s32.totalorder %s17, 1
      %p186 = por %p184, %p185
      %p187 = scmp.ne.s32.totalorder %s179, %s182
      %p188 = scmp.eq.s32.totalorder %s17, 0
      %p189 = por %p187, %p188
      %p190 = scmp.ne.s32.totalorder %s179, %s182
      %p191 = scmp.eq.s32.totalorder %s22, 1
      %p192 = por %p190, %p191
      %p193 = scmp.ne.s32.totalorder %s182, %s183
      %p194 = scmp.eq.s32.totalorder %s22, 0
      %p195 = por %p193, %p194
      %p196 = scmp.ne.s32.totalorder %s182, %s183
      %p197 = scmp.eq.s32.totalorder %s23, 1
      %p198 = por %p196, %p197
      %p200 = scmp.ne.s32.totalorder %s183, %s199
      %p201 = scmp.eq.s32.totalorder %s23, 0
      %p202 = por %p200, %p201
      %p203 = scmp.le.s32.totalorder 1, %s17
      %p204 = scmp.lt.s32.totalorder %s17, 3
      %p205 = pnand %p203, %p204
      %p206 = pneg %p205
      // Predicated region
      $region9: #{tpu_custom_call.1} parent=5 // pred_check
        _
      $region10: #{tpu_custom_call.1} parent=5 // pred_check_branch
        %208 = sbr.rel (%p205) target = $region12
      $region11: #{tpu_custom_call.1} parent=5 // pred_region
        %s209 = ssub.s32 %s17, 1
        // Predicated region
        $region13: #{tpu_custom_call.1} parent=11 // pred_check
          %p210 = pneg %p64
        $region14: #{tpu_custom_call.1} parent=11 // pred_check_branch
          %212 = sbr.rel (%p210) target = $region16
        $region15: #{tpu_custom_call.1} parent=11 // pred_region
          _
        $region16: #{tpu_custom_call.1} parent=11 // pred_fallthru
          _
        // Predicated region
        $region17: #{tpu_custom_call.1} parent=11 // pred_check
          %p213 = pneg %p85
        $region18: #{tpu_custom_call.1} parent=11 // pred_check_branch
          %215 = sbr.rel (%p213) target = $region20
        $region19: #{tpu_custom_call.1} parent=11 // pred_region
          _
        $region20: #{tpu_custom_call.1} parent=11 // pred_fallthru
          _
        // Predicated region
        $region21: #{tpu_custom_call.1} parent=11 // pred_check
          %p216 = pneg %p106
        $region22: #{tpu_custom_call.1} parent=11 // pred_check_branch
          %218 = sbr.rel (%p216) target = $region24
        $region23: #{tpu_custom_call.1} parent=11 // pred_region
          %220 = vsyncadd [#allocation4], 0
          %s221 = sshll.u32 %s3, 4
          %s222 = int_to_ptr.hbm [resolvable:$true] %s221
          %s223 = sshll.u32 [#allocation3], 4
          %s224 = int_to_ptr.vmem [resolvable:$true] %s223
          %229 = dma.hbm_to_vmem [thread:$0]  %s222, 14336, %s224, [#allocation4], 256, 256, 16
        $region24: #{tpu_custom_call.1} parent=11 // pred_fallthru
          _
        // Predicated region
        $region25: #{tpu_custom_call.1} parent=11 // pred_check
          %p230 = pneg %p127
        $region26: #{tpu_custom_call.1} parent=11 // pred_check_branch
          %232 = sbr.rel (%p230) target = $region28
        $region27: #{tpu_custom_call.1} parent=11 // pred_region
          _
        $region28: #{tpu_custom_call.1} parent=11 // pred_fallthru
          _
        // Predicated region
        $region29: #{tpu_custom_call.1} parent=11 // pred_check
          %p233 = pneg %p148
        $region30: #{tpu_custom_call.1} parent=11 // pred_check_branch
          %235 = sbr.rel (%p233) target = $region32
        $region31: #{tpu_custom_call.1} parent=11 // pred_region
          _
        $region32: #{tpu_custom_call.1} parent=11 // pred_fallthru
          _
        // Predicated region
        $region33: #{tpu_custom_call.1} parent=11 // pred_check
          %p236 = pneg %p169
        $region34: #{tpu_custom_call.1} parent=11 // pred_check_branch
          %238 = sbr.rel (%p236) target = $region36
        $region35: #{tpu_custom_call.1} parent=11 // pred_region
          _
        $region36: #{tpu_custom_call.1} parent=11 // pred_fallthru
          _
      $region12: #{tpu_custom_call.1} parent=5 // pred_fallthru
        _
      %p239 = scmp.lt.s32.totalorder %s17, 2
      // Predicated region
      $region37: #{tpu_custom_call.1} parent=5 // pred_check
        %p240 = pneg %p239
      $region38: #{tpu_custom_call.1} parent=5 // pred_check_branch
        %242 = sbr.rel (%p240) target = $region40
      $region39: #{tpu_custom_call.1} parent=5 // pred_region
        // Predicated region
        $region41: #{tpu_custom_call.1} parent=39 // pred_check
          %p243 = pneg %p37
        $region42: #{tpu_custom_call.1} parent=39 // pred_check_branch
          %245 = sbr.rel (%p243) target = $region44
        $region43: #{tpu_custom_call.1} parent=39 // pred_region
          %s246 = sand.u32 %s27, 1
          %s247 = sand.u32 %s27, 1
          %s248 = smul.addr %s247, 64
          %s249 = scalar_lea.vmem [#allocation2], %s248
          %s250 = smul.u32 4, %s17
          %s251 = smul.addr %s250, 8
          %s252 = scalar_lea.vmem %s0, %s251
          // Predicated region
          $region45: #{tpu_custom_call.1} parent=43 // pred_check
            _
          $region46: #{tpu_custom_call.1} parent=43 // pred_check_branch
            %254 = sbr.rel (0) target = $region48
          $region47: #{tpu_custom_call.1} parent=43 // pred_region
            // Predicated region
            $region49: #{tpu_custom_call.1} parent=47 // pred_check
              _
            $region50: #{tpu_custom_call.1} parent=47 // pred_check_branch
              %256 = sbr.rel (0) target = $region52
            $region51: #{tpu_custom_call.1} parent=47 // pred_region
              loop: start=0, step=1, limit=1
              $region53: #{tpu_custom_call.1} parent=51 // loop_pre_header
                _
              $region54: #{tpu_custom_call.1} parent=51 // loop_header
                %s258 = sphi 0, %s262
                %p259 = scmp.ge.s32.totalorder %s258, 1
                %s263 = sphi %s252, %s252
                %s264 = sphi %s249, %s249
              $region55: #{tpu_custom_call.1} parent=51 // loop_header_branch
                %261 = sbr.rel (%p259) target = $region59
              $region56: #{tpu_custom_call.1} parent=51 // loop_body
                %v265 = vld [vmem:[%s263] sm:$0xff]
                %266 = vst [vmem:[%s264] sm:$0xff] %v265
                %v267 = vld [vmem:[%s263 + $0x8] sm:$0xff]
                %268 = vst [vmem:[%s264 + $0x8] sm:$0xff] %v267
                %v269 = vld [vmem:[%s263 + $0x10] sm:$0xff]
                %270 = vst [vmem:[%s264 + $0x10] sm:$0xff] %v269
                %v271 = vld [vmem:[%s263 + $0x18] sm:$0xff]
                %272 = vst [vmem:[%s264 + $0x18] sm:$0xff] %v271
                %v273 = vld [vmem:[%s263 + $0x40] sm:$0xff]
                %274 = vst [vmem:[%s264 + $0x20] sm:$0xff] %v273
                %v275 = vld [vmem:[%s263 + $0x48] sm:$0xff]
                %276 = vst [vmem:[%s264 + $0x28] sm:$0xff] %v275
                %v277 = vld [vmem:[%s263 + $0x50] sm:$0xff]
                %278 = vst [vmem:[%s264 + $0x30] sm:$0xff] %v277
                %v279 = vld [vmem:[%s263 + $0x58] sm:$0xff]
                %280 = vst [vmem:[%s264 + $0x38] sm:$0xff] %v279
              $region57: #{tpu_custom_call.1} parent=51 // loop_footer
                %s262 = sadd.s32 1, %s258
              $region58: #{tpu_custom_call.1} parent=51 // loop_footer_branch
                %257 = sbr.rel target = $region54
              $region59: #{tpu_custom_call.1} parent=51 // loop_exit
                _
            $region52: #{tpu_custom_call.1} parent=47 // pred_fallthru
              _
            // Predicated region
            $region60: #{tpu_custom_call.1} parent=47 // pred_check
              _
            $region61: #{tpu_custom_call.1} parent=47 // pred_check_branch
              %282 = sbr.rel target = $region63
            $region62: #{tpu_custom_call.1} parent=47 // pred_region
              _
            $region63: #{tpu_custom_call.1} parent=47 // pred_fallthru
              _
          $region48: #{tpu_custom_call.1} parent=43 // pred_fallthru
            _
          %283 = vnop
        $region44: #{tpu_custom_call.1} parent=39 // pred_fallthru
          _
      $region40: #{tpu_custom_call.1} parent=5 // pred_fallthru
        _
      %p284 = scmp.le.s32.totalorder 1, %s17
      %p285 = scmp.lt.s32.totalorder %s17, 3
      %p286 = pnand %p284, %p285
      %p287 = pneg %p286
      // Predicated region
      $region64: #{tpu_custom_call.1} parent=5 // pred_check
        _
      $region65: #{tpu_custom_call.1} parent=5 // pred_check_branch
        %289 = sbr.rel (%p286) target = $region67
      $region66: #{tpu_custom_call.1} parent=5 // pred_region
        %s290 = ssub.s32 %s17, 1
        %s291 = sand.u32 %s30, 1
        %s292 = sand.u32 %s30, 1
        %s293 = smul.addr %s292, 64
        %s294 = scalar_lea.vmem [#allocation2], %s293
        // Predicated region
        $region68: #{tpu_custom_call.1} parent=66 // pred_check
          %p295 = pneg %p43
        $region69: #{tpu_custom_call.1} parent=66 // pred_check_branch
          %297 = sbr.rel (%p295) target = $region71
        $region70: #{tpu_custom_call.1} parent=66 // pred_region
          _
        $region71: #{tpu_custom_call.1} parent=66 // pred_fallthru
          _
        // Predicated region
        $region72: #{tpu_custom_call.1} parent=66 // pred_check
          %p298 = pneg %p106
        $region73: #{tpu_custom_call.1} parent=66 // pred_check_branch
          %300 = sbr.rel (%p298) target = $region75
        $region74: #{tpu_custom_call.1} parent=66 // pred_region
          %302 = dma.done [#allocation4], 14336
        $region75: #{tpu_custom_call.1} parent=66 // pred_fallthru
          _
        %s303 = sand.u32 %s30, 1
        %s304 = sand.u32 %s30, 1
        %s305 = smul.addr %s304, 64
        %s306 = scalar_lea.vmem [#allocation2], %s305
        %p307 = pneg %p43
        %p308 = pneg %p40
        %p309 = pneg %p64
        %p310 = pneg %p61
        %p311 = pneg %p85
        %p312 = pneg %p82
        %p313 = pneg %p106
        %p314 = pneg %p103
        %p315 = pneg %p127
        %p316 = pneg %p124
        %p317 = pneg %p148
        %p318 = pneg %p145
        %p319 = pneg %p169
        %p320 = pneg %p166
        %p321 = pneg %p195
        %p322 = pneg %p192
        %s323 = sand.u32 %s182, 1
        %s324 = scalar_lea.sflag [#allocation5], %s323
        %s325 = sand.u32 %s182, 1
        %s326 = smul.addr %s325, 32
        %s327 = scalar_lea.vmem [#allocation6], %s326
        %s328 = smul.u32 4, %s22
        %s329 = smul.u32 4, %s22
        %v330 = vld [vmem:[%s294] sm:$0xff]
        %v331 = vld [vmem:[%s294 + $0x8] sm:$0xff]
        %v332 = vld [vmem:[%s294 + $0x20] sm:$0x1]
        %v333 = vld [vmem:[%s294 + $0x28] sm:$0x1]
        %v334 = vld [vmem:[%s1] sm:$0xff]
        %v335 = vld [vmem:[%s1 + $0x8] sm:$0xff]
        %v336 = vld [vmem:[%s1 + $0x10] sm:$0x3f]
        %v337 = vld [vmem:[%s1 + $0x18] sm:$0x3f]
        %v338 = vperm.slane %v330, 0
        %v339 = vperm.slane %v331, 0
        %v340 = vmul.f32 %v334, %v338
        %v341 = vmul.f32 %v335, %v339
        %v342 = vmul.f32 %v336, %v338
        %v343 = vmul.f32 %v337, %v339
        %v344 = vld [vmem:[%s2] sm:$0xff]
        %v345 = vld [vmem:[%s2 + $0x8] sm:$0xff]
        %v346 = vld [vmem:[%s2 + $0x10] sm:$0x3f]
        %v347 = vld [vmem:[%s2 + $0x18] sm:$0x3f]
        %v348 = vadd.f32 %v340, %v344
        %v349 = vadd.f32 %v341, %v345
        %v350 = vadd.f32 %v342, %v346
        %v351 = vadd.f32 %v343, %v347
        %s352 = scalar_lea.vmem %s1, 32
        %v353 = vld [vmem:[%s352] sm:$0xff]
        %v354 = vld [vmem:[%s352 + $0x8] sm:$0xff]
        %v355 = vld [vmem:[%s352 + $0x10] sm:$0x3f]
        %v356 = vld [vmem:[%s352 + $0x18] sm:$0x3f]
        %v357 = vperm.slane %v330, 1
        %v358 = vperm.slane %v331, 1
        %v359 = vmul.f32 %v353, %v357
        %v360 = vmul.f32 %v354, %v358
        %v361 = vmul.f32 %v355, %v357
        %v362 = vmul.f32 %v356, %v358
        %v363 = vadd.f32 %v348, %v359
        %v364 = vadd.f32 %v349, %v360
        %v365 = vadd.f32 %v350, %v361
        %v366 = vadd.f32 %v351, %v362
        %s367 = scalar_lea.vmem %s1, 64
        %v368 = vld [vmem:[%s367] sm:$0xff]
        %v369 = vld [vmem:[%s367 + $0x8] sm:$0xff]
        %v370 = vld [vmem:[%s367 + $0x10] sm:$0x3f]
        %v371 = vld [vmem:[%s367 + $0x18] sm:$0x3f]
        %v372 = vperm.slane %v330, 2
        %v373 = vperm.slane %v331, 2
        %v374 = vmul.f32 %v368, %v372
        %v375 = vmul.f32 %v369, %v373
        %v376 = vmul.f32 %v370, %v372
        %v377 = vmul.f32 %v371, %v373
        %v378 = vadd.f32 %v363, %v374
        %v379 = vadd.f32 %v364, %v375
        %v380 = vadd.f32 %v365, %v376
        %v381 = vadd.f32 %v366, %v377
        %s382 = scalar_lea.vmem %s1, 96
        %v383 = vld [vmem:[%s382] sm:$0xff]
        %v384 = vld [vmem:[%s382 + $0x8] sm:$0xff]
        %v385 = vld [vmem:[%s382 + $0x10] sm:$0x3f]
        %v386 = vld [vmem:[%s382 + $0x18] sm:$0x3f]
        %v387 = vperm.slane %v330, 3
        %v388 = vperm.slane %v331, 3
        %v389 = vmul.f32 %v383, %v387
        %v390 = vmul.f32 %v384, %v388
        %v391 = vmul.f32 %v385, %v387
        %v392 = vmul.f32 %v386, %v388
        %v393 = vadd.f32 %v378, %v389
        %v394 = vadd.f32 %v379, %v390
        %v395 = vadd.f32 %v380, %v391
        %v396 = vadd.f32 %v381, %v392
        %s397 = scalar_lea.vmem %s1, 128
        %v398 = vld [vmem:[%s397] sm:$0xff]
        %v399 = vld [vmem:[%s397 + $0x8] sm:$0xff]
        %v400 = vld [vmem:[%s397 + $0x10] sm:$0x3f]
        %v401 = vld [vmem:[%s397 + $0x18] sm:$0x3f]
        %v402 = vperm.slane %v330, 4
        %v403 = vperm.slane %v331, 4
        %v404 = vmul.f32 %v398, %v402
        %v405 = vmul.f32 %v399, %v403
        %v406 = vmul.f32 %v400, %v402
        %v407 = vmul.f32 %v401, %v403
        %v408 = vadd.f32 %v393, %v404
        %v409 = vadd.f32 %v394, %v405
        %v410 = vadd.f32 %v395, %v406
        %v411 = vadd.f32 %v396, %v407
        %s412 = scalar_lea.vmem %s1, 160
        %v413 = vld [vmem:[%s412] sm:$0xff]
        %v414 = vld [vmem:[%s412 + $0x8] sm:$0xff]
        %v415 = vld [vmem:[%s412 + $0x10] sm:$0x3f]
        %v416 = vld [vmem:[%s412 + $0x18] sm:$0x3f]
        %v417 = vperm.slane %v330, 5
        %v418 = vperm.slane %v331, 5
        %v419 = vmul.f32 %v413, %v417
        %v420 = vmul.f32 %v414, %v418
        %v421 = vmul.f32 %v415, %v417
        %v422 = vmul.f32 %v416, %v418
        %v423 = vadd.f32 %v408, %v419
        %v424 = vadd.f32 %v409, %v420
        %v425 = vadd.f32 %v410, %v421
        %v426 = vadd.f32 %v411, %v422
        %s427 = scalar_lea.vmem %s1, 192
        %v428 = vld [vmem:[%s427] sm:$0xff]
        %v429 = vld [vmem:[%s427 + $0x8] sm:$0xff]
        %v430 = vld [vmem:[%s427 + $0x10] sm:$0x3f]
        %v431 = vld [vmem:[%s427 + $0x18] sm:$0x3f]
        %v432 = vperm.slane %v330, 6
        %v433 = vperm.slane %v331, 6
        %v434 = vmul.f32 %v428, %v432
        %v435 = vmul.f32 %v429, %v433
        %v436 = vmul.f32 %v430, %v432
        %v437 = vmul.f32 %v431, %v433
        %v438 = vadd.f32 %v423, %v434
        %v439 = vadd.f32 %v424, %v435
        %v440 = vadd.f32 %v425, %v436
        %v441 = vadd.f32 %v426, %v437
        %s442 = scalar_lea.vmem %s1, 224
        %v443 = vld [vmem:[%s442] sm:$0xff]
        %v444 = vld [vmem:[%s442 + $0x8] sm:$0xff]
        %v445 = vld [vmem:[%s442 + $0x10] sm:$0x3f]
        %v446 = vld [vmem:[%s442 + $0x18] sm:$0x3f]
        %v447 = vperm.slane %v330, 7
        %v448 = vperm.slane %v331, 7
        %v449 = vmul.f32 %v443, %v447
        %v450 = vmul.f32 %v444, %v448
        %v451 = vmul.f32 %v445, %v447
        %v452 = vmul.f32 %v446, %v448
        %v453 = vadd.f32 %v438, %v449
        %v454 = vadd.f32 %v439, %v450
        %v455 = vadd.f32 %v440, %v451
        %v456 = vadd.f32 %v441, %v452
        %s457 = scalar_lea.vmem %s1, 256
        %v458 = vld [vmem:[%s457] sm:$0xff]
        %v459 = vld [vmem:[%s457 + $0x8] sm:$0xff]
        %v460 = vld [vmem:[%s457 + $0x10] sm:$0x3f]
        %v461 = vld [vmem:[%s457 + $0x18] sm:$0x3f]
        %v462 = vperm.slane %v332, 0
        %v463 = vperm.slane %v333, 0
        %v464 = vmul.f32 %v458, %v462
        %v465 = vmul.f32 %v459, %v463
        %v466 = vmul.f32 %v460, %v462
        %v467 = vmul.f32 %v461, %v463
        %v468 = vadd.f32 %v453, %v464
        %v469 = vadd.f32 %v454, %v465
        %v470 = vadd.f32 %v455, %v466
        %v471 = vadd.f32 %v456, %v467
        %v472 = vmax.f32 %v468, 0.0
        %v473 = vmax.f32 %v469, 0.0
        %v474 = vmax.f32 %v470, 0.0
        %v475 = vmax.f32 %v471, 0.0
        %v476 = vld [vmem:[#allocation3] sm:$0xff]
        %v477 = vld [vmem:[#allocation3 + $0x8] sm:$0xff]
        %v478 = vld [vmem:[#allocation3 + $0x10] sm:$0xff]
        %v479 = vld [vmem:[#allocation3 + $0x18] sm:$0xff]
        %v480 = vld [vmem:[#allocation3 + $0x20] sm:$0xff]
        %v481 = vld [vmem:[#allocation3 + $0x28] sm:$0xff]
        %v482 = vld [vmem:[#allocation3 + $0x30] sm:$0xf]
        %v483 = vld [vmem:[#allocation3 + $0x38] sm:$0xf]
        %v484 = vperm.slane %v472, 0
        %v485 = vperm.slane %v473, 0
        %v486 = vmul.f32 %v476, %v484
        %v487 = vmul.f32 %v477, %v485
        %v488 = vmul.f32 %v478, %v484
        %v489 = vmul.f32 %v479, %v485
        %v490 = vmul.f32 %v480, %v484
        %v491 = vmul.f32 %v481, %v485
        %v492 = vmul.f32 %v482, %v484
        %v493 = vmul.f32 %v483, %v485
        %v494 = vld [vmem:[%s4] sm:$0xff]
        %v495 = vld [vmem:[%s4 + $0x8] sm:$0xff]
        %v496 = vld [vmem:[%s4 + $0x10] sm:$0xff]
        %v497 = vld [vmem:[%s4 + $0x18] sm:$0xff]
        %v498 = vld [vmem:[%s4 + $0x20] sm:$0xff]
        %v499 = vld [vmem:[%s4 + $0x28] sm:$0xff]
        %v500 = vld [vmem:[%s4 + $0x30] sm:$0xf]
        %v501 = vld [vmem:[%s4 + $0x38] sm:$0xf]
        %v502 = vadd.f32 %v486, %v494
        %v503 = vadd.f32 %v487, %v495
        %v504 = vadd.f32 %v488, %v496
        %v505 = vadd.f32 %v489, %v497
        %v506 = vadd.f32 %v490, %v498
        %v507 = vadd.f32 %v491, %v499
        %v508 = vadd.f32 %v492, %v500
        %v509 = vadd.f32 %v493, %v501
        %s510 = scalar_lea.vmem [#allocation3], 64
        %v511 = vld [vmem:[%s510] sm:$0xff]
        %v512 = vld [vmem:[%s510 + $0x8] sm:$0xff]
        %v513 = vld [vmem:[%s510 + $0x10] sm:$0xff]
        %v514 = vld [vmem:[%s510 + $0x18] sm:$0xff]
        %v515 = vld [vmem:[%s510 + $0x20] sm:$0xff]
        %v516 = vld [vmem:[%s510 + $0x28] sm:$0xff]
        %v517 = vld [vmem:[%s510 + $0x30] sm:$0xf]
        %v518 = vld [vmem:[%s510 + $0x38] sm:$0xf]
        %v519 = vperm.slane %v472, 1
        %v520 = vperm.slane %v473, 1
        %v521 = vmul.f32 %v511, %v519
        %v522 = vmul.f32 %v512, %v520
        %v523 = vmul.f32 %v513, %v519
        %v524 = vmul.f32 %v514, %v520
        %v525 = vmul.f32 %v515, %v519
        %v526 = vmul.f32 %v516, %v520
        %v527 = vmul.f32 %v517, %v519
        %v528 = vmul.f32 %v518, %v520
        %v529 = vadd.f32 %v502, %v521
        %v530 = vadd.f32 %v503, %v522
        %v531 = vadd.f32 %v504, %v523
        %v532 = vadd.f32 %v505, %v524
        %v533 = vadd.f32 %v506, %v525
        %v534 = vadd.f32 %v507, %v526
        %v535 = vadd.f32 %v508, %v527
        %v536 = vadd.f32 %v509, %v528
        %s537 = scalar_lea.vmem [#allocation3], 128
        %v538 = vld [vmem:[%s537] sm:$0xff]
        %v539 = vld [vmem:[%s537 + $0x8] sm:$0xff]
        %v540 = vld [vmem:[%s537 + $0x10] sm:$0xff]
        %v541 = vld [vmem:[%s537 + $0x18] sm:$0xff]
        %v542 = vld [vmem:[%s537 + $0x20] sm:$0xff]
        %v543 = vld [vmem:[%s537 + $0x28] sm:$0xff]
        %v544 = vld [vmem:[%s537 + $0x30] sm:$0xf]
        %v545 = vld [vmem:[%s537 + $0x38] sm:$0xf]
        %v546 = vperm.slane %v472, 2
        %v547 = vperm.slane %v473, 2
        %v548 = vmul.f32 %v538, %v546
        %v549 = vmul.f32 %v539, %v547
        %v550 = vmul.f32 %v540, %v546
        %v551 = vmul.f32 %v541, %v547
        %v552 = vmul.f32 %v542, %v546
        %v553 = vmul.f32 %v543, %v547
        %v554 = vmul.f32 %v544, %v546
        %v555 = vmul.f32 %v545, %v547
        %v556 = vadd.f32 %v529, %v548
        %v557 = vadd.f32 %v530, %v549
        %v558 = vadd.f32 %v531, %v550
        %v559 = vadd.f32 %v532, %v551
        %v560 = vadd.f32 %v533, %v552
        %v561 = vadd.f32 %v534, %v553
        %v562 = vadd.f32 %v535, %v554
        %v563 = vadd.f32 %v536, %v555
        %s564 = scalar_lea.vmem [#allocation3], 192
        %v565 = vld [vmem:[%s564] sm:$0xff]
        %v566 = vld [vmem:[%s564 + $0x8] sm:$0xff]
        %v567 = vld [vmem:[%s564 + $0x10] sm:$0xff]
        %v568 = vld [vmem:[%s564 + $0x18] sm:$0xff]
        %v569 = vld [vmem:[%s564 + $0x20] sm:$0xff]
        %v570 = vld [vmem:[%s564 + $0x28] sm:$0xff]
        %v571 = vld [vmem:[%s564 + $0x30] sm:$0xf]
        %v572 = vld [vmem:[%s564 + $0x38] sm:$0xf]
        %v573 = vperm.slane %v472, 3
        %v574 = vperm.slane %v473, 3
        %v575 = vmul.f32 %v565, %v573
        %v576 = vmul.f32 %v566, %v574
        %v577 = vmul.f32 %v567, %v573
        %v578 = vmul.f32 %v568, %v574
        %v579 = vmul.f32 %v569, %v573
        %v580 = vmul.f32 %v570, %v574
        %v581 = vmul.f32 %v571, %v573
        %v582 = vmul.f32 %v572, %v574
        %v583 = vadd.f32 %v556, %v575
        %v584 = vadd.f32 %v557, %v576
        %v585 = vadd.f32 %v558, %v577
        %v586 = vadd.f32 %v559, %v578
        %v587 = vadd.f32 %v560, %v579
        %v588 = vadd.f32 %v561, %v580
        %v589 = vadd.f32 %v562, %v581
        %v590 = vadd.f32 %v563, %v582
        %s591 = scalar_lea.vmem [#allocation3], 256
        %v592 = vld [vmem:[%s591] sm:$0xff]
        %v593 = vld [vmem:[%s591 + $0x8] sm:$0xff]
        %v594 = vld [vmem:[%s591 + $0x10] sm:$0xff]
        %v595 = vld [vmem:[%s591 + $0x18] sm:$0xff]
        %v596 = vld [vmem:[%s591 + $0x20] sm:$0xff]
        %v597 = vld [vmem:[%s591 + $0x28] sm:$0xff]
        %v598 = vld [vmem:[%s591 + $0x30] sm:$0xf]
        %v599 = vld [vmem:[%s591 + $0x38] sm:$0xf]
        %v600 = vperm.slane %v472, 4
        %v601 = vperm.slane %v473, 4
        %v602 = vmul.f32 %v592, %v600
        %v603 = vmul.f32 %v593, %v601
        %v604 = vmul.f32 %v594, %v600
        %v605 = vmul.f32 %v595, %v601
        %v606 = vmul.f32 %v596, %v600
        %v607 = vmul.f32 %v597, %v601
        %v608 = vmul.f32 %v598, %v600
        %v609 = vmul.f32 %v599, %v601
        %v610 = vadd.f32 %v583, %v602
        %v611 = vadd.f32 %v584, %v603
        %v612 = vadd.f32 %v585, %v604
        %v613 = vadd.f32 %v586, %v605
        %v614 = vadd.f32 %v587, %v606
        %v615 = vadd.f32 %v588, %v607
        %v616 = vadd.f32 %v589, %v608
        %v617 = vadd.f32 %v590, %v609
        %s618 = scalar_lea.vmem [#allocation3], 320
        %v619 = vld [vmem:[%s618] sm:$0xff]
        %v620 = vld [vmem:[%s618 + $0x8] sm:$0xff]
        %v621 = vld [vmem:[%s618 + $0x10] sm:$0xff]
        %v622 = vld [vmem:[%s618 + $0x18] sm:$0xff]
        %v623 = vld [vmem:[%s618 + $0x20] sm:$0xff]
        %v624 = vld [vmem:[%s618 + $0x28] sm:$0xff]
        %v625 = vld [vmem:[%s618 + $0x30] sm:$0xf]
        %v626 = vld [vmem:[%s618 + $0x38] sm:$0xf]
        %v627 = vperm.slane %v472, 5
        %v628 = vperm.slane %v473, 5
        %v629 = vmul.f32 %v619, %v627
        %v630 = vmul.f32 %v620, %v628
        %v631 = vmul.f32 %v621, %v627
        %v632 = vmul.f32 %v622, %v628
        %v633 = vmul.f32 %v623, %v627
        %v634 = vmul.f32 %v624, %v628
        %v635 = vmul.f32 %v625, %v627
        %v636 = vmul.f32 %v626, %v628
        %v637 = vadd.f32 %v610, %v629
        %v638 = vadd.f32 %v611, %v630
        %v639 = vadd.f32 %v612, %v631
        %v640 = vadd.f32 %v613, %v632
        %v641 = vadd.f32 %v614, %v633
        %v642 = vadd.f32 %v615, %v634
        %v643 = vadd.f32 %v616, %v635
        %v644 = vadd.f32 %v617, %v636
        %s645 = scalar_lea.vmem [#allocation3], 384
        %v646 = vld [vmem:[%s645] sm:$0xff]
        %v647 = vld [vmem:[%s645 + $0x8] sm:$0xff]
        %v648 = vld [vmem:[%s645 + $0x10] sm:$0xff]
        %v649 = vld [vmem:[%s645 + $0x18] sm:$0xff]
        %v650 = vld [vmem:[%s645 + $0x20] sm:$0xff]
        %v651 = vld [vmem:[%s645 + $0x28] sm:$0xff]
        %v652 = vld [vmem:[%s645 + $0x30] sm:$0xf]
        %v653 = vld [vmem:[%s645 + $0x38] sm:$0xf]
        %v654 = vperm.slane %v472, 6
        %v655 = vperm.slane %v473, 6
        %v656 = vmul.f32 %v646, %v654
        %v657 = vmul.f32 %v647, %v655
        %v658 = vmul.f32 %v648, %v654
        %v659 = vmul.f32 %v649, %v655
        %v660 = vmul.f32 %v650, %v654
        %v661 = vmul.f32 %v651, %v655
        %v662 = vmul.f32 %v652, %v654
        %v663 = vmul.f32 %v653, %v655
        %v664 = vadd.f32 %v637, %v656
        %v665 = vadd.f32 %v638, %v657
        %v666 = vadd.f32 %v639, %v658
        %v667 = vadd.f32 %v640, %v659
        %v668 = vadd.f32 %v641, %v660
        %v669 = vadd.f32 %v642, %v661
        %v670 = vadd.f32 %v643, %v662
        %v671 = vadd.f32 %v644, %v663
        %s672 = scalar_lea.vmem [#allocation3], 448
        %v673 = vld [vmem:[%s672] sm:$0xff]
        %v674 = vld [vmem:[%s672 + $0x8] sm:$0xff]
        %v675 = vld [vmem:[%s672 + $0x10] sm:$0xff]
        %v676 = vld [vmem:[%s672 + $0x18] sm:$0xff]
        %v677 = vld [vmem:[%s672 + $0x20] sm:$0xff]
        %v678 = vld [vmem:[%s672 + $0x28] sm:$0xff]
        %v679 = vld [vmem:[%s672 + $0x30] sm:$0xf]
        %v680 = vld [vmem:[%s672 + $0x38] sm:$0xf]
        %v681 = vperm.slane %v472, 7
        %v682 = vperm.slane %v473, 7
        %v683 = vmul.f32 %v673, %v681
        %v684 = vmul.f32 %v674, %v682
        %v685 = vmul.f32 %v675, %v681
        %v686 = vmul.f32 %v676, %v682
        %v687 = vmul.f32 %v677, %v681
        %v688 = vmul.f32 %v678, %v682
        %v689 = vmul.f32 %v679, %v681
        %v690 = vmul.f32 %v680, %v682
        %v691 = vadd.f32 %v664, %v683
        %v692 = vadd.f32 %v665, %v684
        %v693 = vadd.f32 %v666, %v685
        %v694 = vadd.f32 %v667, %v686
        %v695 = vadd.f32 %v668, %v687
        %v696 = vadd.f32 %v669, %v688
        %v697 = vadd.f32 %v670, %v689
        %v698 = vadd.f32 %v671, %v690
        %s699 = scalar_lea.vmem [#allocation3], 512
        %v700 = vld [vmem:[%s699] sm:$0xff]
        %v701 = vld [vmem:[%s699 + $0x8] sm:$0xff]
        %v702 = vld [vmem:[%s699 + $0x10] sm:$0xff]
        %v703 = vld [vmem:[%s699 + $0x18] sm:$0xff]
        %v704 = vld [vmem:[%s699 + $0x20] sm:$0xff]
        %v705 = vld [vmem:[%s699 + $0x28] sm:$0xff]
        %v706 = vld [vmem:[%s699 + $0x30] sm:$0xf]
        %v707 = vld [vmem:[%s699 + $0x38] sm:$0xf]
        %v708 = vperm.slane %v474, 0
        %v709 = vperm.slane %v475, 0
        %v710 = vmul.f32 %v700, %v708
        %v711 = vmul.f32 %v701, %v709
        %v712 = vmul.f32 %v702, %v708
        %v713 = vmul.f32 %v703, %v709
        %v714 = vmul.f32 %v704, %v708
        %v715 = vmul.f32 %v705, %v709
        %v716 = vmul.f32 %v706, %v708
        %v717 = vmul.f32 %v707, %v709
        %v718 = vadd.f32 %v691, %v710
        %v719 = vadd.f32 %v692, %v711
        %v720 = vadd.f32 %v693, %v712
        %v721 = vadd.f32 %v694, %v713
        %v722 = vadd.f32 %v695, %v714
        %v723 = vadd.f32 %v696, %v715
        %v724 = vadd.f32 %v697, %v716
        %v725 = vadd.f32 %v698, %v717
        %s726 = scalar_lea.vmem [#allocation3], 576
        %v727 = vld [vmem:[%s726] sm:$0xff]
        %v728 = vld [vmem:[%s726 + $0x8] sm:$0xff]
        %v729 = vld [vmem:[%s726 + $0x10] sm:$0xff]
        %v730 = vld [vmem:[%s726 + $0x18] sm:$0xff]
        %v731 = vld [vmem:[%s726 + $0x20] sm:$0xff]
        %v732 = vld [vmem:[%s726 + $0x28] sm:$0xff]
        %v733 = vld [vmem:[%s726 + $0x30] sm:$0xf]
        %v734 = vld [vmem:[%s726 + $0x38] sm:$0xf]
        %v735 = vperm.slane %v474, 1
        %v736 = vperm.slane %v475, 1
        %v737 = vmul.f32 %v727, %v735
        %v738 = vmul.f32 %v728, %v736
        %v739 = vmul.f32 %v729, %v735
        %v740 = vmul.f32 %v730, %v736
        %v741 = vmul.f32 %v731, %v735
        %v742 = vmul.f32 %v732, %v736
        %v743 = vmul.f32 %v733, %v735
        %v744 = vmul.f32 %v734, %v736
        %v745 = vadd.f32 %v718, %v737
        %v746 = vadd.f32 %v719, %v738
        %v747 = vadd.f32 %v720, %v739
        %v748 = vadd.f32 %v721, %v740
        %v749 = vadd.f32 %v722, %v741
        %v750 = vadd.f32 %v723, %v742
        %v751 = vadd.f32 %v724, %v743
        %v752 = vadd.f32 %v725, %v744
        %s753 = scalar_lea.vmem [#allocation3], 640
        %v754 = vld [vmem:[%s753] sm:$0xff]
        %v755 = vld [vmem:[%s753 + $0x8] sm:$0xff]
        %v756 = vld [vmem:[%s753 + $0x10] sm:$0xff]
        %v757 = vld [vmem:[%s753 + $0x18] sm:$0xff]
        %v758 = vld [vmem:[%s753 + $0x20] sm:$0xff]
        %v759 = vld [vmem:[%s753 + $0x28] sm:$0xff]
        %v760 = vld [vmem:[%s753 + $0x30] sm:$0xf]
        %v761 = vld [vmem:[%s753 + $0x38] sm:$0xf]
        %v762 = vperm.slane %v474, 2
        %v763 = vperm.slane %v475, 2
        %v764 = vmul.f32 %v754, %v762
        %v765 = vmul.f32 %v755, %v763
        %v766 = vmul.f32 %v756, %v762
        %v767 = vmul.f32 %v757, %v763
        %v768 = vmul.f32 %v758, %v762
        %v769 = vmul.f32 %v759, %v763
        %v770 = vmul.f32 %v760, %v762
        %v771 = vmul.f32 %v761, %v763
        %v772 = vadd.f32 %v745, %v764
        %v773 = vadd.f32 %v746, %v765
        %v774 = vadd.f32 %v747, %v766
        %v775 = vadd.f32 %v748, %v767
        %v776 = vadd.f32 %v749, %v768
        %v777 = vadd.f32 %v750, %v769
        %v778 = vadd.f32 %v751, %v770
        %v779 = vadd.f32 %v752, %v771
        %s780 = scalar_lea.vmem [#allocation3], 704
        %v781 = vld [vmem:[%s780] sm:$0xff]
        %v782 = vld [vmem:[%s780 + $0x8] sm:$0xff]
        %v783 = vld [vmem:[%s780 + $0x10] sm:$0xff]
        %v784 = vld [vmem:[%s780 + $0x18] sm:$0xff]
        %v785 = vld [vmem:[%s780 + $0x20] sm:$0xff]
        %v786 = vld [vmem:[%s780 + $0x28] sm:$0xff]
        %v787 = vld [vmem:[%s780 + $0x30] sm:$0xf]
        %v788 = vld [vmem:[%s780 + $0x38] sm:$0xf]
        %v789 = vperm.slane %v474, 3
        %v790 = vperm.slane %v475, 3
        %v791 = vmul.f32 %v781, %v789
        %v792 = vmul.f32 %v782, %v790
        %v793 = vmul.f32 %v783, %v789
        %v794 = vmul.f32 %v784, %v790
        %v795 = vmul.f32 %v785, %v789
        %v796 = vmul.f32 %v786, %v790
        %v797 = vmul.f32 %v787, %v789
        %v798 = vmul.f32 %v788, %v790
        %v799 = vadd.f32 %v772, %v791
        %v800 = vadd.f32 %v773, %v792
        %v801 = vadd.f32 %v774, %v793
        %v802 = vadd.f32 %v775, %v794
        %v803 = vadd.f32 %v776, %v795
        %v804 = vadd.f32 %v777, %v796
        %v805 = vadd.f32 %v778, %v797
        %v806 = vadd.f32 %v779, %v798
        %s807 = scalar_lea.vmem [#allocation3], 768
        %v808 = vld [vmem:[%s807] sm:$0xff]
        %v809 = vld [vmem:[%s807 + $0x8] sm:$0xff]
        %v810 = vld [vmem:[%s807 + $0x10] sm:$0xff]
        %v811 = vld [vmem:[%s807 + $0x18] sm:$0xff]
        %v812 = vld [vmem:[%s807 + $0x20] sm:$0xff]
        %v813 = vld [vmem:[%s807 + $0x28] sm:$0xff]
        %v814 = vld [vmem:[%s807 + $0x30] sm:$0xf]
        %v815 = vld [vmem:[%s807 + $0x38] sm:$0xf]
        %v816 = vperm.slane %v474, 4
        %v817 = vperm.slane %v475, 4
        %v818 = vmul.f32 %v808, %v816
        %v819 = vmul.f32 %v809, %v817
        %v820 = vmul.f32 %v810, %v816
        %v821 = vmul.f32 %v811, %v817
        %v822 = vmul.f32 %v812, %v816
        %v823 = vmul.f32 %v813, %v817
        %v824 = vmul.f32 %v814, %v816
        %v825 = vmul.f32 %v815, %v817
        %v826 = vadd.f32 %v799, %v818
        %v827 = vadd.f32 %v800, %v819
        %v828 = vadd.f32 %v801, %v820
        %v829 = vadd.f32 %v802, %v821
        %v830 = vadd.f32 %v803, %v822
        %v831 = vadd.f32 %v804, %v823
        %v832 = vadd.f32 %v805, %v824
        %v833 = vadd.f32 %v806, %v825
        %s834 = scalar_lea.vmem [#allocation3], 832
        %v835 = vld [vmem:[%s834] sm:$0xff]
        %v836 = vld [vmem:[%s834 + $0x8] sm:$0xff]
        %v837 = vld [vmem:[%s834 + $0x10] sm:$0xff]
        %v838 = vld [vmem:[%s834 + $0x18] sm:$0xff]
        %v839 = vld [vmem:[%s834 + $0x20] sm:$0xff]
        %v840 = vld [vmem:[%s834 + $0x28] sm:$0xff]
        %v841 = vld [vmem:[%s834 + $0x30] sm:$0xf]
        %v842 = vld [vmem:[%s834 + $0x38] sm:$0xf]
        %v843 = vperm.slane %v474, 5
        %v844 = vperm.slane %v475, 5
        %v845 = vmul.f32 %v835, %v843
        %v846 = vmul.f32 %v836, %v844
        %v847 = vmul.f32 %v837, %v843
        %v848 = vmul.f32 %v838, %v844
        %v849 = vmul.f32 %v839, %v843
        %v850 = vmul.f32 %v840, %v844
        %v851 = vmul.f32 %v841, %v843
        %v852 = vmul.f32 %v842, %v844
        %v853 = vadd.f32 %v826, %v845
        %v854 = vadd.f32 %v827, %v846
        %v855 = vadd.f32 %v828, %v847
        %v856 = vadd.f32 %v829, %v848
        %v857 = vadd.f32 %v830, %v849
        %v858 = vadd.f32 %v831, %v850
        %v859 = vadd.f32 %v832, %v851
        %v860 = vadd.f32 %v833, %v852
        %v861 = vmax.f32 %v853, 0.0
        %v862 = vmax.f32 %v854, 0.0
        %v863 = vmax.f32 %v855, 0.0
        %v864 = vmax.f32 %v856, 0.0
        %v865 = vmax.f32 %v857, 0.0
        %v866 = vmax.f32 %v858, 0.0
        %v867 = vmax.f32 %v859, 0.0
        %v868 = vmax.f32 %v860, 0.0
        %v869 = vld [vmem:[%s5] sm:$0x1f]
        %v870 = vld [vmem:[%s5 + $0x8] sm:$0x1f]
        %v871 = vperm.slane %v861, 0
        %v872 = vperm.slane %v862, 0
        %v873 = vmul.f32 %v869, %v871
        %v874 = vmul.f32 %v870, %v872
        %v875 = vld [vmem:[%s6] sm:$0x1f]
        %v876 = vld [vmem:[%s6 + $0x8] sm:$0x1f]
        %v877 = vadd.f32 %v873, %v875
        %v878 = vadd.f32 %v874, %v876
        %s879 = scalar_lea.vmem %s5, 16
        %v880 = vld [vmem:[%s879] sm:$0x1f]
        %v881 = vld [vmem:[%s879 + $0x8] sm:$0x1f]
        %v882 = vperm.slane %v861, 1
        %v883 = vperm.slane %v862, 1
        %v884 = vmul.f32 %v880, %v882
        %v885 = vmul.f32 %v881, %v883
        %v886 = vadd.f32 %v877, %v884
        %v887 = vadd.f32 %v878, %v885
        %s888 = scalar_lea.vmem %s5, 32
        %v889 = vld [vmem:[%s888] sm:$0x1f]
        %v890 = vld [vmem:[%s888 + $0x8] sm:$0x1f]
        %v891 = vperm.slane %v861, 2
        %v892 = vperm.slane %v862, 2
        %v893 = vmul.f32 %v889, %v891
        %v894 = vmul.f32 %v890, %v892
        %v895 = vadd.f32 %v886, %v893
        %v896 = vadd.f32 %v887, %v894
        %s897 = scalar_lea.vmem %s5, 48
        %v898 = vld [vmem:[%s897] sm:$0x1f]
        %v899 = vld [vmem:[%s897 + $0x8] sm:$0x1f]
        %v900 = vperm.slane %v861, 3
        %v901 = vperm.slane %v862, 3
        %v902 = vmul.f32 %v898, %v900
        %v903 = vmul.f32 %v899, %v901
        %v904 = vadd.f32 %v895, %v902
        %v905 = vadd.f32 %v896, %v903
        %s906 = scalar_lea.vmem %s5, 64
        %v907 = vld [vmem:[%s906] sm:$0x1f]
        %v908 = vld [vmem:[%s906 + $0x8] sm:$0x1f]
        %v909 = vperm.slane %v861, 4
        %v910 = vperm.slane %v862, 4
        %v911 = vmul.f32 %v907, %v909
        %v912 = vmul.f32 %v908, %v910
        %v913 = vadd.f32 %v904, %v911
        %v914 = vadd.f32 %v905, %v912
        %s915 = scalar_lea.vmem %s5, 80
        %v916 = vld [vmem:[%s915] sm:$0x1f]
        %v917 = vld [vmem:[%s915 + $0x8] sm:$0x1f]
        %v918 = vperm.slane %v861, 5
        %v919 = vperm.slane %v862, 5
        %v920 = vmul.f32 %v916, %v918
        %v921 = vmul.f32 %v917, %v919
        %v922 = vadd.f32 %v913, %v920
        %v923 = vadd.f32 %v914, %v921
        %s924 = scalar_lea.vmem %s5, 96
        %v925 = vld [vmem:[%s924] sm:$0x1f]
        %v926 = vld [vmem:[%s924 + $0x8] sm:$0x1f]
        %v927 = vperm.slane %v861, 6
        %v928 = vperm.slane %v862, 6
        %v929 = vmul.f32 %v925, %v927
        %v930 = vmul.f32 %v926, %v928
        %v931 = vadd.f32 %v922, %v929
        %v932 = vadd.f32 %v923, %v930
        %s933 = scalar_lea.vmem %s5, 112
        %v934 = vld [vmem:[%s933] sm:$0x1f]
        %v935 = vld [vmem:[%s933 + $0x8] sm:$0x1f]
        %v936 = vperm.slane %v861, 7
        %v937 = vperm.slane %v862, 7
        %v938 = vmul.f32 %v934, %v936
        %v939 = vmul.f32 %v935, %v937
        %v940 = vadd.f32 %v931, %v938
        %v941 = vadd.f32 %v932, %v939
        %s942 = scalar_lea.vmem %s5, 128
        %v943 = vld [vmem:[%s942] sm:$0x1f]
        %v944 = vld [vmem:[%s942 + $0x8] sm:$0x1f]
        %v945 = vperm.slane %v863, 0
        %v946 = vperm.slane %v864, 0
        %v947 = vmul.f32 %v943, %v945
        %v948 = vmul.f32 %v944, %v946
        %v949 = vadd.f32 %v940, %v947
        %v950 = vadd.f32 %v941, %v948
        %s951 = scalar_lea.vmem %s5, 144
        %v952 = vld [vmem:[%s951] sm:$0x1f]
        %v953 = vld [vmem:[%s951 + $0x8] sm:$0x1f]
        %v954 = vperm.slane %v863, 1
        %v955 = vperm.slane %v864, 1
        %v956 = vmul.f32 %v952, %v954
        %v957 = vmul.f32 %v953, %v955
        %v958 = vadd.f32 %v949, %v956
        %v959 = vadd.f32 %v950, %v957
        %s960 = scalar_lea.vmem %s5, 160
        %v961 = vld [vmem:[%s960] sm:$0x1f]
        %v962 = vld [vmem:[%s960 + $0x8] sm:$0x1f]
        %v963 = vperm.slane %v863, 2
        %v964 = vperm.slane %v864, 2
        %v965 = vmul.f32 %v961, %v963
        %v966 = vmul.f32 %v962, %v964
        %v967 = vadd.f32 %v958, %v965
        %v968 = vadd.f32 %v959, %v966
        %s969 = scalar_lea.vmem %s5, 176
        %v970 = vld [vmem:[%s969] sm:$0x1f]
        %v971 = vld [vmem:[%s969 + $0x8] sm:$0x1f]
        %v972 = vperm.slane %v863, 3
        %v973 = vperm.slane %v864, 3
        %v974 = vmul.f32 %v970, %v972
        %v975 = vmul.f32 %v971, %v973
        %v976 = vadd.f32 %v967, %v974
        %v977 = vadd.f32 %v968, %v975
        %s978 = scalar_lea.vmem %s5, 192
        %v979 = vld [vmem:[%s978] sm:$0x1f]
        %v980 = vld [vmem:[%s978 + $0x8] sm:$0x1f]
        %v981 = vperm.slane %v863, 4
        %v982 = vperm.slane %v864, 4
        %v983 = vmul.f32 %v979, %v981
        %v984 = vmul.f32 %v980, %v982
        %v985 = vadd.f32 %v976, %v983
        %v986 = vadd.f32 %v977, %v984
        %s987 = scalar_lea.vmem %s5, 208
        %v988 = vld [vmem:[%s987] sm:$0x1f]
        %v989 = vld [vmem:[%s987 + $0x8] sm:$0x1f]
        %v990 = vperm.slane %v863, 5
        %v991 = vperm.slane %v864, 5
        %v992 = vmul.f32 %v988, %v990
        %v993 = vmul.f32 %v989, %v991
        %v994 = vadd.f32 %v985, %v992
        %v995 = vadd.f32 %v986, %v993
        %s996 = scalar_lea.vmem %s5, 224
        %v997 = vld [vmem:[%s996] sm:$0x1f]
        %v998 = vld [vmem:[%s996 + $0x8] sm:$0x1f]
        %v999 = vperm.slane %v863, 6
        %v1000 = vperm.slane %v864, 6
        %v1001 = vmul.f32 %v997, %v999
        %v1002 = vmul.f32 %v998, %v1000
        %v1003 = vadd.f32 %v994, %v1001
        %v1004 = vadd.f32 %v995, %v1002
        %s1005 = scalar_lea.vmem %s5, 240
        %v1006 = vld [vmem:[%s1005] sm:$0x1f]
        %v1007 = vld [vmem:[%s1005 + $0x8] sm:$0x1f]
        %v1008 = vperm.slane %v863, 7
        %v1009 = vperm.slane %v864, 7
        %v1010 = vmul.f32 %v1006, %v1008
        %v1011 = vmul.f32 %v1007, %v1009
        %v1012 = vadd.f32 %v1003, %v1010
        %v1013 = vadd.f32 %v1004, %v1011
        %s1014 = scalar_lea.vmem %s5, 256
        %v1015 = vld [vmem:[%s1014] sm:$0x1f]
        %v1016 = vld [vmem:[%s1014 + $0x8] sm:$0x1f]
        %v1017 = vperm.slane %v865, 0
        %v1018 = vperm.slane %v866, 0
        %v1019 = vmul.f32 %v1015, %v1017
        %v1020 = vmul.f32 %v1016, %v1018
        %v1021 = vadd.f32 %v1012, %v1019
        %v1022 = vadd.f32 %v1013, %v1020
        %s1023 = scalar_lea.vmem %s5, 272
        %v1024 = vld [vmem:[%s1023] sm:$0x1f]
        %v1025 = vld [vmem:[%s1023 + $0x8] sm:$0x1f]
        %v1026 = vperm.slane %v865, 1
        %v1027 = vperm.slane %v866, 1
        %v1028 = vmul.f32 %v1024, %v1026
        %v1029 = vmul.f32 %v1025, %v1027
        %v1030 = vadd.f32 %v1021, %v1028
        %v1031 = vadd.f32 %v1022, %v1029
        %s1032 = scalar_lea.vmem %s5, 288
        %v1033 = vld [vmem:[%s1032] sm:$0x1f]
        %v1034 = vld [vmem:[%s1032 + $0x8] sm:$0x1f]
        %v1035 = vperm.slane %v865, 2
        %v1036 = vperm.slane %v866, 2
        %v1037 = vmul.f32 %v1033, %v1035
        %v1038 = vmul.f32 %v1034, %v1036
        %v1039 = vadd.f32 %v1030, %v1037
        %v1040 = vadd.f32 %v1031, %v1038
        %s1041 = scalar_lea.vmem %s5, 304
        %v1042 = vld [vmem:[%s1041] sm:$0x1f]
        %v1043 = vld [vmem:[%s1041 + $0x8] sm:$0x1f]
        %v1044 = vperm.slane %v865, 3
        %v1045 = vperm.slane %v866, 3
        %v1046 = vmul.f32 %v1042, %v1044
        %v1047 = vmul.f32 %v1043, %v1045
        %v1048 = vadd.f32 %v1039, %v1046
        %v1049 = vadd.f32 %v1040, %v1047
        %s1050 = scalar_lea.vmem %s5, 320
        %v1051 = vld [vmem:[%s1050] sm:$0x1f]
        %v1052 = vld [vmem:[%s1050 + $0x8] sm:$0x1f]
        %v1053 = vperm.slane %v865, 4
        %v1054 = vperm.slane %v866, 4
        %v1055 = vmul.f32 %v1051, %v1053
        %v1056 = vmul.f32 %v1052, %v1054
        %v1057 = vadd.f32 %v1048, %v1055
        %v1058 = vadd.f32 %v1049, %v1056
        %s1059 = scalar_lea.vmem %s5, 336
        %v1060 = vld [vmem:[%s1059] sm:$0x1f]
        %v1061 = vld [vmem:[%s1059 + $0x8] sm:$0x1f]
        %v1062 = vperm.slane %v865, 5
        %v1063 = vperm.slane %v866, 5
        %v1064 = vmul.f32 %v1060, %v1062
        %v1065 = vmul.f32 %v1061, %v1063
        %v1066 = vadd.f32 %v1057, %v1064
        %v1067 = vadd.f32 %v1058, %v1065
        %s1068 = scalar_lea.vmem %s5, 352
        %v1069 = vld [vmem:[%s1068] sm:$0x1f]
        %v1070 = vld [vmem:[%s1068 + $0x8] sm:$0x1f]
        %v1071 = vperm.slane %v865, 6
        %v1072 = vperm.slane %v866, 6
        %v1073 = vmul.f32 %v1069, %v1071
        %v1074 = vmul.f32 %v1070, %v1072
        %v1075 = vadd.f32 %v1066, %v1073
        %v1076 = vadd.f32 %v1067, %v1074
        %s1077 = scalar_lea.vmem %s5, 368
        %v1078 = vld [vmem:[%s1077] sm:$0x1f]
        %v1079 = vld [vmem:[%s1077 + $0x8] sm:$0x1f]
        %v1080 = vperm.slane %v865, 7
        %v1081 = vperm.slane %v866, 7
        %v1082 = vmul.f32 %v1078, %v1080
        %v1083 = vmul.f32 %v1079, %v1081
        %v1084 = vadd.f32 %v1075, %v1082
        %v1085 = vadd.f32 %v1076, %v1083
        %s1086 = scalar_lea.vmem %s5, 384
        %v1087 = vld [vmem:[%s1086] sm:$0x1f]
        %v1088 = vld [vmem:[%s1086 + $0x8] sm:$0x1f]
        %v1089 = vperm.slane %v867, 0
        %v1090 = vperm.slane %v868, 0
        %v1091 = vmul.f32 %v1087, %v1089
        %v1092 = vmul.f32 %v1088, %v1090
        %v1093 = vadd.f32 %v1084, %v1091
        %v1094 = vadd.f32 %v1085, %v1092
        %s1095 = scalar_lea.vmem %s5, 400
        %v1096 = vld [vmem:[%s1095] sm:$0x1f]
        %v1097 = vld [vmem:[%s1095 + $0x8] sm:$0x1f]
        %v1098 = vperm.slane %v867, 1
        %v1099 = vperm.slane %v868, 1
        %v1100 = vmul.f32 %v1096, %v1098
        %v1101 = vmul.f32 %v1097, %v1099
        %v1102 = vadd.f32 %v1093, %v1100
        %v1103 = vadd.f32 %v1094, %v1101
        %s1104 = scalar_lea.vmem %s5, 416
        %v1105 = vld [vmem:[%s1104] sm:$0x1f]
        %v1106 = vld [vmem:[%s1104 + $0x8] sm:$0x1f]
        %v1107 = vperm.slane %v867, 2
        %v1108 = vperm.slane %v868, 2
        %v1109 = vmul.f32 %v1105, %v1107
        %v1110 = vmul.f32 %v1106, %v1108
        %v1111 = vadd.f32 %v1102, %v1109
        %v1112 = vadd.f32 %v1103, %v1110
        %s1113 = scalar_lea.vmem %s5, 432
        %v1114 = vld [vmem:[%s1113] sm:$0x1f]
        %v1115 = vld [vmem:[%s1113 + $0x8] sm:$0x1f]
        %v1116 = vperm.slane %v867, 3
        %v1117 = vperm.slane %v868, 3
        %v1118 = vmul.f32 %v1114, %v1116
        %v1119 = vmul.f32 %v1115, %v1117
        %v1120 = vadd.f32 %v1111, %v1118
        %v1121 = vadd.f32 %v1112, %v1119
        %vm1122 = vcmask 1044480
        %v1123 = vsel %vm1122, %v1120, -inf
        %v1124 = vrot.slane %v1123, 4
        %v1125 = vmax.f32 %v1123, %v1124
        %v1126 = vrot.slane %v1125, 2
        %v1127 = vmax.f32 %v1125, %v1126
        %v1128 = vrot.slane %v1127, 1
        %v1129 = vmax.f32 %v1127, %v1128
        %v1130 = vsel %vm1122, %v1121, -inf
        %v1131 = vrot.slane %v1130, 4
        %v1132 = vmax.f32 %v1130, %v1131
        %v1133 = vrot.slane %v1132, 2
        %v1134 = vmax.f32 %v1132, %v1133
        %v1135 = vrot.slane %v1134, 1
        %v1136 = vmax.f32 %v1134, %v1135
        %v1137 = vsub.f32 %v1120, %v1129
        %v1138 = vsub.f32 %v1121, %v1136
        %v1139 = vmul.f32 %v1137, 1.442695
        %v1140 = vpow.pop %v1139
        %v1141 = vmul.f32 %v1138, 1.442695
        %v1142 = vpow.pop %v1141
        %v1143 = vsel %vm1122, %v1140, 0.0
        %v1144 = vrot.slane %v1143, 4
        %v1145 = vadd.f32 %v1143, %v1144
        %v1146 = vrot.slane %v1145, 2
        %v1147 = vadd.f32 %v1145, %v1146
        %v1148 = vrot.slane %v1147, 1
        %v1149 = vadd.f32 %v1147, %v1148
        %v1150 = vsel %vm1122, %v1142, 0.0
        %v1151 = vrot.slane %v1150, 4
        %v1152 = vadd.f32 %v1150, %v1151
        %v1153 = vrot.slane %v1152, 2
        %v1154 = vadd.f32 %v1152, %v1153
        %v1155 = vrot.slane %v1154, 1
        %v1156 = vadd.f32 %v1154, %v1155
        %v1157 = vrcp.pop %v1149
        %v1158 = vrcp.pop %v1156
        %v1159 = vmul.f32 %v1140, %v1157
        %v1160 = vmul.f32 %v1142, %v1158
        %1161 = vst [vmem:[%s327] sm:$0x1f] %v1159
        %1162 = vst [vmem:[%s327 + $0x8] sm:$0x1f] %v1160
        %v1163 = vld [vmem:[%s294 + $0x10] sm:$0xff]
        %v1164 = vld [vmem:[%s294 + $0x18] sm:$0xff]
        %v1165 = vld [vmem:[%s294 + $0x30] sm:$0x1]
        %v1166 = vld [vmem:[%s294 + $0x38] sm:$0x1]
        %v1167 = vld [vmem:[%s1] sm:$0xff]
        %v1168 = vld [vmem:[%s1 + $0x8] sm:$0xff]
        %v1169 = vld [vmem:[%s1 + $0x10] sm:$0x3f]
        %v1170 = vld [vmem:[%s1 + $0x18] sm:$0x3f]
        %v1171 = vperm.slane %v1163, 0
        %v1172 = vperm.slane %v1164, 0
        %v1173 = vmul.f32 %v1167, %v1171
        %v1174 = vmul.f32 %v1168, %v1172
        %v1175 = vmul.f32 %v1169, %v1171
        %v1176 = vmul.f32 %v1170, %v1172
        %v1177 = vld [vmem:[%s2] sm:$0xff]
        %v1178 = vld [vmem:[%s2 + $0x8] sm:$0xff]
        %v1179 = vld [vmem:[%s2 + $0x10] sm:$0x3f]
        %v1180 = vld [vmem:[%s2 + $0x18] sm:$0x3f]
        %v1181 = vadd.f32 %v1173, %v1177
        %v1182 = vadd.f32 %v1174, %v1178
        %v1183 = vadd.f32 %v1175, %v1179
        %v1184 = vadd.f32 %v1176, %v1180
        %v1185 = vld [vmem:[%s352] sm:$0xff]
        %v1186 = vld [vmem:[%s352 + $0x8] sm:$0xff]
        %v1187 = vld [vmem:[%s352 + $0x10] sm:$0x3f]
        %v1188 = vld [vmem:[%s352 + $0x18] sm:$0x3f]
        %v1189 = vperm.slane %v1163, 1
        %v1190 = vperm.slane %v1164, 1
        %v1191 = vmul.f32 %v1185, %v1189
        %v1192 = vmul.f32 %v1186, %v1190
        %v1193 = vmul.f32 %v1187, %v1189
        %v1194 = vmul.f32 %v1188, %v1190
        %v1195 = vadd.f32 %v1181, %v1191
        %v1196 = vadd.f32 %v1182, %v1192
        %v1197 = vadd.f32 %v1183, %v1193
        %v1198 = vadd.f32 %v1184, %v1194
        %v1199 = vld [vmem:[%s367] sm:$0xff]
        %v1200 = vld [vmem:[%s367 + $0x8] sm:$0xff]
        %v1201 = vld [vmem:[%s367 + $0x10] sm:$0x3f]
        %v1202 = vld [vmem:[%s367 + $0x18] sm:$0x3f]
        %v1203 = vperm.slane %v1163, 2
        %v1204 = vperm.slane %v1164, 2
        %v1205 = vmul.f32 %v1199, %v1203
        %v1206 = vmul.f32 %v1200, %v1204
        %v1207 = vmul.f32 %v1201, %v1203
        %v1208 = vmul.f32 %v1202, %v1204
        %v1209 = vadd.f32 %v1195, %v1205
        %v1210 = vadd.f32 %v1196, %v1206
        %v1211 = vadd.f32 %v1197, %v1207
        %v1212 = vadd.f32 %v1198, %v1208
        %v1213 = vld [vmem:[%s382] sm:$0xff]
        %v1214 = vld [vmem:[%s382 + $0x8] sm:$0xff]
        %v1215 = vld [vmem:[%s382 + $0x10] sm:$0x3f]
        %v1216 = vld [vmem:[%s382 + $0x18] sm:$0x3f]
        %v1217 = vperm.slane %v1163, 3
        %v1218 = vperm.slane %v1164, 3
        %v1219 = vmul.f32 %v1213, %v1217
        %v1220 = vmul.f32 %v1214, %v1218
        %v1221 = vmul.f32 %v1215, %v1217
        %v1222 = vmul.f32 %v1216, %v1218
        %v1223 = vadd.f32 %v1209, %v1219
        %v1224 = vadd.f32 %v1210, %v1220
        %v1225 = vadd.f32 %v1211, %v1221
        %v1226 = vadd.f32 %v1212, %v1222
        %v1227 = vld [vmem:[%s397] sm:$0xff]
        %v1228 = vld [vmem:[%s397 + $0x8] sm:$0xff]
        %v1229 = vld [vmem:[%s397 + $0x10] sm:$0x3f]
        %v1230 = vld [vmem:[%s397 + $0x18] sm:$0x3f]
        %v1231 = vperm.slane %v1163, 4
        %v1232 = vperm.slane %v1164, 4
        %v1233 = vmul.f32 %v1227, %v1231
        %v1234 = vmul.f32 %v1228, %v1232
        %v1235 = vmul.f32 %v1229, %v1231
        %v1236 = vmul.f32 %v1230, %v1232
        %v1237 = vadd.f32 %v1223, %v1233
        %v1238 = vadd.f32 %v1224, %v1234
        %v1239 = vadd.f32 %v1225, %v1235
        %v1240 = vadd.f32 %v1226, %v1236
        %v1241 = vld [vmem:[%s412] sm:$0xff]
        %v1242 = vld [vmem:[%s412 + $0x8] sm:$0xff]
        %v1243 = vld [vmem:[%s412 + $0x10] sm:$0x3f]
        %v1244 = vld [vmem:[%s412 + $0x18] sm:$0x3f]
        %v1245 = vperm.slane %v1163, 5
        %v1246 = vperm.slane %v1164, 5
        %v1247 = vmul.f32 %v1241, %v1245
        %v1248 = vmul.f32 %v1242, %v1246
        %v1249 = vmul.f32 %v1243, %v1245
        %v1250 = vmul.f32 %v1244, %v1246
        %v1251 = vadd.f32 %v1237, %v1247
        %v1252 = vadd.f32 %v1238, %v1248
        %v1253 = vadd.f32 %v1239, %v1249
        %v1254 = vadd.f32 %v1240, %v1250
        %v1255 = vld [vmem:[%s427] sm:$0xff]
        %v1256 = vld [vmem:[%s427 + $0x8] sm:$0xff]
        %v1257 = vld [vmem:[%s427 + $0x10] sm:$0x3f]
        %v1258 = vld [vmem:[%s427 + $0x18] sm:$0x3f]
        %v1259 = vperm.slane %v1163, 6
        %v1260 = vperm.slane %v1164, 6
        %v1261 = vmul.f32 %v1255, %v1259
        %v1262 = vmul.f32 %v1256, %v1260
        %v1263 = vmul.f32 %v1257, %v1259
        %v1264 = vmul.f32 %v1258, %v1260
        %v1265 = vadd.f32 %v1251, %v1261
        %v1266 = vadd.f32 %v1252, %v1262
        %v1267 = vadd.f32 %v1253, %v1263
        %v1268 = vadd.f32 %v1254, %v1264
        %v1269 = vld [vmem:[%s442] sm:$0xff]
        %v1270 = vld [vmem:[%s442 + $0x8] sm:$0xff]
        %v1271 = vld [vmem:[%s442 + $0x10] sm:$0x3f]
        %v1272 = vld [vmem:[%s442 + $0x18] sm:$0x3f]
        %v1273 = vperm.slane %v1163, 7
        %v1274 = vperm.slane %v1164, 7
        %v1275 = vmul.f32 %v1269, %v1273
        %v1276 = vmul.f32 %v1270, %v1274
        %v1277 = vmul.f32 %v1271, %v1273
        %v1278 = vmul.f32 %v1272, %v1274
        %v1279 = vadd.f32 %v1265, %v1275
        %v1280 = vadd.f32 %v1266, %v1276
        %v1281 = vadd.f32 %v1267, %v1277
        %v1282 = vadd.f32 %v1268, %v1278
        %v1283 = vld [vmem:[%s457] sm:$0xff]
        %v1284 = vld [vmem:[%s457 + $0x8] sm:$0xff]
        %v1285 = vld [vmem:[%s457 + $0x10] sm:$0x3f]
        %v1286 = vld [vmem:[%s457 + $0x18] sm:$0x3f]
        %v1287 = vperm.slane %v1165, 0
        %v1288 = vperm.slane %v1166, 0
        %v1289 = vmul.f32 %v1283, %v1287
        %v1290 = vmul.f32 %v1284, %v1288
        %v1291 = vmul.f32 %v1285, %v1287
        %v1292 = vmul.f32 %v1286, %v1288
        %v1293 = vadd.f32 %v1279, %v1289
        %v1294 = vadd.f32 %v1280, %v1290
        %v1295 = vadd.f32 %v1281, %v1291
        %v1296 = vadd.f32 %v1282, %v1292
        %v1297 = vmax.f32 %v1293, 0.0
        %v1298 = vmax.f32 %v1294, 0.0
        %v1299 = vmax.f32 %v1295, 0.0
        %v1300 = vmax.f32 %v1296, 0.0
        %v1301 = vld [vmem:[#allocation3] sm:$0xff]
        %v1302 = vld [vmem:[#allocation3 + $0x8] sm:$0xff]
        %v1303 = vld [vmem:[#allocation3 + $0x10] sm:$0xff]
        %v1304 = vld [vmem:[#allocation3 + $0x18] sm:$0xff]
        %v1305 = vld [vmem:[#allocation3 + $0x20] sm:$0xff]
        %v1306 = vld [vmem:[#allocation3 + $0x28] sm:$0xff]
        %v1307 = vld [vmem:[#allocation3 + $0x30] sm:$0xf]
        %v1308 = vld [vmem:[#allocation3 + $0x38] sm:$0xf]
        %v1309 = vperm.slane %v1297, 0
        %v1310 = vperm.slane %v1298, 0
        %v1311 = vmul.f32 %v1301, %v1309
        %v1312 = vmul.f32 %v1302, %v1310
        %v1313 = vmul.f32 %v1303, %v1309
        %v1314 = vmul.f32 %v1304, %v1310
        %v1315 = vmul.f32 %v1305, %v1309
        %v1316 = vmul.f32 %v1306, %v1310
        %v1317 = vmul.f32 %v1307, %v1309
        %v1318 = vmul.f32 %v1308, %v1310
        %v1319 = vld [vmem:[%s4] sm:$0xff]
        %v1320 = vld [vmem:[%s4 + $0x8] sm:$0xff]
        %v1321 = vld [vmem:[%s4 + $0x10] sm:$0xff]
        %v1322 = vld [vmem:[%s4 + $0x18] sm:$0xff]
        %v1323 = vld [vmem:[%s4 + $0x20] sm:$0xff]
        %v1324 = vld [vmem:[%s4 + $0x28] sm:$0xff]
        %v1325 = vld [vmem:[%s4 + $0x30] sm:$0xf]
        %v1326 = vld [vmem:[%s4 + $0x38] sm:$0xf]
        %v1327 = vadd.f32 %v1311, %v1319
        %v1328 = vadd.f32 %v1312, %v1320
        %v1329 = vadd.f32 %v1313, %v1321
        %v1330 = vadd.f32 %v1314, %v1322
        %v1331 = vadd.f32 %v1315, %v1323
        %v1332 = vadd.f32 %v1316, %v1324
        %v1333 = vadd.f32 %v1317, %v1325
        %v1334 = vadd.f32 %v1318, %v1326
        %v1335 = vld [vmem:[%s510] sm:$0xff]
        %v1336 = vld [vmem:[%s510 + $0x8] sm:$0xff]
        %v1337 = vld [vmem:[%s510 + $0x10] sm:$0xff]
        %v1338 = vld [vmem:[%s510 + $0x18] sm:$0xff]
        %v1339 = vld [vmem:[%s510 + $0x20] sm:$0xff]
        %v1340 = vld [vmem:[%s510 + $0x28] sm:$0xff]
        %v1341 = vld [vmem:[%s510 + $0x30] sm:$0xf]
        %v1342 = vld [vmem:[%s510 + $0x38] sm:$0xf]
        %v1343 = vperm.slane %v1297, 1
        %v1344 = vperm.slane %v1298, 1
        %v1345 = vmul.f32 %v1335, %v1343
        %v1346 = vmul.f32 %v1336, %v1344
        %v1347 = vmul.f32 %v1337, %v1343
        %v1348 = vmul.f32 %v1338, %v1344
        %v1349 = vmul.f32 %v1339, %v1343
        %v1350 = vmul.f32 %v1340, %v1344
        %v1351 = vmul.f32 %v1341, %v1343
        %v1352 = vmul.f32 %v1342, %v1344
        %v1353 = vadd.f32 %v1327, %v1345
        %v1354 = vadd.f32 %v1328, %v1346
        %v1355 = vadd.f32 %v1329, %v1347
        %v1356 = vadd.f32 %v1330, %v1348
        %v1357 = vadd.f32 %v1331, %v1349
        %v1358 = vadd.f32 %v1332, %v1350
        %v1359 = vadd.f32 %v1333, %v1351
        %v1360 = vadd.f32 %v1334, %v1352
        %v1361 = vld [vmem:[%s537] sm:$0xff]
        %v1362 = vld [vmem:[%s537 + $0x8] sm:$0xff]
        %v1363 = vld [vmem:[%s537 + $0x10] sm:$0xff]
        %v1364 = vld [vmem:[%s537 + $0x18] sm:$0xff]
        %v1365 = vld [vmem:[%s537 + $0x20] sm:$0xff]
        %v1366 = vld [vmem:[%s537 + $0x28] sm:$0xff]
        %v1367 = vld [vmem:[%s537 + $0x30] sm:$0xf]
        %v1368 = vld [vmem:[%s537 + $0x38] sm:$0xf]
        %v1369 = vperm.slane %v1297, 2
        %v1370 = vperm.slane %v1298, 2
        %v1371 = vmul.f32 %v1361, %v1369
        %v1372 = vmul.f32 %v1362, %v1370
        %v1373 = vmul.f32 %v1363, %v1369
        %v1374 = vmul.f32 %v1364, %v1370
        %v1375 = vmul.f32 %v1365, %v1369
        %v1376 = vmul.f32 %v1366, %v1370
        %v1377 = vmul.f32 %v1367, %v1369
        %v1378 = vmul.f32 %v1368, %v1370
        %v1379 = vadd.f32 %v1353, %v1371
        %v1380 = vadd.f32 %v1354, %v1372
        %v1381 = vadd.f32 %v1355, %v1373
        %v1382 = vadd.f32 %v1356, %v1374
        %v1383 = vadd.f32 %v1357, %v1375
        %v1384 = vadd.f32 %v1358, %v1376
        %v1385 = vadd.f32 %v1359, %v1377
        %v1386 = vadd.f32 %v1360, %v1378
        %v1387 = vld [vmem:[%s564] sm:$0xff]
        %v1388 = vld [vmem:[%s564 + $0x8] sm:$0xff]
        %v1389 = vld [vmem:[%s564 + $0x10] sm:$0xff]
        %v1390 = vld [vmem:[%s564 + $0x18] sm:$0xff]
        %v1391 = vld [vmem:[%s564 + $0x20] sm:$0xff]
        %v1392 = vld [vmem:[%s564 + $0x28] sm:$0xff]
        %v1393 = vld [vmem:[%s564 + $0x30] sm:$0xf]
        %v1394 = vld [vmem:[%s564 + $0x38] sm:$0xf]
        %v1395 = vperm.slane %v1297, 3
        %v1396 = vperm.slane %v1298, 3
        %v1397 = vmul.f32 %v1387, %v1395
        %v1398 = vmul.f32 %v1388, %v1396
        %v1399 = vmul.f32 %v1389, %v1395
        %v1400 = vmul.f32 %v1390, %v1396
        %v1401 = vmul.f32 %v1391, %v1395
        %v1402 = vmul.f32 %v1392, %v1396
        %v1403 = vmul.f32 %v1393, %v1395
        %v1404 = vmul.f32 %v1394, %v1396
        %v1405 = vadd.f32 %v1379, %v1397
        %v1406 = vadd.f32 %v1380, %v1398
        %v1407 = vadd.f32 %v1381, %v1399
        %v1408 = vadd.f32 %v1382, %v1400
        %v1409 = vadd.f32 %v1383, %v1401
        %v1410 = vadd.f32 %v1384, %v1402
        %v1411 = vadd.f32 %v1385, %v1403
        %v1412 = vadd.f32 %v1386, %v1404
        %v1413 = vld [vmem:[%s591] sm:$0xff]
        %v1414 = vld [vmem:[%s591 + $0x8] sm:$0xff]
        %v1415 = vld [vmem:[%s591 + $0x10] sm:$0xff]
        %v1416 = vld [vmem:[%s591 + $0x18] sm:$0xff]
        %v1417 = vld [vmem:[%s591 + $0x20] sm:$0xff]
        %v1418 = vld [vmem:[%s591 + $0x28] sm:$0xff]
        %v1419 = vld [vmem:[%s591 + $0x30] sm:$0xf]
        %v1420 = vld [vmem:[%s591 + $0x38] sm:$0xf]
        %v1421 = vperm.slane %v1297, 4
        %v1422 = vperm.slane %v1298, 4
        %v1423 = vmul.f32 %v1413, %v1421
        %v1424 = vmul.f32 %v1414, %v1422
        %v1425 = vmul.f32 %v1415, %v1421
        %v1426 = vmul.f32 %v1416, %v1422
        %v1427 = vmul.f32 %v1417, %v1421
        %v1428 = vmul.f32 %v1418, %v1422
        %v1429 = vmul.f32 %v1419, %v1421
        %v1430 = vmul.f32 %v1420, %v1422
        %v1431 = vadd.f32 %v1405, %v1423
        %v1432 = vadd.f32 %v1406, %v1424
        %v1433 = vadd.f32 %v1407, %v1425
        %v1434 = vadd.f32 %v1408, %v1426
        %v1435 = vadd.f32 %v1409, %v1427
        %v1436 = vadd.f32 %v1410, %v1428
        %v1437 = vadd.f32 %v1411, %v1429
        %v1438 = vadd.f32 %v1412, %v1430
        %v1439 = vld [vmem:[%s618] sm:$0xff]
        %v1440 = vld [vmem:[%s618 + $0x8] sm:$0xff]
        %v1441 = vld [vmem:[%s618 + $0x10] sm:$0xff]
        %v1442 = vld [vmem:[%s618 + $0x18] sm:$0xff]
        %v1443 = vld [vmem:[%s618 + $0x20] sm:$0xff]
        %v1444 = vld [vmem:[%s618 + $0x28] sm:$0xff]
        %v1445 = vld [vmem:[%s618 + $0x30] sm:$0xf]
        %v1446 = vld [vmem:[%s618 + $0x38] sm:$0xf]
        %v1447 = vperm.slane %v1297, 5
        %v1448 = vperm.slane %v1298, 5
        %v1449 = vmul.f32 %v1439, %v1447
        %v1450 = vmul.f32 %v1440, %v1448
        %v1451 = vmul.f32 %v1441, %v1447
        %v1452 = vmul.f32 %v1442, %v1448
        %v1453 = vmul.f32 %v1443, %v1447
        %v1454 = vmul.f32 %v1444, %v1448
        %v1455 = vmul.f32 %v1445, %v1447
        %v1456 = vmul.f32 %v1446, %v1448
        %v1457 = vadd.f32 %v1431, %v1449
        %v1458 = vadd.f32 %v1432, %v1450
        %v1459 = vadd.f32 %v1433, %v1451
        %v1460 = vadd.f32 %v1434, %v1452
        %v1461 = vadd.f32 %v1435, %v1453
        %v1462 = vadd.f32 %v1436, %v1454
        %v1463 = vadd.f32 %v1437, %v1455
        %v1464 = vadd.f32 %v1438, %v1456
        %v1465 = vld [vmem:[%s645] sm:$0xff]
        %v1466 = vld [vmem:[%s645 + $0x8] sm:$0xff]
        %v1467 = vld [vmem:[%s645 + $0x10] sm:$0xff]
        %v1468 = vld [vmem:[%s645 + $0x18] sm:$0xff]
        %v1469 = vld [vmem:[%s645 + $0x20] sm:$0xff]
        %v1470 = vld [vmem:[%s645 + $0x28] sm:$0xff]
        %v1471 = vld [vmem:[%s645 + $0x30] sm:$0xf]
        %v1472 = vld [vmem:[%s645 + $0x38] sm:$0xf]
        %v1473 = vperm.slane %v1297, 6
        %v1474 = vperm.slane %v1298, 6
        %v1475 = vmul.f32 %v1465, %v1473
        %v1476 = vmul.f32 %v1466, %v1474
        %v1477 = vmul.f32 %v1467, %v1473
        %v1478 = vmul.f32 %v1468, %v1474
        %v1479 = vmul.f32 %v1469, %v1473
        %v1480 = vmul.f32 %v1470, %v1474
        %v1481 = vmul.f32 %v1471, %v1473
        %v1482 = vmul.f32 %v1472, %v1474
        %v1483 = vadd.f32 %v1457, %v1475
        %v1484 = vadd.f32 %v1458, %v1476
        %v1485 = vadd.f32 %v1459, %v1477
        %v1486 = vadd.f32 %v1460, %v1478
        %v1487 = vadd.f32 %v1461, %v1479
        %v1488 = vadd.f32 %v1462, %v1480
        %v1489 = vadd.f32 %v1463, %v1481
        %v1490 = vadd.f32 %v1464, %v1482
        %v1491 = vld [vmem:[%s672] sm:$0xff]
        %v1492 = vld [vmem:[%s672 + $0x8] sm:$0xff]
        %v1493 = vld [vmem:[%s672 + $0x10] sm:$0xff]
        %v1494 = vld [vmem:[%s672 + $0x18] sm:$0xff]
        %v1495 = vld [vmem:[%s672 + $0x20] sm:$0xff]
        %v1496 = vld [vmem:[%s672 + $0x28] sm:$0xff]
        %v1497 = vld [vmem:[%s672 + $0x30] sm:$0xf]
        %v1498 = vld [vmem:[%s672 + $0x38] sm:$0xf]
        %v1499 = vperm.slane %v1297, 7
        %v1500 = vperm.slane %v1298, 7
        %v1501 = vmul.f32 %v1491, %v1499
        %v1502 = vmul.f32 %v1492, %v1500
        %v1503 = vmul.f32 %v1493, %v1499
        %v1504 = vmul.f32 %v1494, %v1500
        %v1505 = vmul.f32 %v1495, %v1499
        %v1506 = vmul.f32 %v1496, %v1500
        %v1507 = vmul.f32 %v1497, %v1499
        %v1508 = vmul.f32 %v1498, %v1500
        %v1509 = vadd.f32 %v1483, %v1501
        %v1510 = vadd.f32 %v1484, %v1502
        %v1511 = vadd.f32 %v1485, %v1503
        %v1512 = vadd.f32 %v1486, %v1504
        %v1513 = vadd.f32 %v1487, %v1505
        %v1514 = vadd.f32 %v1488, %v1506
        %v1515 = vadd.f32 %v1489, %v1507
        %v1516 = vadd.f32 %v1490, %v1508
        %v1517 = vld [vmem:[%s699] sm:$0xff]
        %v1518 = vld [vmem:[%s699 + $0x8] sm:$0xff]
        %v1519 = vld [vmem:[%s699 + $0x10] sm:$0xff]
        %v1520 = vld [vmem:[%s699 + $0x18] sm:$0xff]
        %v1521 = vld [vmem:[%s699 + $0x20] sm:$0xff]
        %v1522 = vld [vmem:[%s699 + $0x28] sm:$0xff]
        %v1523 = vld [vmem:[%s699 + $0x30] sm:$0xf]
        %v1524 = vld [vmem:[%s699 + $0x38] sm:$0xf]
        %v1525 = vperm.slane %v1299, 0
        %v1526 = vperm.slane %v1300, 0
        %v1527 = vmul.f32 %v1517, %v1525
        %v1528 = vmul.f32 %v1518, %v1526
        %v1529 = vmul.f32 %v1519, %v1525
        %v1530 = vmul.f32 %v1520, %v1526
        %v1531 = vmul.f32 %v1521, %v1525
        %v1532 = vmul.f32 %v1522, %v1526
        %v1533 = vmul.f32 %v1523, %v1525
        %v1534 = vmul.f32 %v1524, %v1526
        %v1535 = vadd.f32 %v1509, %v1527
        %v1536 = vadd.f32 %v1510, %v1528
        %v1537 = vadd.f32 %v1511, %v1529
        %v1538 = vadd.f32 %v1512, %v1530
        %v1539 = vadd.f32 %v1513, %v1531
        %v1540 = vadd.f32 %v1514, %v1532
        %v1541 = vadd.f32 %v1515, %v1533
        %v1542 = vadd.f32 %v1516, %v1534
        %v1543 = vld [vmem:[%s726] sm:$0xff]
        %v1544 = vld [vmem:[%s726 + $0x8] sm:$0xff]
        %v1545 = vld [vmem:[%s726 + $0x10] sm:$0xff]
        %v1546 = vld [vmem:[%s726 + $0x18] sm:$0xff]
        %v1547 = vld [vmem:[%s726 + $0x20] sm:$0xff]
        %v1548 = vld [vmem:[%s726 + $0x28] sm:$0xff]
        %v1549 = vld [vmem:[%s726 + $0x30] sm:$0xf]
        %v1550 = vld [vmem:[%s726 + $0x38] sm:$0xf]
        %v1551 = vperm.slane %v1299, 1
        %v1552 = vperm.slane %v1300, 1
        %v1553 = vmul.f32 %v1543, %v1551
        %v1554 = vmul.f32 %v1544, %v1552
        %v1555 = vmul.f32 %v1545, %v1551
        %v1556 = vmul.f32 %v1546, %v1552
        %v1557 = vmul.f32 %v1547, %v1551
        %v1558 = vmul.f32 %v1548, %v1552
        %v1559 = vmul.f32 %v1549, %v1551
        %v1560 = vmul.f32 %v1550, %v1552
        %v1561 = vadd.f32 %v1535, %v1553
        %v1562 = vadd.f32 %v1536, %v1554
        %v1563 = vadd.f32 %v1537, %v1555
        %v1564 = vadd.f32 %v1538, %v1556
        %v1565 = vadd.f32 %v1539, %v1557
        %v1566 = vadd.f32 %v1540, %v1558
        %v1567 = vadd.f32 %v1541, %v1559
        %v1568 = vadd.f32 %v1542, %v1560
        %v1569 = vld [vmem:[%s753] sm:$0xff]
        %v1570 = vld [vmem:[%s753 + $0x8] sm:$0xff]
        %v1571 = vld [vmem:[%s753 + $0x10] sm:$0xff]
        %v1572 = vld [vmem:[%s753 + $0x18] sm:$0xff]
        %v1573 = vld [vmem:[%s753 + $0x20] sm:$0xff]
        %v1574 = vld [vmem:[%s753 + $0x28] sm:$0xff]
        %v1575 = vld [vmem:[%s753 + $0x30] sm:$0xf]
        %v1576 = vld [vmem:[%s753 + $0x38] sm:$0xf]
        %v1577 = vperm.slane %v1299, 2
        %v1578 = vperm.slane %v1300, 2
        %v1579 = vmul.f32 %v1569, %v1577
        %v1580 = vmul.f32 %v1570, %v1578
        %v1581 = vmul.f32 %v1571, %v1577
        %v1582 = vmul.f32 %v1572, %v1578
        %v1583 = vmul.f32 %v1573, %v1577
        %v1584 = vmul.f32 %v1574, %v1578
        %v1585 = vmul.f32 %v1575, %v1577
        %v1586 = vmul.f32 %v1576, %v1578
        %v1587 = vadd.f32 %v1561, %v1579
        %v1588 = vadd.f32 %v1562, %v1580
        %v1589 = vadd.f32 %v1563, %v1581
        %v1590 = vadd.f32 %v1564, %v1582
        %v1591 = vadd.f32 %v1565, %v1583
        %v1592 = vadd.f32 %v1566, %v1584
        %v1593 = vadd.f32 %v1567, %v1585
        %v1594 = vadd.f32 %v1568, %v1586
        %v1595 = vld [vmem:[%s780] sm:$0xff]
        %v1596 = vld [vmem:[%s780 + $0x8] sm:$0xff]
        %v1597 = vld [vmem:[%s780 + $0x10] sm:$0xff]
        %v1598 = vld [vmem:[%s780 + $0x18] sm:$0xff]
        %v1599 = vld [vmem:[%s780 + $0x20] sm:$0xff]
        %v1600 = vld [vmem:[%s780 + $0x28] sm:$0xff]
        %v1601 = vld [vmem:[%s780 + $0x30] sm:$0xf]
        %v1602 = vld [vmem:[%s780 + $0x38] sm:$0xf]
        %v1603 = vperm.slane %v1299, 3
        %v1604 = vperm.slane %v1300, 3
        %v1605 = vmul.f32 %v1595, %v1603
        %v1606 = vmul.f32 %v1596, %v1604
        %v1607 = vmul.f32 %v1597, %v1603
        %v1608 = vmul.f32 %v1598, %v1604
        %v1609 = vmul.f32 %v1599, %v1603
        %v1610 = vmul.f32 %v1600, %v1604
        %v1611 = vmul.f32 %v1601, %v1603
        %v1612 = vmul.f32 %v1602, %v1604
        %v1613 = vadd.f32 %v1587, %v1605
        %v1614 = vadd.f32 %v1588, %v1606
        %v1615 = vadd.f32 %v1589, %v1607
        %v1616 = vadd.f32 %v1590, %v1608
        %v1617 = vadd.f32 %v1591, %v1609
        %v1618 = vadd.f32 %v1592, %v1610
        %v1619 = vadd.f32 %v1593, %v1611
        %v1620 = vadd.f32 %v1594, %v1612
        %v1621 = vld [vmem:[%s807] sm:$0xff]
        %v1622 = vld [vmem:[%s807 + $0x8] sm:$0xff]
        %v1623 = vld [vmem:[%s807 + $0x10] sm:$0xff]
        %v1624 = vld [vmem:[%s807 + $0x18] sm:$0xff]
        %v1625 = vld [vmem:[%s807 + $0x20] sm:$0xff]
        %v1626 = vld [vmem:[%s807 + $0x28] sm:$0xff]
        %v1627 = vld [vmem:[%s807 + $0x30] sm:$0xf]
        %v1628 = vld [vmem:[%s807 + $0x38] sm:$0xf]
        %v1629 = vperm.slane %v1299, 4
        %v1630 = vperm.slane %v1300, 4
        %v1631 = vmul.f32 %v1621, %v1629
        %v1632 = vmul.f32 %v1622, %v1630
        %v1633 = vmul.f32 %v1623, %v1629
        %v1634 = vmul.f32 %v1624, %v1630
        %v1635 = vmul.f32 %v1625, %v1629
        %v1636 = vmul.f32 %v1626, %v1630
        %v1637 = vmul.f32 %v1627, %v1629
        %v1638 = vmul.f32 %v1628, %v1630
        %v1639 = vadd.f32 %v1613, %v1631
        %v1640 = vadd.f32 %v1614, %v1632
        %v1641 = vadd.f32 %v1615, %v1633
        %v1642 = vadd.f32 %v1616, %v1634
        %v1643 = vadd.f32 %v1617, %v1635
        %v1644 = vadd.f32 %v1618, %v1636
        %v1645 = vadd.f32 %v1619, %v1637
        %v1646 = vadd.f32 %v1620, %v1638
        %v1647 = vld [vmem:[%s834] sm:$0xff]
        %v1648 = vld [vmem:[%s834 + $0x8] sm:$0xff]
        %v1649 = vld [vmem:[%s834 + $0x10] sm:$0xff]
        %v1650 = vld [vmem:[%s834 + $0x18] sm:$0xff]
        %v1651 = vld [vmem:[%s834 + $0x20] sm:$0xff]
        %v1652 = vld [vmem:[%s834 + $0x28] sm:$0xff]
        %v1653 = vld [vmem:[%s834 + $0x30] sm:$0xf]
        %v1654 = vld [vmem:[%s834 + $0x38] sm:$0xf]
        %v1655 = vperm.slane %v1299, 5
        %v1656 = vperm.slane %v1300, 5
        %v1657 = vmul.f32 %v1647, %v1655
        %v1658 = vmul.f32 %v1648, %v1656
        %v1659 = vmul.f32 %v1649, %v1655
        %v1660 = vmul.f32 %v1650, %v1656
        %v1661 = vmul.f32 %v1651, %v1655
        %v1662 = vmul.f32 %v1652, %v1656
        %v1663 = vmul.f32 %v1653, %v1655
        %v1664 = vmul.f32 %v1654, %v1656
        %v1665 = vadd.f32 %v1639, %v1657
        %v1666 = vadd.f32 %v1640, %v1658
        %v1667 = vadd.f32 %v1641, %v1659
        %v1668 = vadd.f32 %v1642, %v1660
        %v1669 = vadd.f32 %v1643, %v1661
        %v1670 = vadd.f32 %v1644, %v1662
        %v1671 = vadd.f32 %v1645, %v1663
        %v1672 = vadd.f32 %v1646, %v1664
        %v1673 = vmax.f32 %v1665, 0.0
        %v1674 = vmax.f32 %v1666, 0.0
        %v1675 = vmax.f32 %v1667, 0.0
        %v1676 = vmax.f32 %v1668, 0.0
        %v1677 = vmax.f32 %v1669, 0.0
        %v1678 = vmax.f32 %v1670, 0.0
        %v1679 = vmax.f32 %v1671, 0.0
        %v1680 = vmax.f32 %v1672, 0.0
        %v1681 = vld [vmem:[%s5] sm:$0x1f]
        %v1682 = vld [vmem:[%s5 + $0x8] sm:$0x1f]
        %v1683 = vperm.slane %v1673, 0
        %v1684 = vperm.slane %v1674, 0
        %v1685 = vmul.f32 %v1681, %v1683
        %v1686 = vmul.f32 %v1682, %v1684
        %v1687 = vld [vmem:[%s6] sm:$0x1f]
        %v1688 = vld [vmem:[%s6 + $0x8] sm:$0x1f]
        %v1689 = vadd.f32 %v1685, %v1687
        %v1690 = vadd.f32 %v1686, %v1688
        %v1691 = vld [vmem:[%s879] sm:$0x1f]
        %v1692 = vld [vmem:[%s879 + $0x8] sm:$0x1f]
        %v1693 = vperm.slane %v1673, 1
        %v1694 = vperm.slane %v1674, 1
        %v1695 = vmul.f32 %v1691, %v1693
        %v1696 = vmul.f32 %v1692, %v1694
        %v1697 = vadd.f32 %v1689, %v1695
        %v1698 = vadd.f32 %v1690, %v1696
        %v1699 = vld [vmem:[%s888] sm:$0x1f]
        %v1700 = vld [vmem:[%s888 + $0x8] sm:$0x1f]
        %v1701 = vperm.slane %v1673, 2
        %v1702 = vperm.slane %v1674, 2
        %v1703 = vmul.f32 %v1699, %v1701
        %v1704 = vmul.f32 %v1700, %v1702
        %v1705 = vadd.f32 %v1697, %v1703
        %v1706 = vadd.f32 %v1698, %v1704
        %v1707 = vld [vmem:[%s897] sm:$0x1f]
        %v1708 = vld [vmem:[%s897 + $0x8] sm:$0x1f]
        %v1709 = vperm.slane %v1673, 3
        %v1710 = vperm.slane %v1674, 3
        %v1711 = vmul.f32 %v1707, %v1709
        %v1712 = vmul.f32 %v1708, %v1710
        %v1713 = vadd.f32 %v1705, %v1711
        %v1714 = vadd.f32 %v1706, %v1712
        %v1715 = vld [vmem:[%s906] sm:$0x1f]
        %v1716 = vld [vmem:[%s906 + $0x8] sm:$0x1f]
        %v1717 = vperm.slane %v1673, 4
        %v1718 = vperm.slane %v1674, 4
        %v1719 = vmul.f32 %v1715, %v1717
        %v1720 = vmul.f32 %v1716, %v1718
        %v1721 = vadd.f32 %v1713, %v1719
        %v1722 = vadd.f32 %v1714, %v1720
        %v1723 = vld [vmem:[%s915] sm:$0x1f]
        %v1724 = vld [vmem:[%s915 + $0x8] sm:$0x1f]
        %v1725 = vperm.slane %v1673, 5
        %v1726 = vperm.slane %v1674, 5
        %v1727 = vmul.f32 %v1723, %v1725
        %v1728 = vmul.f32 %v1724, %v1726
        %v1729 = vadd.f32 %v1721, %v1727
        %v1730 = vadd.f32 %v1722, %v1728
        %v1731 = vld [vmem:[%s924] sm:$0x1f]
        %v1732 = vld [vmem:[%s924 + $0x8] sm:$0x1f]
        %v1733 = vperm.slane %v1673, 6
        %v1734 = vperm.slane %v1674, 6
        %v1735 = vmul.f32 %v1731, %v1733
        %v1736 = vmul.f32 %v1732, %v1734
        %v1737 = vadd.f32 %v1729, %v1735
        %v1738 = vadd.f32 %v1730, %v1736
        %v1739 = vld [vmem:[%s933] sm:$0x1f]
        %v1740 = vld [vmem:[%s933 + $0x8] sm:$0x1f]
        %v1741 = vperm.slane %v1673, 7
        %v1742 = vperm.slane %v1674, 7
        %v1743 = vmul.f32 %v1739, %v1741
        %v1744 = vmul.f32 %v1740, %v1742
        %v1745 = vadd.f32 %v1737, %v1743
        %v1746 = vadd.f32 %v1738, %v1744
        %v1747 = vld [vmem:[%s942] sm:$0x1f]
        %v1748 = vld [vmem:[%s942 + $0x8] sm:$0x1f]
        %v1749 = vperm.slane %v1675, 0
        %v1750 = vperm.slane %v1676, 0
        %v1751 = vmul.f32 %v1747, %v1749
        %v1752 = vmul.f32 %v1748, %v1750
        %v1753 = vadd.f32 %v1745, %v1751
        %v1754 = vadd.f32 %v1746, %v1752
        %v1755 = vld [vmem:[%s951] sm:$0x1f]
        %v1756 = vld [vmem:[%s951 + $0x8] sm:$0x1f]
        %v1757 = vperm.slane %v1675, 1
        %v1758 = vperm.slane %v1676, 1
        %v1759 = vmul.f32 %v1755, %v1757
        %v1760 = vmul.f32 %v1756, %v1758
        %v1761 = vadd.f32 %v1753, %v1759
        %v1762 = vadd.f32 %v1754, %v1760
        %v1763 = vld [vmem:[%s960] sm:$0x1f]
        %v1764 = vld [vmem:[%s960 + $0x8] sm:$0x1f]
        %v1765 = vperm.slane %v1675, 2
        %v1766 = vperm.slane %v1676, 2
        %v1767 = vmul.f32 %v1763, %v1765
        %v1768 = vmul.f32 %v1764, %v1766
        %v1769 = vadd.f32 %v1761, %v1767
        %v1770 = vadd.f32 %v1762, %v1768
        %v1771 = vld [vmem:[%s969] sm:$0x1f]
        %v1772 = vld [vmem:[%s969 + $0x8] sm:$0x1f]
        %v1773 = vperm.slane %v1675, 3
        %v1774 = vperm.slane %v1676, 3
        %v1775 = vmul.f32 %v1771, %v1773
        %v1776 = vmul.f32 %v1772, %v1774
        %v1777 = vadd.f32 %v1769, %v1775
        %v1778 = vadd.f32 %v1770, %v1776
        %v1779 = vld [vmem:[%s978] sm:$0x1f]
        %v1780 = vld [vmem:[%s978 + $0x8] sm:$0x1f]
        %v1781 = vperm.slane %v1675, 4
        %v1782 = vperm.slane %v1676, 4
        %v1783 = vmul.f32 %v1779, %v1781
        %v1784 = vmul.f32 %v1780, %v1782
        %v1785 = vadd.f32 %v1777, %v1783
        %v1786 = vadd.f32 %v1778, %v1784
        %v1787 = vld [vmem:[%s987] sm:$0x1f]
        %v1788 = vld [vmem:[%s987 + $0x8] sm:$0x1f]
        %v1789 = vperm.slane %v1675, 5
        %v1790 = vperm.slane %v1676, 5
        %v1791 = vmul.f32 %v1787, %v1789
        %v1792 = vmul.f32 %v1788, %v1790
        %v1793 = vadd.f32 %v1785, %v1791
        %v1794 = vadd.f32 %v1786, %v1792
        %v1795 = vld [vmem:[%s996] sm:$0x1f]
        %v1796 = vld [vmem:[%s996 + $0x8] sm:$0x1f]
        %v1797 = vperm.slane %v1675, 6
        %v1798 = vperm.slane %v1676, 6
        %v1799 = vmul.f32 %v1795, %v1797
        %v1800 = vmul.f32 %v1796, %v1798
        %v1801 = vadd.f32 %v1793, %v1799
        %v1802 = vadd.f32 %v1794, %v1800
        %v1803 = vld [vmem:[%s1005] sm:$0x1f]
        %v1804 = vld [vmem:[%s1005 + $0x8] sm:$0x1f]
        %v1805 = vperm.slane %v1675, 7
        %v1806 = vperm.slane %v1676, 7
        %v1807 = vmul.f32 %v1803, %v1805
        %v1808 = vmul.f32 %v1804, %v1806
        %v1809 = vadd.f32 %v1801, %v1807
        %v1810 = vadd.f32 %v1802, %v1808
        %v1811 = vld [vmem:[%s1014] sm:$0x1f]
        %v1812 = vld [vmem:[%s1014 + $0x8] sm:$0x1f]
        %v1813 = vperm.slane %v1677, 0
        %v1814 = vperm.slane %v1678, 0
        %v1815 = vmul.f32 %v1811, %v1813
        %v1816 = vmul.f32 %v1812, %v1814
        %v1817 = vadd.f32 %v1809, %v1815
        %v1818 = vadd.f32 %v1810, %v1816
        %v1819 = vld [vmem:[%s1023] sm:$0x1f]
        %v1820 = vld [vmem:[%s1023 + $0x8] sm:$0x1f]
        %v1821 = vperm.slane %v1677, 1
        %v1822 = vperm.slane %v1678, 1
        %v1823 = vmul.f32 %v1819, %v1821
        %v1824 = vmul.f32 %v1820, %v1822
        %v1825 = vadd.f32 %v1817, %v1823
        %v1826 = vadd.f32 %v1818, %v1824
        %v1827 = vld [vmem:[%s1032] sm:$0x1f]
        %v1828 = vld [vmem:[%s1032 + $0x8] sm:$0x1f]
        %v1829 = vperm.slane %v1677, 2
        %v1830 = vperm.slane %v1678, 2
        %v1831 = vmul.f32 %v1827, %v1829
        %v1832 = vmul.f32 %v1828, %v1830
        %v1833 = vadd.f32 %v1825, %v1831
        %v1834 = vadd.f32 %v1826, %v1832
        %v1835 = vld [vmem:[%s1041] sm:$0x1f]
        %v1836 = vld [vmem:[%s1041 + $0x8] sm:$0x1f]
        %v1837 = vperm.slane %v1677, 3
        %v1838 = vperm.slane %v1678, 3
        %v1839 = vmul.f32 %v1835, %v1837
        %v1840 = vmul.f32 %v1836, %v1838
        %v1841 = vadd.f32 %v1833, %v1839
        %v1842 = vadd.f32 %v1834, %v1840
        %v1843 = vld [vmem:[%s1050] sm:$0x1f]
        %v1844 = vld [vmem:[%s1050 + $0x8] sm:$0x1f]
        %v1845 = vperm.slane %v1677, 4
        %v1846 = vperm.slane %v1678, 4
        %v1847 = vmul.f32 %v1843, %v1845
        %v1848 = vmul.f32 %v1844, %v1846
        %v1849 = vadd.f32 %v1841, %v1847
        %v1850 = vadd.f32 %v1842, %v1848
        %v1851 = vld [vmem:[%s1059] sm:$0x1f]
        %v1852 = vld [vmem:[%s1059 + $0x8] sm:$0x1f]
        %v1853 = vperm.slane %v1677, 5
        %v1854 = vperm.slane %v1678, 5
        %v1855 = vmul.f32 %v1851, %v1853
        %v1856 = vmul.f32 %v1852, %v1854
        %v1857 = vadd.f32 %v1849, %v1855
        %v1858 = vadd.f32 %v1850, %v1856
        %v1859 = vld [vmem:[%s1068] sm:$0x1f]
        %v1860 = vld [vmem:[%s1068 + $0x8] sm:$0x1f]
        %v1861 = vperm.slane %v1677, 6
        %v1862 = vperm.slane %v1678, 6
        %v1863 = vmul.f32 %v1859, %v1861
        %v1864 = vmul.f32 %v1860, %v1862
        %v1865 = vadd.f32 %v1857, %v1863
        %v1866 = vadd.f32 %v1858, %v1864
        %v1867 = vld [vmem:[%s1077] sm:$0x1f]
        %v1868 = vld [vmem:[%s1077 + $0x8] sm:$0x1f]
        %v1869 = vperm.slane %v1677, 7
        %v1870 = vperm.slane %v1678, 7
        %v1871 = vmul.f32 %v1867, %v1869
        %v1872 = vmul.f32 %v1868, %v1870
        %v1873 = vadd.f32 %v1865, %v1871
        %v1874 = vadd.f32 %v1866, %v1872
        %v1875 = vld [vmem:[%s1086] sm:$0x1f]
        %v1876 = vld [vmem:[%s1086 + $0x8] sm:$0x1f]
        %v1877 = vperm.slane %v1679, 0
        %v1878 = vperm.slane %v1680, 0
        %v1879 = vmul.f32 %v1875, %v1877
        %v1880 = vmul.f32 %v1876, %v1878
        %v1881 = vadd.f32 %v1873, %v1879
        %v1882 = vadd.f32 %v1874, %v1880
        %v1883 = vld [vmem:[%s1095] sm:$0x1f]
        %v1884 = vld [vmem:[%s1095 + $0x8] sm:$0x1f]
        %v1885 = vperm.slane %v1679, 1
        %v1886 = vperm.slane %v1680, 1
        %v1887 = vmul.f32 %v1883, %v1885
        %v1888 = vmul.f32 %v1884, %v1886
        %v1889 = vadd.f32 %v1881, %v1887
        %v1890 = vadd.f32 %v1882, %v1888
        %v1891 = vld [vmem:[%s1104] sm:$0x1f]
        %v1892 = vld [vmem:[%s1104 + $0x8] sm:$0x1f]
        %v1893 = vperm.slane %v1679, 2
        %v1894 = vperm.slane %v1680, 2
        %v1895 = vmul.f32 %v1891, %v1893
        %v1896 = vmul.f32 %v1892, %v1894
        %v1897 = vadd.f32 %v1889, %v1895
        %v1898 = vadd.f32 %v1890, %v1896
        %v1899 = vld [vmem:[%s1113] sm:$0x1f]
        %v1900 = vld [vmem:[%s1113 + $0x8] sm:$0x1f]
        %v1901 = vperm.slane %v1679, 3
        %v1902 = vperm.slane %v1680, 3
        %v1903 = vmul.f32 %v1899, %v1901
        %v1904 = vmul.f32 %v1900, %v1902
        %v1905 = vadd.f32 %v1897, %v1903
        %v1906 = vadd.f32 %v1898, %v1904
        %v1907 = vsel %vm1122, %v1905, -inf
        %v1908 = vrot.slane %v1907, 4
        %v1909 = vmax.f32 %v1907, %v1908
        %v1910 = vrot.slane %v1909, 2
        %v1911 = vmax.f32 %v1909, %v1910
        %v1912 = vrot.slane %v1911, 1
        %v1913 = vmax.f32 %v1911, %v1912
        %v1914 = vsel %vm1122, %v1906, -inf
        %v1915 = vrot.slane %v1914, 4
        %v1916 = vmax.f32 %v1914, %v1915
        %v1917 = vrot.slane %v1916, 2
        %v1918 = vmax.f32 %v1916, %v1917
        %v1919 = vrot.slane %v1918, 1
        %v1920 = vmax.f32 %v1918, %v1919
        %v1921 = vsub.f32 %v1905, %v1913
        %v1922 = vsub.f32 %v1906, %v1920
        %v1923 = vmul.f32 %v1921, 1.442695
        %v1924 = vpow.pop %v1923
        %v1925 = vmul.f32 %v1922, 1.442695
        %v1926 = vpow.pop %v1925
        %v1927 = vsel %vm1122, %v1924, 0.0
        %v1928 = vrot.slane %v1927, 4
        %v1929 = vadd.f32 %v1927, %v1928
        %v1930 = vrot.slane %v1929, 2
        %v1931 = vadd.f32 %v1929, %v1930
        %v1932 = vrot.slane %v1931, 1
        %v1933 = vadd.f32 %v1931, %v1932
        %v1934 = vsel %vm1122, %v1926, 0.0
        %v1935 = vrot.slane %v1934, 4
        %v1936 = vadd.f32 %v1934, %v1935
        %v1937 = vrot.slane %v1936, 2
        %v1938 = vadd.f32 %v1936, %v1937
        %v1939 = vrot.slane %v1938, 1
        %v1940 = vadd.f32 %v1938, %v1939
        %v1941 = vrcp.pop %v1933
        %v1942 = vrcp.pop %v1940
        %v1943 = vmul.f32 %v1924, %v1941
        %v1944 = vmul.f32 %v1926, %v1942
        %1945 = vst [vmem:[%s327 + $0x10] sm:$0x1f] %v1943
        %1946 = vst [vmem:[%s327 + $0x18] sm:$0x1f] %v1944
        %s1947 = sand.u32 %s182, 1
        %s1948 = scalar_lea.sflag [#allocation5], %s1947
        %s1949 = sand.u32 %s182, 1
        %s1950 = smul.addr %s1949, 32
        %s1951 = scalar_lea.vmem [#allocation6], %s1950
        // Predicated region
        $region76: #{tpu_custom_call.1} parent=66 // pred_check
          %p1952 = pneg %p192
        $region77: #{tpu_custom_call.1} parent=66 // pred_check_branch
          %1954 = sbr.rel (%p1952) target = $region79
        $region78: #{tpu_custom_call.1} parent=66 // pred_region
          %s1955 = smul.u32 4, %s22
          %1957 = vsyncadd %s1948, 0
          %s1958 = smul.addr %s1955, 8
          %s1959 = scalar_lea.hbm %s7, %s1958
          %s1961 = sshll.u32 %s1951, 4
          %s1962 = int_to_ptr.vmem [resolvable:$true] %s1961
          %s1963 = sshll.u32 %s1959, 4
          %s1964 = int_to_ptr.hbm [resolvable:$true] %s1963
          %1966 = dma.vmem_to_hbm [thread:$0]  %s1962, 512, %s1964, %s1948
        $region79: #{tpu_custom_call.1} parent=66 // pred_fallthru
          _
      $region67: #{tpu_custom_call.1} parent=5 // pred_fallthru
        _
      %p1967 = scmp.le.s32.totalorder 2, %s17
      // Predicated region
      $region80: #{tpu_custom_call.1} parent=5 // pred_check
        %p1968 = pneg %p1967
      $region81: #{tpu_custom_call.1} parent=5 // pred_check_branch
        %1970 = sbr.rel (%p1968) target = $region83
      $region82: #{tpu_custom_call.1} parent=5 // pred_region
        %s1971 = ssub.s32 %s17, 2
        // Predicated region
        $region84: #{tpu_custom_call.1} parent=82 // pred_check
          %p1972 = pneg %p198
        $region85: #{tpu_custom_call.1} parent=82 // pred_check_branch
          %1974 = sbr.rel (%p1972) target = $region87
        $region86: #{tpu_custom_call.1} parent=82 // pred_region
          %s1975 = sand.u32 %s183, 1
          %s1976 = scalar_lea.sflag [#allocation5], %s1975
          %s1977 = sand.u32 %s183, 1
          %s1978 = smul.addr %s1977, 32
          %s1979 = scalar_lea.vmem [#allocation6], %s1978
          %1981 = dma.done %s1976, 512
        $region87: #{tpu_custom_call.1} parent=82 // pred_fallthru
          _
      $region83: #{tpu_custom_call.1} parent=5 // pred_fallthru
        _
    $region6: #{tpu_custom_call.1} parent=1 // loop_footer
      %s21 = sadd.s32 1, %s17
    $region7: #{tpu_custom_call.1} parent=1 // loop_footer_branch
      %16 = sbr.rel target = $region3
    $region8: #{tpu_custom_call.1} parent=1 // loop_exit
      _
    %1982 = vsyncpa [#allocation4], 1
    %s1983 = scalar_lea.sflag [#allocation4], 1
    %1984 = vsyncpa %s1983, 1
    %1985 = vsyncpa [#allocation5], 1
    %s1986 = scalar_lea.sflag [#allocation5], 1
    %1987 = vsyncpa %s1986, 1

</llo_original>
